<compile_context>
chip_gen: v7x
topology: tpu7x:2x2x1
jax: 0.10.0
libtpu: 0.0.40
codegen_flags: <defaults>
</compile_context>

<pallas_src>
import functools
import math

import jax
import jax.numpy as jnp
from jax.experimental import pallas as pl
from jax.experimental.pallas import tpu as pltpu


# ----------------------------------------------------------------------------
# Generation-aware VMEM limit (~0.75x capacity; 48 MiB conservative fallback)
# ----------------------------------------------------------------------------
_VMEM_LIMIT_CACHE = None


def _vmem_limit():
    global _VMEM_LIMIT_CACHE
    if _VMEM_LIMIT_CACHE is None:
        try:
            cap = int(pltpu.get_tpu_info().vmem_capacity_bytes)
            if cap <= 0:
                raise ValueError("bad vmem capacity")
            _VMEM_LIMIT_CACHE = min((cap * 3) // 4, 100 * 1024 * 1024)
        except Exception:
            _VMEM_LIMIT_CACHE = 48 * 1024 * 1024   # v7x-safe fallback
    return _VMEM_LIMIT_CACHE


def _pick_m_tile(M, tm=512):
    """Row tile: full M when small, otherwise a multiple-of-8 tile."""
    return M if M <= tm else tm


def _pick_n_tile(N, max_full=4096, tn=1024):
    """Output/hidden tile: keep up to 4096 untiled so weights stay resident."""
    if N <= max_full or N % tn != 0:
        return N
    return tn


# ----------------------------------------------------------------------------
# Fused (LayerNorm) + Linear (+bias) (+activation) (+residual) kernel
# ----------------------------------------------------------------------------
def _fused_linear_kernel(*refs, ln, act, has_bias, has_res, eps):
    it = iter(refs)
    x_ref = next(it)
    if ln:
        g_ref = next(it)
        bln_ref = next(it)
    w_ref = next(it)
    b_ref = next(it) if has_bias else None
    res_ref = next(it) if has_res else None
    o_ref = next(it)

    if ln:
        x = x_ref[...].astype(jnp.float32)
        mu = jnp.mean(x, axis=-1, keepdims=True)
        xc = x - mu
        var = jnp.mean(xc * xc, axis=-1, keepdims=True)
        x = xc * jax.lax.rsqrt(var + eps) * g_ref[...] + bln_ref[...]
    else:
        x = x_ref[...]

    y = jnp.dot(x.astype(w_ref.dtype), w_ref[...],
                preferred_element_type=jnp.float32)
    if has_bias:
        y = y + b_ref[...]
    if act == "quick_gelu":
        # CLIP QuickGELU: x * sigmoid(1.702 x)
        y = y * jax.nn.sigmoid(1.702 * y)
    if has_res:
        y = y + res_ref[...].astype(jnp.float32)
    o_ref[...] = y.astype(o_ref.dtype)


def fused_linear(x, w, b=None, *, ln_g=None, ln_b=None, residual=None,
                 act="none", out_dtype=jnp.float32, eps=1e-5, tm=512):
    """y = [LN](x) @ w [+ b] [act] [+ residual].

    x: [M, K] (f32/bf16), w: [K, N] (bf16), b: [N] (f32), residual: [M, N]
    (f32).  Grid is (N tiles, M tiles) with N *outer* so the K x TN weight
    tile stays resident across the inner M sweep; with _pick_n_tile's 4096
    cutoff most layers have a single N tile (weights DMA'd exactly once).
    """
    M, K = x.shape
    Kw, N = w.shape
    assert K == Kw
    TM = _pick_m_tile(M, tm)
    TN = _pick_n_tile(N)
    grid = (pl.cdiv(N, TN), pl.cdiv(M, TM))   # (N outer, M inner)

    ln = ln_g is not None
    has_bias = b is not None
    has_res = residual is not None

    args = [x]
    in_specs = [pl.BlockSpec((TM, K), lambda j, i: (i, 0))]
    if ln:
        args += [ln_g.reshape(1, K), ln_b.reshape(1, K)]
        in_specs += [pl.BlockSpec((1, K), lambda j, i: (0, 0)),
                     pl.BlockSpec((1, K), lambda j, i: (0, 0))]
    args.append(w)
    in_specs.append(pl.BlockSpec((K, TN), lambda j, i: (0, j)))
    if has_bias:
        args.append(b.reshape(1, N))
        in_specs.append(pl.BlockSpec((1, TN), lambda j, i: (0, j)))
    if has_res:
        args.append(residual)
        in_specs.append(pl.BlockSpec((TM, TN), lambda j, i: (i, j)))

    kernel = functools.partial(_fused_linear_kernel, ln=ln, act=act,
                               has_bias=has_bias, has_res=has_res, eps=eps)
    return pl.pallas_call(
        kernel,
        out_shape=jax.ShapeDtypeStruct((M, N), out_dtype),
        grid=grid,
        in_specs=in_specs,
        out_specs=pl.BlockSpec((TM, TN), lambda j, i: (i, j)),
        compiler_params=pltpu.CompilerParams(
            dimension_semantics=("parallel", "parallel"),
            vmem_limit_bytes=_vmem_limit()),
    )(*args)


# ----------------------------------------------------------------------------
# Fused MLP: ln2 -> fc -> QuickGELU -> proj -> + residual
# (hidden dim is a (rarely used) reduction grid axis; hidden activation and
#  the LN'ed rows never hit HBM; with TH == Hd the weights load exactly once)
# ----------------------------------------------------------------------------
def _fused_mlp_kernel(x_ref, g_ref, bln_ref, wfc_ref, bfc_ref, wpr_ref,
                      bpr_ref, o_ref, hln_ref, acc_ref, *, eps):
    j = pl.program_id(1)

    @pl.when(j == 0)
    def _():
        x = x_ref[...].astype(jnp.float32)
        mu = jnp.mean(x, axis=-1, keepdims=True)
        xc = x - mu
        var = jnp.mean(xc * xc, axis=-1, keepdims=True)
        h = xc * jax.lax.rsqrt(var + eps) * g_ref[...] + bln_ref[...]
        hln_ref[...] = h.astype(hln_ref.dtype)
        acc_ref[...] = jnp.zeros_like(acc_ref)

    a = jnp.dot(hln_ref[...], wfc_ref[...], preferred_element_type=jnp.float32)
    a = a + bfc_ref[...]
    a = a * jax.nn.sigmoid(1.702 * a)                       # QuickGELU
    acc_ref[...] += jnp.dot(a.astype(wpr_ref.dtype), wpr_ref[...],
                            preferred_element_type=jnp.float32)

    @pl.when(j == pl.num_programs(1) - 1)
    def _():
        o_ref[...] = (x_ref[...].astype(jnp.float32) + acc_ref[...]
                      + bpr_ref[...]).astype(o_ref.dtype)


def fused_mlp(x, ln_g, ln_b, w_fc, b_fc, w_proj, b_proj, *, eps=1e-5, tm=512):
    """x + MLP(LN(x)).  x: [M, D] f32; w_fc: [D, Hd] bf16; w_proj: [Hd, D] bf16."""
    M, D = x.shape
    Dw, Hd = w_fc.shape
    assert D == Dw and w_proj.shape == (Hd, D)
    TM = _pick_m_tile(M, tm)
    TH = _pick_n_tile(Hd)          # 4096 cutoff -> full Hd for ViT-B/L
    grid = (pl.cdiv(M, TM), pl.cdiv(Hd, TH))

    return pl.pallas_call(
        functools.partial(_fused_mlp_kernel, eps=eps),
        out_shape=jax.ShapeDtypeStruct((M, D), jnp.float32),
        grid=grid,
        in_specs=[
            pl.BlockSpec((TM, D), lambda i, j: (i, 0)),    # x (residual + LN in)
            pl.BlockSpec((1, D), lambda i, j: (0, 0)),     # ln gamma
            pl.BlockSpec((1, D), lambda i, j: (0, 0)),     # ln beta
            pl.BlockSpec((D, TH), lambda i, j: (0, j)),    # w_fc (resident)
            pl.BlockSpec((1, TH), lambda i, j: (0, j)),    # b_fc
            pl.BlockSpec((TH, D), lambda i, j: (j, 0)),    # w_proj (resident)
            pl.BlockSpec((1, D), lambda i, j: (0, 0)),     # b_proj
        ],
        out_specs=pl.BlockSpec((TM, D), lambda i, j: (i, 0)),
        scratch_shapes=[
            pltpu.VMEM((TM, D), jnp.bfloat16),   # LN'ed rows (matmul lhs)
            pltpu.VMEM((TM, D), jnp.float32),    # f32 accumulator
        ],
        compiler_params=pltpu.CompilerParams(
            dimension_semantics=("parallel", "arbitrary"),
            vmem_limit_bytes=_vmem_limit()),
    )(x, ln_g.reshape(1, D), ln_b.reshape(1, D), w_fc, b_fc.reshape(1, Hd),
      w_proj, b_proj.reshape(1, D))


# ----------------------------------------------------------------------------
# Fused (x + pos_emb) -> ln_pre  (saves one HBM round trip of the activation)
# ----------------------------------------------------------------------------
def _pos_ln_kernel(x_ref, pos_ref, g_ref, b_ref, o_ref, *, eps):
    x = x_ref[...].astype(jnp.float32) + pos_ref[...].astype(jnp.float32)
    mu = jnp.mean(x, axis=-1, keepdims=True)
    xc = x - mu
    var = jnp.mean(xc * xc, axis=-1, keepdims=True)
    o_ref[...] = (xc * jax.lax.rsqrt(var + eps) * g_ref[...]
                  + b_ref[...]).astype(o_ref.dtype)


def pallas_pos_ln(x, pos, g, b, eps=1e-5):
    """LayerNorm(x + pos) over [B, N, D]; pos [N, D] broadcast over batch."""
    B, N, D = x.shape
    return pl.pallas_call(
        functools.partial(_pos_ln_kernel, eps=eps),
        out_shape=jax.ShapeDtypeStruct((B, N, D), jnp.float32),
        grid=(B,),
        in_specs=[
            pl.BlockSpec((None, N, D), lambda bb: (bb, 0, 0)),
            pl.BlockSpec((N, D), lambda bb: (0, 0)),
            pl.BlockSpec((1, D), lambda bb: (0, 0)),
            pl.BlockSpec((1, D), lambda bb: (0, 0)),
        ],
        out_specs=pl.BlockSpec((None, N, D), lambda bb: (bb, 0, 0)),
        compiler_params=pltpu.CompilerParams(
            dimension_semantics=("parallel",),
            vmem_limit_bytes=_vmem_limit()),
    )(x, pos, g.reshape(1, D), b.reshape(1, D))


# ----------------------------------------------------------------------------
# Attention on head-interleaved packed QKV:
#   grid = (batch, head-group, query-tile); bf16 MXU matmuls, f32 softmax,
#   per-head direct stores into the output lane slice (no concat).
# ----------------------------------------------------------------------------
def _head_group(heads, dh):
    """Smallest divisor G of `heads` with G*dh a multiple of 128 (128-lane
    aligned head-group blocks); falls back to all heads (full-D block)."""
    for g in range(1, heads + 1):
        if heads % g == 0 and (g * dh) % 128 == 0:
            return g
    return heads


def _attn_kernel(q_ref, kv_ref, o_ref, *, g_heads, dh, scale):
    # q_ref : (TQ, 3*dh*G) bf16 -- this head-group's packed rows for the q tile
    # kv_ref: (N,  3*dh*G) bf16 -- this head-group's packed rows, full sequence
    # o_ref : (TQ, dh*G)
    for h in range(g_heads):                     # small, unrolled
        base = 3 * dh * h
        q = q_ref[:, base:base + dh]             # bf16
        k = kv_ref[:, base + dh:base + 2 * dh]   # bf16
        v = kv_ref[:, base + 2 * dh:base + 3 * dh]
        # bf16 x bf16 MXU matmul, f32 accumulation; scale applied to f32 result
        s = jax.lax.dot_general(q, k, (((1,), (1,)), ((), ())),
                                preferred_element_type=jnp.float32) * scale
        s = s - jnp.max(s, axis=-1, keepdims=True)
        p = jnp.exp(s)
        p = p * pl.reciprocal(jnp.sum(p, axis=-1, keepdims=True), approx=False)
        o_ref[:, h * dh:(h + 1) * dh] = jnp.dot(
            p.astype(v.dtype), v,
            preferred_element_type=jnp.float32).astype(o_ref.dtype)


def pallas_attention(qkv, heads):
    """qkv: [B, N, 3*D] packed head-interleaved ([h0_q h0_k h0_v h1_q ...]).

    Returns [B, N, D] (heads concatenated in head order), same dtype as qkv.
    """
    B, N, threeD = qkv.shape
    D = threeD // 3
    dh = D // heads
    G = _head_group(heads, dh)
    n_groups = heads // G
    gq = 3 * dh * G        # packed lanes per head group
    go = dh * G            # output lanes per head group
    TQ = N if N <= 256 else 256
    scale = 1.0 / math.sqrt(dh)
    grid = (B, n_groups, pl.cdiv(N, TQ))
    # TODO(synk): for very long dense-feature sequences (N >> 2k) switch to a
    # KV-tiled flash-style kernel with online softmax; here scores are already
    # bounded to (TQ, N) per head and K/V stay resident across query tiles.
    return pl.pallas_call(
        functools.partial(_attn_kernel, g_heads=G, dh=dh, scale=scale),
        out_shape=jax.ShapeDtypeStruct((B, N, D), qkv.dtype),
        grid=grid,
        in_specs=[
            pl.BlockSpec((None, TQ, gq), lambda b, g, qi: (b, qi, g)),  # q tile
            pl.BlockSpec((None, N, gq), lambda b, g, qi: (b, 0, g)),    # full K/V
        ],
        out_specs=pl.BlockSpec((None, TQ, go), lambda b, g, qi: (b, qi, g)),
        compiler_params=pltpu.CompilerParams(
            dimension_semantics=("parallel", "parallel", "parallel"),
            vmem_limit_bytes=_vmem_limit()),
    )(qkv, qkv)


# ----------------------------------------------------------------------------
# Model (thin JAX glue around the Pallas kernels)
# ----------------------------------------------------------------------------
def residual_block(x2d, p, *, B, N, heads, value_only):
    """CLIP ResidualAttentionBlock. value_only=True => MaskCLIP last block."""
    D = x2d.shape[1]
    dh = D // heads

    if value_only:
        # MaskCLIP trick: skip softmax(QK^T); only the V projection is needed.
        # Extract the per-head V columns from the head-interleaved QKV weight
        # (weight-only transform, done once at trace time).
        w_v = p["attn_in_w"].reshape(D, heads, 3, dh)[:, :, 2, :].reshape(D, D)
        b_v = p["attn_in_b"].reshape(heads, 3, dh)[:, 2, :].reshape(D)
        attn = fused_linear(x2d, w_v, b_v, ln_g=p["ln1_g"], ln_b=p["ln1_b"],
                            out_dtype=jnp.bfloat16)               # [B*N, D]
    else:
        qkv = fused_linear(x2d, p["attn_in_w"], p["attn_in_b"],
                           ln_g=p["ln1_g"], ln_b=p["ln1_b"],
                           out_dtype=jnp.bfloat16)                # [B*N, 3D]
        attn = pallas_attention(qkv.reshape(B, N, 3 * D), heads)  # [B, N, D]
        attn = attn.reshape(B * N, D)

    # out-projection fused with the residual add.
    x2d = fused_linear(attn, p["attn_out_w"], p["attn_out_b"],
                       residual=x2d, out_dtype=jnp.float32)

    # ln2 + fc + QuickGELU + proj + residual, all in one kernel.
    x2d = fused_mlp(x2d, p["ln2_g"], p["ln2_b"], p["mlp_fc_w"], p["mlp_fc_b"],
                    p["mlp_proj_w"], p["mlp_proj_b"])
    return x2d


def maskclip_backbone_forward(img, params, *, patch_size, heads):
    """img: [B, 3, H, W] float32 (NCHW).  Returns [B, num_patches, out_dim] f32."""
    B, C, H, W = img.shape
    ph, pw = H // patch_size, W // patch_size
    width = params["conv_w"].shape[1]

    # --- conv1 patchify (Conv2d(C, width, kernel=stride=patch, bias=False))
    x = img.reshape(B, C, ph, patch_size, pw, patch_size)
    x = x.transpose(0, 2, 4, 1, 3, 5).reshape(
        B * ph * pw, C * patch_size * patch_size)
    x = fused_linear(x, params["conv_w"], out_dtype=jnp.float32)
    x = x.reshape(B, ph * pw, width)

    # --- prepend CLS token (tiny XLA concat); pos-emb add is fused into ln_pre
    cls = jnp.broadcast_to(params["class_embedding"][None, None, :],
                           (B, 1, width)).astype(jnp.float32)
    x = jnp.concatenate([cls, x], axis=1)                          # [B, N, D]
    N = x.shape[1]

    # TODO(synk): maskclip_onnx bicubic-interpolates the pos-emb for arbitrary
    # image sizes; here the pos-emb is built for this exact grid -> plain add.
    x2d = pallas_pos_ln(x, params["pos_embedding"], params["ln_pre_g"],
                        params["ln_pre_b"]).reshape(B * N, width)

    # --- transformer: L-1 standard blocks + MaskCLIP value-only last block
    nlayers = len(params["blocks"])
    for i, blk in enumerate(params["blocks"]):
        x2d = residual_block(x2d, blk, B=B, N=N, heads=heads,
                             value_only=(i == nlayers - 1))

    # --- ln_post fused with the final projection (no bias), drop CLS
    out_dim = params["proj"].shape[1]
    feats = fused_linear(x2d, params["proj"], ln_g=params["ln_post_g"],
                         ln_b=params["ln_post_b"], out_dtype=jnp.float32)
    feats = feats.reshape(B, N, out_dim)
    return feats[:, 1:].astype(jnp.float32)


# ----------------------------------------------------------------------------
# Deterministic synthetic parameters (no checkpoint load)
# ----------------------------------------------------------------------------
def init_params(key, *, in_ch, patch_size, grid_hw, width, heads, layers,
                mlp_ratio, out_dim):
    num_patches = grid_hw[0] * grid_hw[1]
    n_keys = 3 + 6 * layers + 1
    keys = iter(jax.random.split(key, n_keys))

    def nrm(k, shape, scale=0.02, dtype=jnp.bfloat16):
        return (scale * jax.random.normal(k, shape)).astype(dtype)

    params = {
        # Conv2d weight [width, C, ps, ps] pre-flattened/transposed to
        # [C*ps*ps, width] to match the (c, u, v)-ordered patch vectors.
        "conv_w": nrm(next(keys), (in_ch * patch_size * patch_size, width)),
        "class_embedding": nrm(next(keys), (width,), dtype=jnp.float32),
        "pos_embedding": nrm(next(keys), (1 + num_patches, width),
                             dtype=jnp.float32),
        "ln_pre_g": jnp.ones((width,), jnp.float32),
        "ln_pre_b": jnp.zeros((width,), jnp.float32),
        "ln_post_g": jnp.ones((width,), jnp.float32),
        "ln_post_b": jnp.zeros((width,), jnp.float32),
        "blocks": [],
    }
    hidden = mlp_ratio * width
    for _ in range(layers):
        params["blocks"].append({
            "ln1_g": jnp.ones((width,), jnp.float32),
            "ln1_b": jnp.zeros((width,), jnp.float32),
            "ln2_g": jnp.ones((width,), jnp.float32),
            "ln2_b": jnp.zeros((width,), jnp.float32),
            # bf16 matmul weights, f32 biases (matmuls accumulate in f32).
            # attn_in_w output columns are HEAD-INTERLEAVED:
            #   [h0_q, h0_k, h0_v, h1_q, h1_k, h1_v, ...], 3*dh lanes per head,
            # so a head group is a 128-lane-aligned block in the attention
            # kernel.  (Weights are synthetic, so this is simply the layout.)
            "attn_in_w": nrm(next(keys), (width, 3 * width)),
            "attn_in_b": nrm(next(keys), (3 * width,), dtype=jnp.float32),
            "attn_out_w": nrm(next(keys), (width, width)),
            "attn_out_b": jnp.zeros((width,), jnp.float32),
            "mlp_fc_w": nrm(next(keys), (width, hidden)),
            "mlp_fc_b": nrm(next(keys), (hidden,), dtype=jnp.float32),
            "mlp_proj_w": nrm(next(keys), (hidden, width)),
            "mlp_proj_b": jnp.zeros((width,), jnp.float32),
        })
    params["proj"] = nrm(next(keys), (width, out_dim))
    return params


# ----------------------------------------------------------------------------
if __name__ == "__main__":
    key = jax.random.PRNGKey(0)
    pkey, xkey = jax.random.split(key)

    # Small shapes consistent with the module (ViT-B/16-style, scaled down but
    # lane-friendly: dh=64 so head pairs form 128-lane-aligned groups).
    B, C, H, W = 2, 3, 32, 32
    patch_size = 16            # self.patch_size
    width, heads, layers = 128, 2, 2
    out_dim = 128              # stands in for num_channels/hidden_size = 512

    params = init_params(
        pkey, in_ch=C, patch_size=patch_size,
        grid_hw=(H // patch_size, W // patch_size),
        width=width, heads=heads, layers=layers, mlp_ratio=4, out_dim=out_dim,
    )
    img = jax.random.normal(xkey, (B, C, H, W), dtype=jnp.float32)

    fwd = jax.jit(functools.partial(
        maskclip_backbone_forward, patch_size=patch_size, heads=heads))
    feats = fwd(img, params)
    feats = jax.block_until_ready(feats)

    num_patches = (H // patch_size) * (W // patch_size)
    assert feats.shape == (B, num_patches, out_dim), feats.shape
    assert feats.dtype == jnp.float32
    assert bool(jnp.all(jnp.isfinite(feats)))
    print("KERNEL_OK")
</pallas_src>

<mosaic_0001>
module attributes {stable_mosaic.version = 11 : i64} {
  func.func @_fused_linear_kernel(%arg0: i32, %arg1: i32, %arg2: memref<8x768xf32, #tpu.memory_space<vmem>>, %arg3: memref<768x128xbf16, #tpu.memory_space<vmem>>, %arg4: memref<8x128xf32, #tpu.memory_space<vmem>>) attributes {dimension_semantics = [#tpu.dimension_semantics<parallel>, #tpu.dimension_semantics<parallel>], iteration_bounds = array<i64: 1, 1>, scalar_prefetch = 0 : i64, scratch_operands = 0 : i64, tpu.core_type = #tpu.core_type<tc>, window_params = [{transform_indices = @transform_0, window_bounds = array<i64: 8, 768>}, {transform_indices = @transform_1, window_bounds = array<i64: 768, 128>}, {transform_indices = @transform_2, window_bounds = array<i64: 8, 128>}]} {
    %c0 = arith.constant 0 : index
    %c0_0 = arith.constant 0 : index
    %0 = vector.load %arg2[%c0, %c0_0] : memref<8x768xf32, #tpu.memory_space<vmem>>, vector<8x768xf32>
    %1 = arith.truncf %0 : vector<8x768xf32> to vector<8x768xbf16>
    %c0_1 = arith.constant 0 : index
    %c0_2 = arith.constant 0 : index
    %2 = vector.load %arg3[%c0_1, %c0_2] : memref<768x128xbf16, #tpu.memory_space<vmem>>, vector<768x128xbf16>
    %cst = arith.constant dense<0.000000e+00> : vector<8x128xf32>
    %3 = tpu.matmul %1, %2, %cst {dimension_numbers = #tpu.dot_dimension_numbers<[1], [0], [0], [1], [0, 0, 1, 1], [], []>} : vector<8x768xbf16>, vector<768x128xbf16>, vector<8x128xf32> -> vector<8x128xf32>
    %c0_3 = arith.constant 0 : index
    %c0_4 = arith.constant 0 : index
    %4 = vector.load %arg4[%c0_3, %c0_4] : memref<8x128xf32, #tpu.memory_space<vmem>>, vector<8x128xf32>
    tpu.vector_store %arg4[%c0_3, %c0_4], %3 {strides = array<i32>} : memref<8x128xf32, #tpu.memory_space<vmem>>, vector<8x128xf32>,
    return
  }
  func.func @transform_0(%arg0: i32, %arg1: i32) -> (i32, i32) {
    %c0_i32 = arith.constant 0 : i32
    %c0_i32_0 = arith.constant 0 : i32
    return %arg1, %c0_i32 : i32, i32
  }
  func.func @transform_1(%arg0: i32, %arg1: i32) -> (i32, i32) {
    %c0_i32 = arith.constant 0 : i32
    %c0_i32_0 = arith.constant 0 : i32
    return %c0_i32, %arg0 : i32, i32
  }
  func.func @transform_2(%arg0: i32, %arg1: i32) -> (i32, i32) {
    %c0_i32 = arith.constant 0 : i32
    return %arg1, %arg0 : i32, i32
  }
}

module attributes {stable_mosaic.version = 11 : i64} {
  func.func @_fused_linear_kernel(%arg0: i32, %arg1: i32, %arg2: memref<10x128xf32, #tpu.memory_space<vmem>>, %arg3: memref<1x128xf32, #tpu.memory_space<vmem>>, %arg4: memref<1x128xf32, #tpu.memory_space<vmem>>, %arg5: memref<128x384xbf16, #tpu.memory_space<vmem>>, %arg6: memref<1x384xf32, #tpu.memory_space<vmem>>, %arg7: memref<10x384xbf16, #tpu.memory_space<vmem>>) attributes {dimension_semantics = [#tpu.dimension_semantics<parallel>, #tpu.dimension_semantics<parallel>], iteration_bounds = array<i64: 1, 1>, scalar_prefetch = 0 : i64, scratch_operands = 0 : i64, tpu.core_type = #tpu.core_type<tc>, window_params = [{transform_indices = @transform_0, window_bounds = array<i64: 10, 128>}, {pipeline_mode = #tpu.pipeline_mode<synchronous>, transform_indices = @transform_1, window_bounds = array<i64: 1, 128>}, {pipeline_mode = #tpu.pipeline_mode<synchronous>, transform_indices = @transform_2, window_bounds = array<i64: 1, 128>}, {transform_indices = @transform_3, window_bounds = array<i64: 128, 384>}, {transform_indices = @transform_4, window_bounds = array<i64: 1, 384>}, {transform_indices = @transform_5, window_bounds = array<i64: 10, 384>}]} {
    %c0 = arith.constant 0 : index
    %c0_0 = arith.constant 0 : index
    %0 = vector.load %arg2[%c0, %c0_0] : memref<10x128xf32, #tpu.memory_space<vmem>>, vector<10x128xf32>
    %cst = arith.constant dense<0.000000e+00> : vector<10xf32>
    %1 = vector.multi_reduction <add>, %0, %cst [1] : vector<10x128xf32> to vector<10xf32>
    %2 = vector.shape_cast %1 : vector<10xf32> to vector<10x1xf32>
    %cst_1 = arith.constant 1.280000e+02 : f32
    %3 = vector.broadcast %cst_1 : f32 to vector<10x1xf32>
    %4 = arith.divf %2, %3 : vector<10x1xf32>
    %5 = vector.broadcast %4 : vector<10x1xf32> to vector<10x128xf32>
    %6 = arith.subf %0, %5 : vector<10x128xf32>
    %7 = arith.mulf %6, %6 : vector<10x128xf32>
    %cst_2 = arith.constant dense<0.000000e+00> : vector<10xf32>
    %8 = vector.multi_reduction <add>, %7, %cst_2 [1] : vector<10x128xf32> to vector<10xf32>
    %9 = vector.shape_cast %8 : vector<10xf32> to vector<10x1xf32>
    %cst_3 = arith.constant 1.280000e+02 : f32
    %10 = vector.broadcast %cst_3 : f32 to vector<10x1xf32>
    %11 = arith.divf %9, %10 : vector<10x1xf32>
    %cst_4 = arith.constant 9.99999974E-6 : f32
    %12 = vector.broadcast %cst_4 : f32 to vector<10x1xf32>
    %13 = arith.addf %11, %12 : vector<10x1xf32>
    %14 = math.rsqrt %13 : vector<10x1xf32>
    %15 = vector.broadcast %14 : vector<10x1xf32> to vector<10x128xf32>
    %16 = arith.mulf %6, %15 : vector<10x128xf32>
    %c0_5 = arith.constant 0 : index
    %c0_6 = arith.constant 0 : index
    %17 = vector.load %arg3[%c0_5, %c0_6] : memref<1x128xf32, #tpu.memory_space<vmem>>, vector<1x128xf32>
    %18 = vector.broadcast %17 : vector<1x128xf32> to vector<10x128xf32>
    %19 = arith.mulf %16, %18 : vector<10x128xf32>
    %c0_7 = arith.constant 0 : index
    %c0_8 = arith.constant 0 : index
    %20 = vector.load %arg4[%c0_7, %c0_8] : memref<1x128xf32, #tpu.memory_space<vmem>>, vector<1x128xf32>
    %21 = vector.broadcast %20 : vector<1x128xf32> to vector<10x128xf32>
    %22 = arith.addf %19, %21 : vector<10x128xf32>
    %23 = arith.truncf %22 : vector<10x128xf32> to vector<10x128xbf16>
    %c0_9 = arith.constant 0 : index
    %c0_10 = arith.constant 0 : index
    %24 = vector.load %arg5[%c0_9, %c0_10] : memref<128x384xbf16, #tpu.memory_space<vmem>>, vector<128x384xbf16>
    %cst_11 = arith.constant dense<0.000000e+00> : vector<10x384xf32>
    %25 = tpu.matmul %23, %24, %cst_11 {dimension_numbers = #tpu.dot_dimension_numbers<[1], [0], [0], [1], [0, 0, 1, 1], [], []>} : vector<10x128xbf16>, vector<128x384xbf16>, vector<10x384xf32> -> vector<10x384xf32>
    %c0_12 = arith.constant 0 : index
    %c0_13 = arith.constant 0 : index
    %26 = vector.load %arg6[%c0_12, %c0_13] : memref<1x384xf32, #tpu.memory_space<vmem>>, vector<1x384xf32>
    %27 = vector.broadcast %26 : vector<1x384xf32> to vector<10x384xf32>
    %28 = arith.addf %25, %27 : vector<10x384xf32>
    %29 = arith.truncf %28 : vector<10x384xf32> to vector<10x384xbf16>
    %c0_14 = arith.constant 0 : index
    %c0_15 = arith.constant 0 : index
    %30 = vector.load %arg7[%c0_14, %c0_15] : memref<10x384xbf16, #tpu.memory_space<vmem>>, vector<10x384xbf16>
    tpu.vector_store %arg7[%c0_14, %c0_15], %29 {strides = array<i32>} : memref<10x384xbf16, #tpu.memory_space<vmem>>, vector<10x384xbf16>,
    return
  }
  func.func @transform_0(%arg0: i32, %arg1: i32) -> (i32, i32) {
    %c0_i32 = arith.constant 0 : i32
    %c0_i32_0 = arith.constant 0 : i32
    return %arg1, %c0_i32 : i32, i32
  }
  func.func @transform_1(%arg0: i32, %arg1: i32) -> (i32, i32) {
    %c0_i32 = arith.constant 0 : i32
    %c0_i32_0 = arith.constant 0 : i32
    %c0_i32_1 = arith.constant 0 : i32
    return %c0_i32, %c0_i32_0 : i32, i32
  }
  func.func @transform_2(%arg0: i32, %arg1: i32) -> (i32, i32) {
    %c0_i32 = arith.constant 0 : i32
    %c0_i32_0 = arith.constant 0 : i32
    %c0_i32_1 = arith.constant 0 : i32
    return %c0_i32, %c0_i32_0 : i32, i32
  }
  func.func @transform_3(%arg0: i32, %arg1: i32) -> (i32, i32) {
    %c0_i32 = arith.constant 0 : i32
    %c0_i32_0 = arith.constant 0 : i32
    return %c0_i32, %arg0 : i32, i32
  }
  func.func @transform_4(%arg0: i32, %arg1: i32) -> (i32, i32) {
    %c0_i32 = arith.constant 0 : i32
    %c0_i32_0 = arith.constant 0 : i32
    return %c0_i32, %arg0 : i32, i32
  }
  func.func @transform_5(%arg0: i32, %arg1: i32) -> (i32, i32) {
    %c0_i32 = arith.constant 0 : i32
    return %arg1, %arg0 : i32, i32
  }
}

module attributes {stable_mosaic.version = 11 : i64} {
  func.func @_pos_ln_kernel(%arg0: i32, %arg1: memref<1x5x128xf32, #tpu.memory_space<vmem>>, %arg2: memref<5x128xf32, #tpu.memory_space<vmem>>, %arg3: memref<1x128xf32, #tpu.memory_space<vmem>>, %arg4: memref<1x128xf32, #tpu.memory_space<vmem>>, %arg5: memref<1x5x128xf32, #tpu.memory_space<vmem>>) attributes {dimension_semantics = [#tpu.dimension_semantics<parallel>], iteration_bounds = array<i64: 2>, scalar_prefetch = 0 : i64, scratch_operands = 0 : i64, tpu.core_type = #tpu.core_type<tc>, window_params = [{transform_indices = @transform_0, window_bounds = array<i64: 1, 5, 128>}, {pipeline_mode = #tpu.pipeline_mode<synchronous>, transform_indices = @transform_1, window_bounds = array<i64: 5, 128>}, {pipeline_mode = #tpu.pipeline_mode<synchronous>, transform_indices = @transform_2, window_bounds = array<i64: 1, 128>}, {pipeline_mode = #tpu.pipeline_mode<synchronous>, transform_indices = @transform_3, window_bounds = array<i64: 1, 128>}, {transform_indices = @transform_4, window_bounds = array<i64: 1, 5, 128>}]} {
    %c0 = arith.constant 0 : index
    %c0_0 = arith.constant 0 : index
    %c0_1 = arith.constant 0 : index
    %0 = vector.load %arg1[%c0, %c0_0, %c0_1] : memref<1x5x128xf32, #tpu.memory_space<vmem>>, vector<1x5x128xf32>
    %1 = vector.shape_cast %0 : vector<1x5x128xf32> to vector<5x128xf32>
    %c0_2 = arith.constant 0 : index
    %c0_3 = arith.constant 0 : index
    %2 = vector.load %arg2[%c0_2, %c0_3] : memref<5x128xf32, #tpu.memory_space<vmem>>, vector<5x128xf32>
    %3 = arith.addf %1, %2 : vector<5x128xf32>
    %cst = arith.constant dense<0.000000e+00> : vector<5xf32>
    %4 = vector.multi_reduction <add>, %3, %cst [1] : vector<5x128xf32> to vector<5xf32>
    %5 = vector.shape_cast %4 : vector<5xf32> to vector<5x1xf32>
    %cst_4 = arith.constant 1.280000e+02 : f32
    %6 = vector.broadcast %cst_4 : f32 to vector<5x1xf32>
    %7 = arith.divf %5, %6 : vector<5x1xf32>
    %8 = vector.broadcast %7 : vector<5x1xf32> to vector<5x128xf32>
    %9 = arith.subf %3, %8 : vector<5x128xf32>
    %10 = arith.mulf %9, %9 : vector<5x128xf32>
    %cst_5 = arith.constant dense<0.000000e+00> : vector<5xf32>
    %11 = vector.multi_reduction <add>, %10, %cst_5 [1] : vector<5x128xf32> to vector<5xf32>
    %12 = vector.shape_cast %11 : vector<5xf32> to vector<5x1xf32>
    %cst_6 = arith.constant 1.280000e+02 : f32
    %13 = vector.broadcast %cst_6 : f32 to vector<5x1xf32>
    %14 = arith.divf %12, %13 : vector<5x1xf32>
    %cst_7 = arith.constant 9.99999974E-6 : f32
    %15 = vector.broadcast %cst_7 : f32 to vector<5x1xf32>
    %16 = arith.addf %14, %15 : vector<5x1xf32>
    %17 = math.rsqrt %16 : vector<5x1xf32>
    %18 = vector.broadcast %17 : vector<5x1xf32> to vector<5x128xf32>
    %19 = arith.mulf %9, %18 : vector<5x128xf32>
    %c0_8 = arith.constant 0 : index
    %c0_9 = arith.constant 0 : index
    %20 = vector.load %arg3[%c0_8, %c0_9] : memref<1x128xf32, #tpu.memory_space<vmem>>, vector<1x128xf32>
    %21 = vector.broadcast %20 : vector<1x128xf32> to vector<5x128xf32>
    %22 = arith.mulf %19, %21 : vector<5x128xf32>
    %c0_10 = arith.constant 0 : index
    %c0_11 = arith.constant 0 : index
    %23 = vector.load %arg4[%c0_10, %c0_11] : memref<1x128xf32, #tpu.memory_space<vmem>>, vector<1x128xf32>
    %24 = vector.broadcast %23 : vector<1x128xf32> to vector<5x128xf32>
    %25 = arith.addf %22, %24 : vector<5x128xf32>
    %c0_12 = arith.constant 0 : index
    %c0_13 = arith.constant 0 : index
    %c0_14 = arith.constant 0 : index
    %26 = vector.load %arg5[%c0_12, %c0_13, %c0_14] : memref<1x5x128xf32, #tpu.memory_space<vmem>>, vector<1x5x128xf32>
    %27 = vector.shape_cast %26 : vector<1x5x128xf32> to vector<5x128xf32>
    %28 = vector.shape_cast %25 : vector<5x128xf32> to vector<1x5x128xf32>
    tpu.vector_store %arg5[%c0_12, %c0_13, %c0_14], %28 {strides = array<i32>} : memref<1x5x128xf32, #tpu.memory_space<vmem>>, vector<1x5x128xf32>,
    return
  }
  func.func @transform_0(%arg0: i32) -> (i32, i32, i32) {
    %c0_i32 = arith.constant 0 : i32
    %c0_i32_0 = arith.constant 0 : i32
    %c0_i32_1 = arith.constant 0 : i32
    return %arg0, %c0_i32, %c0_i32_0 : i32, i32, i32
  }
  func.func @transform_1(%arg0: i32) -> (i32, i32) {
    %c0_i32 = arith.constant 0 : i32
    %c0_i32_0 = arith.constant 0 : i32
    %c0_i32_1 = arith.constant 0 : i32
    return %c0_i32, %c0_i32_0 : i32, i32
  }
  func.func @transform_2(%arg0: i32) -> (i32, i32) {
    %c0_i32 = arith.constant 0 : i32
    %c0_i32_0 = arith.constant 0 : i32
    %c0_i32_1 = arith.constant 0 : i32
    return %c0_i32, %c0_i32_0 : i32, i32
  }
  func.func @transform_3(%arg0: i32) -> (i32, i32) {
    %c0_i32 = arith.constant 0 : i32
    %c0_i32_0 = arith.constant 0 : i32
    %c0_i32_1 = arith.constant 0 : i32
    return %c0_i32, %c0_i32_0 : i32, i32
  }
  func.func @transform_4(%arg0: i32) -> (i32, i32, i32) {
    %c0_i32 = arith.constant 0 : i32
    %c0_i32_0 = arith.constant 0 : i32
    %c0_i32_1 = arith.constant 0 : i32
    return %arg0, %c0_i32, %c0_i32_0 : i32, i32, i32
  }
}

module attributes {stable_mosaic.version = 11 : i64} {
  func.func @_attn_kernel(%arg0: i32, %arg1: i32, %arg2: i32, %arg3: memref<1x5x384xbf16, #tpu.memory_space<vmem>>, %arg4: memref<1x5x384xbf16, #tpu.memory_space<vmem>>, %arg5: memref<1x5x128xbf16, #tpu.memory_space<vmem>>) attributes {dimension_semantics = [#tpu.dimension_semantics<parallel>, #tpu.dimension_semantics<parallel>, #tpu.dimension_semantics<parallel>], iteration_bounds = array<i64: 2, 1, 1>, scalar_prefetch = 0 : i64, scratch_operands = 0 : i64, tpu.core_type = #tpu.core_type<tc>, window_params = [{transform_indices = @transform_0, window_bounds = array<i64: 1, 5, 384>}, {transform_indices = @transform_1, window_bounds = array<i64: 1, 5, 384>}, {transform_indices = @transform_2, window_bounds = array<i64: 1, 5, 128>}]} {
    %c0 = arith.constant 0 : index
    %c0_0 = arith.constant 0 : index
    %c0_1 = arith.constant 0 : index
    %0 = vector.load %arg3[%c0, %c0_0, %c0_1] : memref<1x5x384xbf16, #tpu.memory_space<vmem>>, vector<1x5x64xbf16>
    %1 = vector.shape_cast %0 : vector<1x5x64xbf16> to vector<5x64xbf16>
    %c0_2 = arith.constant 0 : index
    %c0_3 = arith.constant 0 : index
    %c64 = arith.constant 64 : index
    %2 = vector.load %arg4[%c0_2, %c0_3, %c64] : memref<1x5x384xbf16, #tpu.memory_space<vmem>>, vector<1x5x64xbf16>
    %3 = vector.shape_cast %2 : vector<1x5x64xbf16> to vector<5x64xbf16>
    %c0_4 = arith.constant 0 : index
    %c0_5 = arith.constant 0 : index
    %c128 = arith.constant 128 : index
    %4 = vector.load %arg4[%c0_4, %c0_5, %c128] : memref<1x5x384xbf16, #tpu.memory_space<vmem>>, vector<1x5x64xbf16>
    %5 = vector.shape_cast %4 : vector<1x5x64xbf16> to vector<5x64xbf16>
    %cst = arith.constant dense<0.000000e+00> : vector<5x5xf32>
    %6 = tpu.matmul %1, %3, %cst {dimension_numbers = #tpu.dot_dimension_numbers<[1], [1], [0], [0], [0, 0, 1, 0], [], []>} : vector<5x64xbf16>, vector<5x64xbf16>, vector<5x5xf32> -> vector<5x5xf32>
    %cst_6 = arith.constant 1.250000e-01 : f32
    %7 = vector.broadcast %cst_6 : f32 to vector<5x5xf32>
    %8 = arith.mulf %6, %7 : vector<5x5xf32>
    %cst_7 = arith.constant dense<0xFF800000> : vector<5xf32>
    %9 = vector.multi_reduction <maximumf>, %8, %cst_7 [1] : vector<5x5xf32> to vector<5xf32>
    %10 = vector.shape_cast %9 : vector<5xf32> to vector<5x1xf32>
    %11 = vector.broadcast %10 : vector<5x1xf32> to vector<5x5xf32>
    %12 = arith.subf %8, %11 : vector<5x5xf32>
    %13 = math.exp %12 : vector<5x5xf32>
    %cst_8 = arith.constant dense<0.000000e+00> : vector<5xf32>
    %14 = vector.multi_reduction <add>, %13, %cst_8 [1] : vector<5x5xf32> to vector<5xf32>
    %15 = vector.shape_cast %14 : vector<5xf32> to vector<5x1xf32>
    %16 = tpu.reciprocal %15 : vector<5x1xf32> -> vector<5x1xf32>
    %17 = vector.broadcast %16 : vector<5x1xf32> to vector<5x5xf32>
    %18 = arith.mulf %13, %17 : vector<5x5xf32>
    %19 = arith.truncf %18 : vector<5x5xf32> to vector<5x5xbf16>
    %cst_9 = arith.constant dense<0.000000e+00> : vector<5x64xf32>
    %20 = tpu.matmul %19, %5, %cst_9 {dimension_numbers = #tpu.dot_dimension_numbers<[1], [0], [0], [1], [0, 0, 1, 1], [], []>} : vector<5x5xbf16>, vector<5x64xbf16>, vector<5x64xf32> -> vector<5x64xf32>
    %21 = arith.truncf %20 : vector<5x64xf32> to vector<5x64xbf16>
    %c0_10 = arith.constant 0 : index
    %c0_11 = arith.constant 0 : index
    %c0_12 = arith.constant 0 : index
    %22 = vector.load %arg5[%c0_10, %c0_11, %c0_12] : memref<1x5x128xbf16, #tpu.memory_space<vmem>>, vector<1x5x64xbf16>
    %23 = vector.shape_cast %22 : vector<1x5x64xbf16> to vector<5x64xbf16>
    %24 = vector.shape_cast %21 : vector<5x64xbf16> to vector<1x5x64xbf16>
    tpu.vector_store %arg5[%c0_10, %c0_11, %c0_12], %24 {strides = array<i32>} : memref<1x5x128xbf16, #tpu.memory_space<vmem>>, vector<1x5x64xbf16>,
    %c0_13 = arith.constant 0 : index
    %c0_14 = arith.constant 0 : index
    %c192 = arith.constant 192 : index
    %25 = vector.load %arg3[%c0_13, %c0_14, %c192] : memref<1x5x384xbf16, #tpu.memory_space<vmem>>, vector<1x5x64xbf16>
    %26 = vector.shape_cast %25 : vector<1x5x64xbf16> to vector<5x64xbf16>
    %c0_15 = arith.constant 0 : index
    %c0_16 = arith.constant 0 : index
    %c256 = arith.constant 256 : index
    %27 = vector.load %arg4[%c0_15, %c0_16, %c256] : memref<1x5x384xbf16, #tpu.memory_space<vmem>>, vector<1x5x64xbf16>
    %28 = vector.shape_cast %27 : vector<1x5x64xbf16> to vector<5x64xbf16>
    %c0_17 = arith.constant 0 : index
    %c0_18 = arith.constant 0 : index
    %c320 = arith.constant 320 : index
    %29 = vector.load %arg4[%c0_17, %c0_18, %c320] : memref<1x5x384xbf16, #tpu.memory_space<vmem>>, vector<1x5x64xbf16>
    %30 = vector.shape_cast %29 : vector<1x5x64xbf16> to vector<5x64xbf16>
    %cst_19 = arith.constant dense<0.000000e+00> : vector<5x5xf32>
    %31 = tpu.matmul %26, %28, %cst_19 {dimension_numbers = #tpu.dot_dimension_numbers<[1], [1], [0], [0], [0, 0, 1, 0], [], []>} : vector<5x64xbf16>, vector<5x64xbf16>, vector<5x5xf32> -> vector<5x5xf32>
    %cst_20 = arith.constant 1.250000e-01 : f32
    %32 = vector.broadcast %cst_20 : f32 to vector<5x5xf32>
    %33 = arith.mulf %31, %32 : vector<5x5xf32>
    %cst_21 = arith.constant dense<0xFF800000> : vector<5xf32>
    %34 = vector.multi_reduction <maximumf>, %33, %cst_21 [1] : vector<5x5xf32> to vector<5xf32>
    %35 = vector.shape_cast %34 : vector<5xf32> to vector<5x1xf32>
    %36 = vector.broadcast %35 : vector<5x1xf32> to vector<5x5xf32>
    %37 = arith.subf %33, %36 : vector<5x5xf32>
    %38 = math.exp %37 : vector<5x5xf32>
    %cst_22 = arith.constant dense<0.000000e+00> : vector<5xf32>
    %39 = vector.multi_reduction <add>, %38, %cst_22 [1] : vector<5x5xf32> to vector<5xf32>
    %40 = vector.shape_cast %39 : vector<5xf32> to vector<5x1xf32>
    %41 = tpu.reciprocal %40 : vector<5x1xf32> -> vector<5x1xf32>
    %42 = vector.broadcast %41 : vector<5x1xf32> to vector<5x5xf32>
    %43 = arith.mulf %38, %42 : vector<5x5xf32>
    %44 = arith.truncf %43 : vector<5x5xf32> to vector<5x5xbf16>
    %cst_23 = arith.constant dense<0.000000e+00> : vector<5x64xf32>
    %45 = tpu.matmul %44, %30, %cst_23 {dimension_numbers = #tpu.dot_dimension_numbers<[1], [0], [0], [1], [0, 0, 1, 1], [], []>} : vector<5x5xbf16>, vector<5x64xbf16>, vector<5x64xf32> -> vector<5x64xf32>
    %46 = arith.truncf %45 : vector<5x64xf32> to vector<5x64xbf16>
    %c0_24 = arith.constant 0 : index
    %c0_25 = arith.constant 0 : index
    %c64_26 = arith.constant 64 : index
    %47 = vector.load %arg5[%c0_24, %c0_25, %c64_26] : memref<1x5x128xbf16, #tpu.memory_space<vmem>>, vector<1x5x64xbf16>
    %48 = vector.shape_cast %47 : vector<1x5x64xbf16> to vector<5x64xbf16>
    %49 = vector.shape_cast %46 : vector<5x64xbf16> to vector<1x5x64xbf16>
    tpu.vector_store %arg5[%c0_24, %c0_25, %c64_26], %49 {strides = array<i32>} : memref<1x5x128xbf16, #tpu.memory_space<vmem>>, vector<1x5x64xbf16>,
    return
  }
  func.func @transform_0(%arg0: i32, %arg1: i32, %arg2: i32) -> (i32, i32, i32) {
    %c0_i32 = arith.constant 0 : i32
    return %arg0, %arg2, %arg1 : i32, i32, i32
  }
  func.func @transform_1(%arg0: i32, %arg1: i32, %arg2: i32) -> (i32, i32, i32) {
    %c0_i32 = arith.constant 0 : i32
    %c0_i32_0 = arith.constant 0 : i32
    return %arg0, %c0_i32, %arg1 : i32, i32, i32
  }
  func.func @transform_2(%arg0: i32, %arg1: i32, %arg2: i32) -> (i32, i32, i32) {
    %c0_i32 = arith.constant 0 : i32
    return %arg0, %arg2, %arg1 : i32, i32, i32
  }
}

module attributes {stable_mosaic.version = 11 : i64} {
  func.func @_fused_linear_kernel(%arg0: i32, %arg1: i32, %arg2: memref<10x128xbf16, #tpu.memory_space<vmem>>, %arg3: memref<128x128xbf16, #tpu.memory_space<vmem>>, %arg4: memref<1x128xf32, #tpu.memory_space<vmem>>, %arg5: memref<10x128xf32, #tpu.memory_space<vmem>>, %arg6: memref<10x128xf32, #tpu.memory_space<vmem>>) attributes {dimension_semantics = [#tpu.dimension_semantics<parallel>, #tpu.dimension_semantics<parallel>], iteration_bounds = array<i64: 1, 1>, scalar_prefetch = 0 : i64, scratch_operands = 0 : i64, tpu.core_type = #tpu.core_type<tc>, window_params = [{transform_indices = @transform_0, window_bounds = array<i64: 10, 128>}, {transform_indices = @transform_1, window_bounds = array<i64: 128, 128>}, {transform_indices = @transform_2, window_bounds = array<i64: 1, 128>}, {transform_indices = @transform_3, window_bounds = array<i64: 10, 128>}, {transform_indices = @transform_4, window_bounds = array<i64: 10, 128>}]} {
    %c0 = arith.constant 0 : index
    %c0_0 = arith.constant 0 : index
    %0 = vector.load %arg2[%c0, %c0_0] : memref<10x128xbf16, #tpu.memory_space<vmem>>, vector<10x128xbf16>
    %c0_1 = arith.constant 0 : index
    %c0_2 = arith.constant 0 : index
    %1 = vector.load %arg3[%c0_1, %c0_2] : memref<128x128xbf16, #tpu.memory_space<vmem>>, vector<128x128xbf16>
    %cst = arith.constant dense<0.000000e+00> : vector<10x128xf32>
    %2 = tpu.matmul %0, %1, %cst {dimension_numbers = #tpu.dot_dimension_numbers<[1], [0], [0], [1], [0, 0, 1, 1], [], []>} : vector<10x128xbf16>, vector<128x128xbf16>, vector<10x128xf32> -> vector<10x128xf32>
    %c0_3 = arith.constant 0 : index
    %c0_4 = arith.constant 0 : index
    %3 = vector.load %arg4[%c0_3, %c0_4] : memref<1x128xf32, #tpu.memory_space<vmem>>, vector<1x128xf32>
    %4 = vector.broadcast %3 : vector<1x128xf32> to vector<10x128xf32>
    %5 = arith.addf %2, %4 : vector<10x128xf32>
    %c0_5 = arith.constant 0 : index
    %c0_6 = arith.constant 0 : index
    %6 = vector.load %arg5[%c0_5, %c0_6] : memref<10x128xf32, #tpu.memory_space<vmem>>, vector<10x128xf32>
    %7 = arith.addf %5, %6 : vector<10x128xf32>
    %c0_7 = arith.constant 0 : index
    %c0_8 = arith.constant 0 : index
    %8 = vector.load %arg6[%c0_7, %c0_8] : memref<10x128xf32, #tpu.memory_space<vmem>>, vector<10x128xf32>
    tpu.vector_store %arg6[%c0_7, %c0_8], %7 {strides = array<i32>} : memref<10x128xf32, #tpu.memory_space<vmem>>, vector<10x128xf32>,
    return
  }
  func.func @transform_0(%arg0: i32, %arg1: i32) -> (i32, i32) {
    %c0_i32 = arith.constant 0 : i32
    %c0_i32_0 = arith.constant 0 : i32
    return %arg1, %c0_i32 : i32, i32
  }
  func.func @transform_1(%arg0: i32, %arg1: i32) -> (i32, i32) {
    %c0_i32 = arith.constant 0 : i32
    %c0_i32_0 = arith.constant 0 : i32
    return %c0_i32, %arg0 : i32, i32
  }
  func.func @transform_2(%arg0: i32, %arg1: i32) -> (i32, i32) {
    %c0_i32 = arith.constant 0 : i32
    %c0_i32_0 = arith.constant 0 : i32
    return %c0_i32, %arg0 : i32, i32
  }
  func.func @transform_3(%arg0: i32, %arg1: i32) -> (i32, i32) {
    %c0_i32 = arith.constant 0 : i32
    return %arg1, %arg0 : i32, i32
  }
  func.func @transform_4(%arg0: i32, %arg1: i32) -> (i32, i32) {
    %c0_i32 = arith.constant 0 : i32
    return %arg1, %arg0 : i32, i32
  }
}

module attributes {stable_mosaic.version = 11 : i64} {
  func.func @_fused_mlp_kernel(%arg0: i32, %arg1: i32, %arg2: memref<10x128xf32, #tpu.memory_space<vmem>>, %arg3: memref<1x128xf32, #tpu.memory_space<vmem>>, %arg4: memref<1x128xf32, #tpu.memory_space<vmem>>, %arg5: memref<128x512xbf16, #tpu.memory_space<vmem>>, %arg6: memref<1x512xf32, #tpu.memory_space<vmem>>, %arg7: memref<512x128xbf16, #tpu.memory_space<vmem>>, %arg8: memref<1x128xf32, #tpu.memory_space<vmem>>, %arg9: memref<10x128xf32, #tpu.memory_space<vmem>>, %arg10: memref<10x128xbf16, #tpu.memory_space<vmem>>, %arg11: memref<10x128xf32, #tpu.memory_space<vmem>>) attributes {dimension_semantics = [#tpu.dimension_semantics<parallel>, #tpu.dimension_semantics<arbitrary>], iteration_bounds = array<i64: 1, 1>, scalar_prefetch = 0 : i64, scratch_operands = 2 : i64, tpu.core_type = #tpu.core_type<tc>, window_params = [{transform_indices = @transform_0, window_bounds = array<i64: 10, 128>}, {pipeline_mode = #tpu.pipeline_mode<synchronous>, transform_indices = @transform_1, window_bounds = array<i64: 1, 128>}, {pipeline_mode = #tpu.pipeline_mode<synchronous>, transform_indices = @transform_2, window_bounds = array<i64: 1, 128>}, {transform_indices = @transform_3, window_bounds = array<i64: 128, 512>}, {transform_indices = @transform_4, window_bounds = array<i64: 1, 512>}, {transform_indices = @transform_5, window_bounds = array<i64: 512, 128>}, {pipeline_mode = #tpu.pipeline_mode<synchronous>, transform_indices = @transform_6, window_bounds = array<i64: 1, 128>}, {transform_indices = @transform_7, window_bounds = array<i64: 10, 128>}]} {
    %c0_i32 = arith.constant 0 : i32
    %0 = arith.cmpi eq, %arg1, %c0_i32 : i32
    %1 = arith.extui %0 : i1 to i32
    %c0_i32_0 = arith.constant 0 : i32
    %2 = arith.cmpi ne, %1, %c0_i32_0 : i32
    scf.if %2 {
      %c0_17 = arith.constant 0 : index
      %c0_18 = arith.constant 0 : index
      %26 = vector.load %arg2[%c0_17, %c0_18] : memref<10x128xf32, #tpu.memory_space<vmem>>, vector<10x128xf32>
      %cst_19 = arith.constant dense<0.000000e+00> : vector<10xf32>
      %27 = vector.multi_reduction <add>, %26, %cst_19 [1] : vector<10x128xf32> to vector<10xf32>
      %28 = vector.shape_cast %27 : vector<10xf32> to vector<10x1xf32>
      %cst_20 = arith.constant 1.280000e+02 : f32
      %29 = vector.broadcast %cst_20 : f32 to vector<10x1xf32>
      %30 = arith.divf %28, %29 : vector<10x1xf32>
      %31 = vector.broadcast %30 : vector<10x1xf32> to vector<10x128xf32>
      %32 = arith.subf %26, %31 : vector<10x128xf32>
      %33 = arith.mulf %32, %32 : vector<10x128xf32>
      %cst_21 = arith.constant dense<0.000000e+00> : vector<10xf32>
      %34 = vector.multi_reduction <add>, %33, %cst_21 [1] : vector<10x128xf32> to vector<10xf32>
      %35 = vector.shape_cast %34 : vector<10xf32> to vector<10x1xf32>
      %cst_22 = arith.constant 1.280000e+02 : f32
      %36 = vector.broadcast %cst_22 : f32 to vector<10x1xf32>
      %37 = arith.divf %35, %36 : vector<10x1xf32>
      %cst_23 = arith.constant 9.99999974E-6 : f32
      %38 = vector.broadcast %cst_23 : f32 to vector<10x1xf32>
      %39 = arith.addf %37, %38 : vector<10x1xf32>
      %40 = math.rsqrt %39 : vector<10x1xf32>
      %41 = vector.broadcast %40 : vector<10x1xf32> to vector<10x128xf32>
      %42 = arith.mulf %32, %41 : vector<10x128xf32>
      %c0_24 = arith.constant 0 : index
      %c0_25 = arith.constant 0 : index
      %43 = vector.load %arg3[%c0_24, %c0_25] : memref<1x128xf32, #tpu.memory_space<vmem>>, vector<1x128xf32>
      %44 = vector.broadcast %43 : vector<1x128xf32> to vector<10x128xf32>
      %45 = arith.mulf %42, %44 : vector<10x128xf32>
      %c0_26 = arith.constant 0 : index
      %c0_27 = arith.constant 0 : index
      %46 = vector.load %arg4[%c0_26, %c0_27] : memref<1x128xf32, #tpu.memory_space<vmem>>, vector<1x128xf32>
      %47 = vector.broadcast %46 : vector<1x128xf32> to vector<10x128xf32>
      %48 = arith.addf %45, %47 : vector<10x128xf32>
      %49 = arith.truncf %48 : vector<10x128xf32> to vector<10x128xbf16>
      %c0_28 = arith.constant 0 : index
      %c0_29 = arith.constant 0 : index
      %50 = vector.load %arg10[%c0_28, %c0_29] : memref<10x128xbf16, #tpu.memory_space<vmem>>, vector<10x128xbf16>
      tpu.vector_store %arg10[%c0_28, %c0_29], %49 {strides = array<i32>} : memref<10x128xbf16, #tpu.memory_space<vmem>>, vector<10x128xbf16>,
      %cst_30 = arith.constant 0.000000e+00 : f32
      %51 = vector.broadcast %cst_30 : f32 to vector<10x128xf32>
      %c0_31 = arith.constant 0 : index
      %c0_32 = arith.constant 0 : index
      %52 = vector.load %arg11[%c0_31, %c0_32] : memref<10x128xf32, #tpu.memory_space<vmem>>, vector<10x128xf32>
      tpu.vector_store %arg11[%c0_31, %c0_32], %51 {strides = array<i32>} : memref<10x128xf32, #tpu.memory_space<vmem>>, vector<10x128xf32>,
    } else {
    }
    %c0 = arith.constant 0 : index
    %c0_1 = arith.constant 0 : index
    %3 = vector.load %arg10[%c0, %c0_1] : memref<10x128xbf16, #tpu.memory_space<vmem>>, vector<10x128xbf16>
    %c0_2 = arith.constant 0 : index
    %c0_3 = arith.constant 0 : index
    %4 = vector.load %arg5[%c0_2, %c0_3] : memref<128x512xbf16, #tpu.memory_space<vmem>>, vector<128x512xbf16>
    %cst = arith.constant dense<0.000000e+00> : vector<10x512xf32>
    %5 = tpu.matmul %3, %4, %cst {dimension_numbers = #tpu.dot_dimension_numbers<[1], [0], [0], [1], [0, 0, 1, 1], [], []>} : vector<10x128xbf16>, vector<128x512xbf16>, vector<10x512xf32> -> vector<10x512xf32>
    %c0_4 = arith.constant 0 : index
    %c0_5 = arith.constant 0 : index
    %6 = vector.load %arg6[%c0_4, %c0_5] : memref<1x512xf32, #tpu.memory_space<vmem>>, vector<1x512xf32>
    %7 = vector.broadcast %6 : vector<1x512xf32> to vector<10x512xf32>
    %8 = arith.addf %5, %7 : vector<10x512xf32>
    %cst_6 = arith.constant 1.702000e+00 : f32
    %9 = vector.broadcast %cst_6 : f32 to vector<10x512xf32>
    %10 = arith.mulf %9, %8 : vector<10x512xf32>
    %11 = arith.negf %10 : vector<10x512xf32>
    %12 = math.exp %11 : vector<10x512xf32>
    %cst_7 = arith.constant 1.000000e+00 : f32
    %13 = vector.broadcast %cst_7 : f32 to vector<10x512xf32>
    %14 = arith.addf %13, %12 : vector<10x512xf32>
    %15 = arith.divf %13, %14 : vector<10x512xf32>
    %16 = arith.mulf %8, %15 : vector<10x512xf32>
    %c0_8 = arith.constant 0 : index
    %c0_9 = arith.constant 0 : index
    %17 = vector.load %arg11[%c0_8, %c0_9] : memref<10x128xf32, #tpu.memory_space<vmem>>, vector<10x128xf32>
    %18 = arith.truncf %16 : vector<10x512xf32> to vector<10x512xbf16>
    %c0_10 = arith.constant 0 : index
    %c0_11 = arith.constant 0 : index
    %19 = vector.load %arg7[%c0_10, %c0_11] : memref<512x128xbf16, #tpu.memory_space<vmem>>, vector<512x128xbf16>
    %cst_12 = arith.constant dense<0.000000e+00> : vector<10x128xf32>
    %20 = tpu.matmul %18, %19, %cst_12 {dimension_numbers = #tpu.dot_dimension_numbers<[1], [0], [0], [1], [0, 0, 1, 1], [], []>} : vector<10x512xbf16>, vector<512x128xbf16>, vector<10x128xf32> -> vector<10x128xf32>
    %21 = arith.addf %17, %20 : vector<10x128xf32>
    %c0_13 = arith.constant 0 : index
    %c0_14 = arith.constant 0 : index
    %22 = vector.load %arg11[%c0_13, %c0_14] : memref<10x128xf32, #tpu.memory_space<vmem>>, vector<10x128xf32>
    tpu.vector_store %arg11[%c0_13, %c0_14], %21 {strides = array<i32>} : memref<10x128xf32, #tpu.memory_space<vmem>>, vector<10x128xf32>,
    %c0_i32_15 = arith.constant 0 : i32
    %23 = arith.cmpi eq, %arg1, %c0_i32_15 : i32
    %24 = arith.extui %23 : i1 to i32
    %c0_i32_16 = arith.constant 0 : i32
    %25 = arith.cmpi ne, %24, %c0_i32_16 : i32
    scf.if %25 {
      %c0_17 = arith.constant 0 : index
      %c0_18 = arith.constant 0 : index
      %26 = vector.load %arg2[%c0_17, %c0_18] : memref<10x128xf32, #tpu.memory_space<vmem>>, vector<10x128xf32>
      %c0_19 = arith.constant 0 : index
      %c0_20 = arith.constant 0 : index
      %27 = vector.load %arg11[%c0_19, %c0_20] : memref<10x128xf32, #tpu.memory_space<vmem>>, vector<10x128xf32>
      %28 = arith.addf %26, %27 : vector<10x128xf32>
      %c0_21 = arith.constant 0 : index
      %c0_22 = arith.constant 0 : index
      %29 = vector.load %arg8[%c0_21, %c0_22] : memref<1x128xf32, #tpu.memory_space<vmem>>, vector<1x128xf32>
      %30 = vector.broadcast %29 : vector<1x128xf32> to vector<10x128xf32>
      %31 = arith.addf %28, %30 : vector<10x128xf32>
      %c0_23 = arith.constant 0 : index
      %c0_24 = arith.constant 0 : index
      %32 = vector.load %arg9[%c0_23, %c0_24] : memref<10x128xf32, #tpu.memory_space<vmem>>, vector<10x128xf32>
      tpu.vector_store %arg9[%c0_23, %c0_24], %31 {strides = array<i32>} : memref<10x128xf32, #tpu.memory_space<vmem>>, vector<10x128xf32>,
    } else {
    }
    return
  }
  func.func @transform_0(%arg0: i32, %arg1: i32) -> (i32, i32) {
    %c0_i32 = arith.constant 0 : i32
    %c0_i32_0 = arith.constant 0 : i32
    return %arg0, %c0_i32 : i32, i32
  }
  func.func @transform_1(%arg0: i32, %arg1: i32) -> (i32, i32) {
    %c0_i32 = arith.constant 0 : i32
    %c0_i32_0 = arith.constant 0 : i32
    %c0_i32_1 = arith.constant 0 : i32
    return %c0_i32, %c0_i32_0 : i32, i32
  }
  func.func @transform_2(%arg0: i32, %arg1: i32) -> (i32, i32) {
    %c0_i32 = arith.constant 0 : i32
    %c0_i32_0 = arith.constant 0 : i32
    %c0_i32_1 = arith.constant 0 : i32
    return %c0_i32, %c0_i32_0 : i32, i32
  }
  func.func @transform_3(%arg0: i32, %arg1: i32) -> (i32, i32) {
    %c0_i32 = arith.constant 0 : i32
    %c0_i32_0 = arith.constant 0 : i32
    return %c0_i32, %arg1 : i32, i32
  }
  func.func @transform_4(%arg0: i32, %arg1: i32) -> (i32, i32) {
    %c0_i32 = arith.constant 0 : i32
    %c0_i32_0 = arith.constant 0 : i32
    return %c0_i32, %arg1 : i32, i32
  }
  func.func @transform_5(%arg0: i32, %arg1: i32) -> (i32, i32) {
    %c0_i32 = arith.constant 0 : i32
    %c0_i32_0 = arith.constant 0 : i32
    return %arg1, %c0_i32 : i32, i32
  }
  func.func @transform_6(%arg0: i32, %arg1: i32) -> (i32, i32) {
    %c0_i32 = arith.constant 0 : i32
    %c0_i32_0 = arith.constant 0 : i32
    %c0_i32_1 = arith.constant 0 : i32
    return %c0_i32, %c0_i32_0 : i32, i32
  }
  func.func @transform_7(%arg0: i32, %arg1: i32) -> (i32, i32) {
    %c0_i32 = arith.constant 0 : i32
    %c0_i32_0 = arith.constant 0 : i32
    return %arg0, %c0_i32 : i32, i32
  }
}

module attributes {stable_mosaic.version = 11 : i64} {
  func.func @_fused_linear_kernel(%arg0: i32, %arg1: i32, %arg2: memref<10x128xf32, #tpu.memory_space<vmem>>, %arg3: memref<1x128xf32, #tpu.memory_space<vmem>>, %arg4: memref<1x128xf32, #tpu.memory_space<vmem>>, %arg5: memref<128x128xbf16, #tpu.memory_space<vmem>>, %arg6: memref<10x128xf32, #tpu.memory_space<vmem>>) attributes {dimension_semantics = [#tpu.dimension_semantics<parallel>, #tpu.dimension_semantics<parallel>], iteration_bounds = array<i64: 1, 1>, scalar_prefetch = 0 : i64, scratch_operands = 0 : i64, tpu.core_type = #tpu.core_type<tc>, window_params = [{transform_indices = @transform_0, window_bounds = array<i64: 10, 128>}, {pipeline_mode = #tpu.pipeline_mode<synchronous>, transform_indices = @transform_1, window_bounds = array<i64: 1, 128>}, {pipeline_mode = #tpu.pipeline_mode<synchronous>, transform_indices = @transform_2, window_bounds = array<i64: 1, 128>}, {transform_indices = @transform_3, window_bounds = array<i64: 128, 128>}, {transform_indices = @transform_4, window_bounds = array<i64: 10, 128>}]} {
    %c0 = arith.constant 0 : index
    %c0_0 = arith.constant 0 : index
    %0 = vector.load %arg2[%c0, %c0_0] : memref<10x128xf32, #tpu.memory_space<vmem>>, vector<10x128xf32>
    %cst = arith.constant dense<0.000000e+00> : vector<10xf32>
    %1 = vector.multi_reduction <add>, %0, %cst [1] : vector<10x128xf32> to vector<10xf32>
    %2 = vector.shape_cast %1 : vector<10xf32> to vector<10x1xf32>
    %cst_1 = arith.constant 1.280000e+02 : f32
    %3 = vector.broadcast %cst_1 : f32 to vector<10x1xf32>
    %4 = arith.divf %2, %3 : vector<10x1xf32>
    %5 = vector.broadcast %4 : vector<10x1xf32> to vector<10x128xf32>
    %6 = arith.subf %0, %5 : vector<10x128xf32>
    %7 = arith.mulf %6, %6 : vector<10x128xf32>
    %cst_2 = arith.constant dense<0.000000e+00> : vector<10xf32>
    %8 = vector.multi_reduction <add>, %7, %cst_2 [1] : vector<10x128xf32> to vector<10xf32>
    %9 = vector.shape_cast %8 : vector<10xf32> to vector<10x1xf32>
    %cst_3 = arith.constant 1.280000e+02 : f32
    %10 = vector.broadcast %cst_3 : f32 to vector<10x1xf32>
    %11 = arith.divf %9, %10 : vector<10x1xf32>
    %cst_4 = arith.constant 9.99999974E-6 : f32
    %12 = vector.broadcast %cst_4 : f32 to vector<10x1xf32>
    %13 = arith.addf %11, %12 : vector<10x1xf32>
    %14 = math.rsqrt %13 : vector<10x1xf32>
    %15 = vector.broadcast %14 : vector<10x1xf32> to vector<10x128xf32>
    %16 = arith.mulf %6, %15 : vector<10x128xf32>
    %c0_5 = arith.constant 0 : index
    %c0_6 = arith.constant 0 : index
    %17 = vector.load %arg3[%c0_5, %c0_6] : memref<1x128xf32, #tpu.memory_space<vmem>>, vector<1x128xf32>
    %18 = vector.broadcast %17 : vector<1x128xf32> to vector<10x128xf32>
    %19 = arith.mulf %16, %18 : vector<10x128xf32>
    %c0_7 = arith.constant 0 : index
    %c0_8 = arith.constant 0 : index
    %20 = vector.load %arg4[%c0_7, %c0_8] : memref<1x128xf32, #tpu.memory_space<vmem>>, vector<1x128xf32>
    %21 = vector.broadcast %20 : vector<1x128xf32> to vector<10x128xf32>
    %22 = arith.addf %19, %21 : vector<10x128xf32>
    %23 = arith.truncf %22 : vector<10x128xf32> to vector<10x128xbf16>
    %c0_9 = arith.constant 0 : index
    %c0_10 = arith.constant 0 : index
    %24 = vector.load %arg5[%c0_9, %c0_10] : memref<128x128xbf16, #tpu.memory_space<vmem>>, vector<128x128xbf16>
    %cst_11 = arith.constant dense<0.000000e+00> : vector<10x128xf32>
    %25 = tpu.matmul %23, %24, %cst_11 {dimension_numbers = #tpu.dot_dimension_numbers<[1], [0], [0], [1], [0, 0, 1, 1], [], []>} : vector<10x128xbf16>, vector<128x128xbf16>, vector<10x128xf32> -> vector<10x128xf32>
    %c0_12 = arith.constant 0 : index
    %c0_13 = arith.constant 0 : index
    %26 = vector.load %arg6[%c0_12, %c0_13] : memref<10x128xf32, #tpu.memory_space<vmem>>, vector<10x128xf32>
    tpu.vector_store %arg6[%c0_12, %c0_13], %25 {strides = array<i32>} : memref<10x128xf32, #tpu.memory_space<vmem>>, vector<10x128xf32>,
    return
  }
  func.func @transform_0(%arg0: i32, %arg1: i32) -> (i32, i32) {
    %c0_i32 = arith.constant 0 : i32
    %c0_i32_0 = arith.constant 0 : i32
    return %arg1, %c0_i32 : i32, i32
  }
  func.func @transform_1(%arg0: i32, %arg1: i32) -> (i32, i32) {
    %c0_i32 = arith.constant 0 : i32
    %c0_i32_0 = arith.constant 0 : i32
    %c0_i32_1 = arith.constant 0 : i32
    return %c0_i32, %c0_i32_0 : i32, i32
  }
  func.func @transform_2(%arg0: i32, %arg1: i32) -> (i32, i32) {
    %c0_i32 = arith.constant 0 : i32
    %c0_i32_0 = arith.constant 0 : i32
    %c0_i32_1 = arith.constant 0 : i32
    return %c0_i32, %c0_i32_0 : i32, i32
  }
  func.func @transform_3(%arg0: i32, %arg1: i32) -> (i32, i32) {
    %c0_i32 = arith.constant 0 : i32
    %c0_i32_0 = arith.constant 0 : i32
    return %c0_i32, %arg0 : i32, i32
  }
  func.func @transform_4(%arg0: i32, %arg1: i32) -> (i32, i32) {
    %c0_i32 = arith.constant 0 : i32
    return %arg1, %arg0 : i32, i32
  }
}

module attributes {stable_mosaic.version = 11 : i64} {
  func.func @_fused_linear_kernel(%arg0: i32, %arg1: i32, %arg2: memref<10x128xf32, #tpu.memory_space<vmem>>, %arg3: memref<1x128xf32, #tpu.memory_space<vmem>>, %arg4: memref<1x128xf32, #tpu.memory_space<vmem>>, %arg5: memref<128x128xbf16, #tpu.memory_space<vmem>>, %arg6: memref<1x128xf32, #tpu.memory_space<vmem>>, %arg7: memref<10x128xbf16, #tpu.memory_space<vmem>>) attributes {dimension_semantics = [#tpu.dimension_semantics<parallel>, #tpu.dimension_semantics<parallel>], iteration_bounds = array<i64: 1, 1>, scalar_prefetch = 0 : i64, scratch_operands = 0 : i64, tpu.core_type = #tpu.core_type<tc>, window_params = [{transform_indices = @transform_0, window_bounds = array<i64: 10, 128>}, {pipeline_mode = #tpu.pipeline_mode<synchronous>, transform_indices = @transform_1, window_bounds = array<i64: 1, 128>}, {pipeline_mode = #tpu.pipeline_mode<synchronous>, transform_indices = @transform_2, window_bounds = array<i64: 1, 128>}, {transform_indices = @transform_3, window_bounds = array<i64: 128, 128>}, {transform_indices = @transform_4, window_bounds = array<i64: 1, 128>}, {transform_indices = @transform_5, window_bounds = array<i64: 10, 128>}]} {
    %c0 = arith.constant 0 : index
    %c0_0 = arith.constant 0 : index
    %0 = vector.load %arg2[%c0, %c0_0] : memref<10x128xf32, #tpu.memory_space<vmem>>, vector<10x128xf32>
    %cst = arith.constant dense<0.000000e+00> : vector<10xf32>
    %1 = vector.multi_reduction <add>, %0, %cst [1] : vector<10x128xf32> to vector<10xf32>
    %2 = vector.shape_cast %1 : vector<10xf32> to vector<10x1xf32>
    %cst_1 = arith.constant 1.280000e+02 : f32
    %3 = vector.broadcast %cst_1 : f32 to vector<10x1xf32>
    %4 = arith.divf %2, %3 : vector<10x1xf32>
    %5 = vector.broadcast %4 : vector<10x1xf32> to vector<10x128xf32>
    %6 = arith.subf %0, %5 : vector<10x128xf32>
    %7 = arith.mulf %6, %6 : vector<10x128xf32>
    %cst_2 = arith.constant dense<0.000000e+00> : vector<10xf32>
    %8 = vector.multi_reduction <add>, %7, %cst_2 [1] : vector<10x128xf32> to vector<10xf32>
    %9 = vector.shape_cast %8 : vector<10xf32> to vector<10x1xf32>
    %cst_3 = arith.constant 1.280000e+02 : f32
    %10 = vector.broadcast %cst_3 : f32 to vector<10x1xf32>
    %11 = arith.divf %9, %10 : vector<10x1xf32>
    %cst_4 = arith.constant 9.99999974E-6 : f32
    %12 = vector.broadcast %cst_4 : f32 to vector<10x1xf32>
    %13 = arith.addf %11, %12 : vector<10x1xf32>
    %14 = math.rsqrt %13 : vector<10x1xf32>
    %15 = vector.broadcast %14 : vector<10x1xf32> to vector<10x128xf32>
    %16 = arith.mulf %6, %15 : vector<10x128xf32>
    %c0_5 = arith.constant 0 : index
    %c0_6 = arith.constant 0 : index
    %17 = vector.load %arg3[%c0_5, %c0_6] : memref<1x128xf32, #tpu.memory_space<vmem>>, vector<1x128xf32>
    %18 = vector.broadcast %17 : vector<1x128xf32> to vector<10x128xf32>
    %19 = arith.mulf %16, %18 : vector<10x128xf32>
    %c0_7 = arith.constant 0 : index
    %c0_8 = arith.constant 0 : index
    %20 = vector.load %arg4[%c0_7, %c0_8] : memref<1x128xf32, #tpu.memory_space<vmem>>, vector<1x128xf32>
    %21 = vector.broadcast %20 : vector<1x128xf32> to vector<10x128xf32>
    %22 = arith.addf %19, %21 : vector<10x128xf32>
    %23 = arith.truncf %22 : vector<10x128xf32> to vector<10x128xbf16>
    %c0_9 = arith.constant 0 : index
    %c0_10 = arith.constant 0 : index
    %24 = vector.load %arg5[%c0_9, %c0_10] : memref<128x128xbf16, #tpu.memory_space<vmem>>, vector<128x128xbf16>
    %cst_11 = arith.constant dense<0.000000e+00> : vector<10x128xf32>
    %25 = tpu.matmul %23, %24, %cst_11 {dimension_numbers = #tpu.dot_dimension_numbers<[1], [0], [0], [1], [0, 0, 1, 1], [], []>} : vector<10x128xbf16>, vector<128x128xbf16>, vector<10x128xf32> -> vector<10x128xf32>
    %c0_12 = arith.constant 0 : index
    %c0_13 = arith.constant 0 : index
    %26 = vector.load %arg6[%c0_12, %c0_13] : memref<1x128xf32, #tpu.memory_space<vmem>>, vector<1x128xf32>
    %27 = vector.broadcast %26 : vector<1x128xf32> to vector<10x128xf32>
    %28 = arith.addf %25, %27 : vector<10x128xf32>
    %29 = arith.truncf %28 : vector<10x128xf32> to vector<10x128xbf16>
    %c0_14 = arith.constant 0 : index
    %c0_15 = arith.constant 0 : index
    %30 = vector.load %arg7[%c0_14, %c0_15] : memref<10x128xbf16, #tpu.memory_space<vmem>>, vector<10x128xbf16>
    tpu.vector_store %arg7[%c0_14, %c0_15], %29 {strides = array<i32>} : memref<10x128xbf16, #tpu.memory_space<vmem>>, vector<10x128xbf16>,
    return
  }
  func.func @transform_0(%arg0: i32, %arg1: i32) -> (i32, i32) {
    %c0_i32 = arith.constant 0 : i32
    %c0_i32_0 = arith.constant 0 : i32
    return %arg1, %c0_i32 : i32, i32
  }
  func.func @transform_1(%arg0: i32, %arg1: i32) -> (i32, i32) {
    %c0_i32 = arith.constant 0 : i32
    %c0_i32_0 = arith.constant 0 : i32
    %c0_i32_1 = arith.constant 0 : i32
    return %c0_i32, %c0_i32_0 : i32, i32
  }
  func.func @transform_2(%arg0: i32, %arg1: i32) -> (i32, i32) {
    %c0_i32 = arith.constant 0 : i32
    %c0_i32_0 = arith.constant 0 : i32
    %c0_i32_1 = arith.constant 0 : i32
    return %c0_i32, %c0_i32_0 : i32, i32
  }
  func.func @transform_3(%arg0: i32, %arg1: i32) -> (i32, i32) {
    %c0_i32 = arith.constant 0 : i32
    %c0_i32_0 = arith.constant 0 : i32
    return %c0_i32, %arg0 : i32, i32
  }
  func.func @transform_4(%arg0: i32, %arg1: i32) -> (i32, i32) {
    %c0_i32 = arith.constant 0 : i32
    %c0_i32_0 = arith.constant 0 : i32
    return %c0_i32, %arg0 : i32, i32
  }
  func.func @transform_5(%arg0: i32, %arg1: i32) -> (i32, i32) {
    %c0_i32 = arith.constant 0 : i32
    return %arg1, %arg0 : i32, i32
  }
}

</mosaic_0001>

<llo_original>
// kernel: maskclip_backbone_forward.10
$region0: #{maskclip_backbone_forward.10}
  #allocation0 [shape = 'u32[]', space=smem, size = 0x4, offset = 0x4, fixed_abs, tag = 'smem constant byte address 0x4 - core index']
  #allocation1 [shape = 'u32[144,128]{1,0:T(1,128)}', space=vmem, size = 0x12000, scoped, tag = 'internal scratch']
  %s0 = inlined_call_operand.vmem [shape: f32[8,768], index: 0, kind: input, shape index: {}]
  %s1 = inlined_call_operand.vmem [shape: bf16[768,128], index: 1, kind: input, shape index: {}]
  %s2 = inlined_call_operand.vmem [shape: f32[8,128], index: 2, kind: output, shape index: {}]
  %s3 = sld [smem:[#allocation0]]
  $region18: #{maskclip_backbone_forward.10} parent=0
    _
  %s5 = ssub.s32 1, %s3
  %s6 = scalar_select 0, %s5, %s3
  // Predicated region
  $region2: #{maskclip_backbone_forward.10} parent=0 // pred_check
    _
  $region3: #{maskclip_backbone_forward.10} parent=0 // pred_check_branch
    %8 = sbr.rel (0) target = $region5
  $region4: #{maskclip_backbone_forward.10} parent=0 // pred_region
    _
  $region5: #{maskclip_backbone_forward.10} parent=0 // pred_fallthru
    _
  // Predicated region
  $region6: #{maskclip_backbone_forward.10} parent=0 // pred_check
    _
  $region7: #{maskclip_backbone_forward.10} parent=0 // pred_check_branch
    %10 = sbr.rel (0) target = $region9
  $region8: #{maskclip_backbone_forward.10} parent=0 // pred_region
    _
  $region9: #{maskclip_backbone_forward.10} parent=0 // pred_fallthru
    _
  %v12 = vld [vmem:[%s0] sm:$0xff]
  %v13 = vld [vmem:[%s0 + $0x8] sm:$0xff]
  %v14 = vld [vmem:[%s0 + $0x10] sm:$0xff]
  %v15 = vld [vmem:[%s0 + $0x18] sm:$0xff]
  %v16 = vld [vmem:[%s0 + $0x20] sm:$0xff]
  %v17 = vld [vmem:[%s0 + $0x28] sm:$0xff]
  %v18 = vpack.c.bf16 %v12, %v12
  %v19 = vpack.c.bf16 %v13, %v13
  %v20 = vpack.c.bf16 %v14, %v14
  %v21 = vpack.c.bf16 %v15, %v15
  %v22 = vpack.c.bf16 %v16, %v16
  %v23 = vpack.c.bf16 %v17, %v17
  %v24 = vld [vmem:[%s1] sm:$0xf]
  %v25 = vld [vmem:[%s1 + $0x4] sm:$0xf]
  %v26 = vld [vmem:[%s1 + $0x8] sm:$0xf]
  %v27 = vld [vmem:[%s1 + $0xc] sm:$0xf]
  %v28 = vld [vmem:[%s1 + $0x10] sm:$0xf]
  %v29 = vld [vmem:[%s1 + $0x14] sm:$0xf]
  %v30 = vld [vmem:[%s1 + $0x18] sm:$0xf]
  %v31 = vld [vmem:[%s1 + $0x1c] sm:$0xf]
  %v32 = vld [vmem:[%s1 + $0x20] sm:$0xf]
  %v33 = vld [vmem:[%s1 + $0x24] sm:$0xf]
  %v34 = vld [vmem:[%s1 + $0x28] sm:$0xf]
  %v35 = vld [vmem:[%s1 + $0x2c] sm:$0xf]
  %v36 = vld [vmem:[%s1 + $0x30] sm:$0xf]
  %v37 = vld [vmem:[%s1 + $0x34] sm:$0xf]
  %v38 = vld [vmem:[%s1 + $0x38] sm:$0xf]
  %v39 = vld [vmem:[%s1 + $0x3c] sm:$0xf]
  %v40 = vld [vmem:[%s1 + $0x40] sm:$0xf]
  %v41 = vld [vmem:[%s1 + $0x44] sm:$0xf]
  %v42 = vld [vmem:[%s1 + $0x48] sm:$0xf]
  %v43 = vld [vmem:[%s1 + $0x4c] sm:$0xf]
  %v44 = vld [vmem:[%s1 + $0x50] sm:$0xf]
  %v45 = vld [vmem:[%s1 + $0x54] sm:$0xf]
  %v46 = vld [vmem:[%s1 + $0x58] sm:$0xf]
  %v47 = vld [vmem:[%s1 + $0x5c] sm:$0xf]
  %v48 = vld [vmem:[%s1 + $0x60] sm:$0xf]
  %v49 = vld [vmem:[%s1 + $0x64] sm:$0xf]
  %v50 = vld [vmem:[%s1 + $0x68] sm:$0xf]
  %v51 = vld [vmem:[%s1 + $0x6c] sm:$0xf]
  %v52 = vld [vmem:[%s1 + $0x70] sm:$0xf]
  %v53 = vld [vmem:[%s1 + $0x74] sm:$0xf]
  %v54 = vld [vmem:[%s1 + $0x78] sm:$0xf]
  %v55 = vld [vmem:[%s1 + $0x7c] sm:$0xf]
  %v56 = vld [vmem:[%s1 + $0x80] sm:$0xf]
  %v57 = vld [vmem:[%s1 + $0x84] sm:$0xf]
  %v58 = vld [vmem:[%s1 + $0x88] sm:$0xf]
  %v59 = vld [vmem:[%s1 + $0x8c] sm:$0xf]
  %v60 = vld [vmem:[%s1 + $0x90] sm:$0xf]
  %v61 = vld [vmem:[%s1 + $0x94] sm:$0xf]
  %v62 = vld [vmem:[%s1 + $0x98] sm:$0xf]
  %v63 = vld [vmem:[%s1 + $0x9c] sm:$0xf]
  %v64 = vld [vmem:[%s1 + $0xa0] sm:$0xf]
  %v65 = vld [vmem:[%s1 + $0xa4] sm:$0xf]
  %v66 = vld [vmem:[%s1 + $0xa8] sm:$0xf]
  %v67 = vld [vmem:[%s1 + $0xac] sm:$0xf]
  %v68 = vld [vmem:[%s1 + $0xb0] sm:$0xf]
  %v69 = vld [vmem:[%s1 + $0xb4] sm:$0xf]
  %v70 = vld [vmem:[%s1 + $0xb8] sm:$0xf]
  %v71 = vld [vmem:[%s1 + $0xbc] sm:$0xf]
  %v72 = vld [vmem:[%s1 + $0xc0] sm:$0xf]
  %v73 = vld [vmem:[%s1 + $0xc4] sm:$0xf]
  %v74 = vld [vmem:[%s1 + $0xc8] sm:$0xf]
  %v75 = vld [vmem:[%s1 + $0xcc] sm:$0xf]
  %v76 = vld [vmem:[%s1 + $0xd0] sm:$0xf]
  %v77 = vld [vmem:[%s1 + $0xd4] sm:$0xf]
  %v78 = vld [vmem:[%s1 + $0xd8] sm:$0xf]
  %v79 = vld [vmem:[%s1 + $0xdc] sm:$0xf]
  %v80 = vld [vmem:[%s1 + $0xe0] sm:$0xf]
  %v81 = vld [vmem:[%s1 + $0xe4] sm:$0xf]
  %v82 = vld [vmem:[%s1 + $0xe8] sm:$0xf]
  %v83 = vld [vmem:[%s1 + $0xec] sm:$0xf]
  %v84 = vld [vmem:[%s1 + $0xf0] sm:$0xf]
  %v85 = vld [vmem:[%s1 + $0xf4] sm:$0xf]
  %v86 = vld [vmem:[%s1 + $0xf8] sm:$0xf]
  %v87 = vld [vmem:[%s1 + $0xfc] sm:$0xf]
  %v88 = vld [vmem:[%s1 + $0x100] sm:$0xf]
  %v89 = vld [vmem:[%s1 + $0x104] sm:$0xf]
  %v90 = vld [vmem:[%s1 + $0x108] sm:$0xf]
  %v91 = vld [vmem:[%s1 + $0x10c] sm:$0xf]
  %v92 = vld [vmem:[%s1 + $0x110] sm:$0xf]
  %v93 = vld [vmem:[%s1 + $0x114] sm:$0xf]
  %v94 = vld [vmem:[%s1 + $0x118] sm:$0xf]
  %v95 = vld [vmem:[%s1 + $0x11c] sm:$0xf]
  %v96 = vld [vmem:[%s1 + $0x120] sm:$0xf]
  %v97 = vld [vmem:[%s1 + $0x124] sm:$0xf]
  %v98 = vld [vmem:[%s1 + $0x128] sm:$0xf]
  %v99 = vld [vmem:[%s1 + $0x12c] sm:$0xf]
  %v100 = vld [vmem:[%s1 + $0x130] sm:$0xf]
  %v101 = vld [vmem:[%s1 + $0x134] sm:$0xf]
  %v102 = vld [vmem:[%s1 + $0x138] sm:$0xf]
  %v103 = vld [vmem:[%s1 + $0x13c] sm:$0xf]
  %v104 = vld [vmem:[%s1 + $0x140] sm:$0xf]
  %v105 = vld [vmem:[%s1 + $0x144] sm:$0xf]
  %v106 = vld [vmem:[%s1 + $0x148] sm:$0xf]
  %v107 = vld [vmem:[%s1 + $0x14c] sm:$0xf]
  %v108 = vld [vmem:[%s1 + $0x150] sm:$0xf]
  %v109 = vld [vmem:[%s1 + $0x154] sm:$0xf]
  %v110 = vld [vmem:[%s1 + $0x158] sm:$0xf]
  %v111 = vld [vmem:[%s1 + $0x15c] sm:$0xf]
  %v112 = vld [vmem:[%s1 + $0x160] sm:$0xf]
  %v113 = vld [vmem:[%s1 + $0x164] sm:$0xf]
  %v114 = vld [vmem:[%s1 + $0x168] sm:$0xf]
  %v115 = vld [vmem:[%s1 + $0x16c] sm:$0xf]
  %v116 = vld [vmem:[%s1 + $0x170] sm:$0xf]
  %v117 = vld [vmem:[%s1 + $0x174] sm:$0xf]
  %v118 = vld [vmem:[%s1 + $0x178] sm:$0xf]
  %v119 = vld [vmem:[%s1 + $0x17c] sm:$0xf]
  %v216 = vunpack.c.l.b16 %v24
  %v217 = vunpack.c.l.b16 %v25
  %v218 = vunpack.c.l.b16 %v26
  %v219 = vunpack.c.l.b16 %v27
  %v220 = vunpack.c.l.b16 %v28
  %v221 = vunpack.c.l.b16 %v29
  %v222 = vunpack.c.l.b16 %v30
  %v223 = vunpack.c.l.b16 %v31
  %v224 = vunpack.c.l.b16 %v32
  %v225 = vunpack.c.l.b16 %v33
  %v226 = vunpack.c.l.b16 %v34
  %v227 = vunpack.c.l.b16 %v35
  %v228 = vunpack.c.l.b16 %v36
  %v229 = vunpack.c.l.b16 %v37
  %v230 = vunpack.c.l.b16 %v38
  %v231 = vunpack.c.l.b16 %v39
  %v232 = vunpack.c.l.b16 %v40
  %v233 = vunpack.c.l.b16 %v41
  %v234 = vunpack.c.l.b16 %v42
  %v235 = vunpack.c.l.b16 %v43
  %v236 = vunpack.c.l.b16 %v44
  %v237 = vunpack.c.l.b16 %v45
  %v238 = vunpack.c.l.b16 %v46
  %v239 = vunpack.c.l.b16 %v47
  %v240 = vunpack.c.l.b16 %v48
  %v241 = vunpack.c.l.b16 %v49
  %v242 = vunpack.c.l.b16 %v50
  %v243 = vunpack.c.l.b16 %v51
  %v244 = vunpack.c.l.b16 %v52
  %v245 = vunpack.c.l.b16 %v53
  %v246 = vunpack.c.l.b16 %v54
  %v247 = vunpack.c.l.b16 %v55
  %v248 = vunpack.c.l.b16 %v56
  %v249 = vunpack.c.l.b16 %v57
  %v250 = vunpack.c.l.b16 %v58
  %v251 = vunpack.c.l.b16 %v59
  %v252 = vunpack.c.l.b16 %v60
  %v253 = vunpack.c.l.b16 %v61
  %v254 = vunpack.c.l.b16 %v62
  %v255 = vunpack.c.l.b16 %v63
  %v256 = vunpack.c.l.b16 %v64
  %v257 = vunpack.c.l.b16 %v65
  %v258 = vunpack.c.l.b16 %v66
  %v259 = vunpack.c.l.b16 %v67
  %v260 = vunpack.c.l.b16 %v68
  %v261 = vunpack.c.l.b16 %v69
  %v262 = vunpack.c.l.b16 %v70
  %v263 = vunpack.c.l.b16 %v71
  %v264 = vunpack.c.l.b16 %v72
  %v265 = vunpack.c.l.b16 %v73
  %v266 = vunpack.c.l.b16 %v74
  %v267 = vunpack.c.l.b16 %v75
  %v268 = vunpack.c.l.b16 %v76
  %v269 = vunpack.c.l.b16 %v77
  %v270 = vunpack.c.l.b16 %v78
  %v271 = vunpack.c.l.b16 %v79
  %v272 = vunpack.c.l.b16 %v80
  %v273 = vunpack.c.l.b16 %v81
  %v274 = vunpack.c.l.b16 %v82
  %v275 = vunpack.c.l.b16 %v83
  %v276 = vunpack.c.l.b16 %v84
  %v277 = vunpack.c.l.b16 %v85
  %v278 = vunpack.c.l.b16 %v86
  %v279 = vunpack.c.l.b16 %v87
  %v280 = vunpack.c.l.b16 %v88
  %v281 = vunpack.c.l.b16 %v89
  %v282 = vunpack.c.l.b16 %v90
  %v283 = vunpack.c.l.b16 %v91
  %v284 = vunpack.c.l.b16 %v92
  %v285 = vunpack.c.l.b16 %v93
  %v286 = vunpack.c.l.b16 %v94
  %v287 = vunpack.c.l.b16 %v95
  %v288 = vunpack.c.l.b16 %v96
  %v289 = vunpack.c.l.b16 %v97
  %v290 = vunpack.c.l.b16 %v98
  %v291 = vunpack.c.l.b16 %v99
  %v292 = vunpack.c.l.b16 %v100
  %v293 = vunpack.c.l.b16 %v101
  %v294 = vunpack.c.l.b16 %v102
  %v295 = vunpack.c.l.b16 %v103
  %v296 = vunpack.c.l.b16 %v104
  %v297 = vunpack.c.l.b16 %v105
  %v298 = vunpack.c.l.b16 %v106
  %v299 = vunpack.c.l.b16 %v107
  %v300 = vunpack.c.l.b16 %v108
  %v301 = vunpack.c.l.b16 %v109
  %v302 = vunpack.c.l.b16 %v110
  %v303 = vunpack.c.l.b16 %v111
  %v304 = vunpack.c.l.b16 %v112
  %v305 = vunpack.c.l.b16 %v113
  %v306 = vunpack.c.l.b16 %v114
  %v307 = vunpack.c.l.b16 %v115
  %v308 = vunpack.c.l.b16 %v116
  %v309 = vunpack.c.l.b16 %v117
  %v310 = vunpack.c.l.b16 %v118
  %v311 = vunpack.c.l.b16 %v119
  %v312 = vpack.c.b16 %v217, %v216
  %v313 = vpack.c.b16 %v219, %v218
  %v314 = vpack.c.b16 %v221, %v220
  %v315 = vpack.c.b16 %v223, %v222
  %v316 = vpack.c.b16 %v225, %v224
  %v317 = vpack.c.b16 %v227, %v226
  %v318 = vpack.c.b16 %v229, %v228
  %v319 = vpack.c.b16 %v231, %v230
  %v320 = vpack.c.b16 %v233, %v232
  %v321 = vpack.c.b16 %v235, %v234
  %v322 = vpack.c.b16 %v237, %v236
  %v323 = vpack.c.b16 %v239, %v238
  %v324 = vpack.c.b16 %v241, %v240
  %v325 = vpack.c.b16 %v243, %v242
  %v326 = vpack.c.b16 %v245, %v244
  %v327 = vpack.c.b16 %v247, %v246
  %v328 = vpack.c.b16 %v249, %v248
  %v329 = vpack.c.b16 %v251, %v250
  %v330 = vpack.c.b16 %v253, %v252
  %v331 = vpack.c.b16 %v255, %v254
  %v332 = vpack.c.b16 %v257, %v256
  %v333 = vpack.c.b16 %v259, %v258
  %v334 = vpack.c.b16 %v261, %v260
  %v335 = vpack.c.b16 %v263, %v262
  %v336 = vpack.c.b16 %v265, %v264
  %v337 = vpack.c.b16 %v267, %v266
  %v338 = vpack.c.b16 %v269, %v268
  %v339 = vpack.c.b16 %v271, %v270
  %v340 = vpack.c.b16 %v273, %v272
  %v341 = vpack.c.b16 %v275, %v274
  %v342 = vpack.c.b16 %v277, %v276
  %v343 = vpack.c.b16 %v279, %v278
  %v344 = vpack.c.b16 %v281, %v280
  %v345 = vpack.c.b16 %v283, %v282
  %v346 = vpack.c.b16 %v285, %v284
  %v347 = vpack.c.b16 %v287, %v286
  %v348 = vpack.c.b16 %v289, %v288
  %v349 = vpack.c.b16 %v291, %v290
  %v350 = vpack.c.b16 %v293, %v292
  %v351 = vpack.c.b16 %v295, %v294
  %v352 = vpack.c.b16 %v297, %v296
  %v353 = vpack.c.b16 %v299, %v298
  %v354 = vpack.c.b16 %v301, %v300
  %v355 = vpack.c.b16 %v303, %v302
  %v356 = vpack.c.b16 %v305, %v304
  %v357 = vpack.c.b16 %v307, %v306
  %v358 = vpack.c.b16 %v309, %v308
  %v359 = vpack.c.b16 %v311, %v310
  %408 = vmatprep.subr.bf16.mxu0 0
  %409 = vmatpush1.bf16.msra.mxu0 %v312
  %410 = vmatprep.subr.bf16.mxu0 0
  %411 = vmatpush1.bf16.msra.mxu0 %v313
  %412 = vmatprep.subr.bf16.mxu0 0
  %413 = vmatpush1.bf16.msra.mxu0 %v314
  %414 = vmatprep.subr.bf16.mxu0 0
  %415 = vmatpush1.bf16.msra.mxu0 %v315
  %416 = vmatprep.subr.bf16.mxu0 0
  %417 = vmatpush1.bf16.msra.mxu0 %v316
  %418 = vmatprep.subr.bf16.mxu0 0
  %419 = vmatpush1.bf16.msra.mxu0 %v317
  %420 = vmatprep.subr.bf16.mxu0 0
  %421 = vmatpush1.bf16.msra.mxu0 %v318
  %422 = vmatprep.subr.bf16.mxu0 0
  %423 = vmatpush1.bf16.msra.mxu0 %v319
  %424 = vmatprep.subr.bf16.mxu0 0
  %425 = vmatpush1.bf16.msra.mxu0 %v320
  %426 = vmatprep.subr.bf16.mxu0 0
  %427 = vmatpush1.bf16.msra.mxu0 %v321
  %428 = vmatprep.subr.bf16.mxu0 0
  %429 = vmatpush1.bf16.msra.mxu0 %v322
  %430 = vmatprep.subr.bf16.mxu0 0
  %431 = vmatpush1.bf16.msra.mxu0 %v323
  %432 = vmatprep.subr.bf16.mxu0 0
  %433 = vmatpush1.bf16.msra.mxu0 %v324
  %434 = vmatprep.subr.bf16.mxu0 0
  %435 = vmatpush1.bf16.msra.mxu0 %v325
  %436 = vmatprep.subr.bf16.mxu0 0
  %437 = vmatpush1.bf16.msra.mxu0 %v326
  %438 = vmatprep.subr.bf16.mxu0 0
  %439 = vmatpush1.bf16.msra.mxu0 %v327
  %440 = vmatprep.mubr.bf16.mxu0 %v19
  %441 = vmatmul.mubr.bf16.gmra.mrb[0].mxu0 %v18
  %v442 = vpop.f32.mrb[0].mxu0
  %v443 = vadd.f32 0.0, %v442
  %v444 = vpop.f32.mrb[0].mxu0
  %v445 = vpop.f32.mrb[0].mxu0
  %v446 = vpop.f32.mrb[0].mxu0
  %447 = vdwg.mxu0
  %448 = vmatprep.subr.bf16.mxu0 0
  %449 = vmatpush1.bf16.msra.mxu0 %v328
  %450 = vmatprep.subr.bf16.mxu0 0
  %451 = vmatpush1.bf16.msra.mxu0 %v329
  %452 = vmatprep.subr.bf16.mxu0 0
  %453 = vmatpush1.bf16.msra.mxu0 %v330
  %454 = vmatprep.subr.bf16.mxu0 0
  %455 = vmatpush1.bf16.msra.mxu0 %v331
  %456 = vmatprep.subr.bf16.mxu0 0
  %457 = vmatpush1.bf16.msra.mxu0 %v332
  %458 = vmatprep.subr.bf16.mxu0 0
  %459 = vmatpush1.bf16.msra.mxu0 %v333
  %460 = vmatprep.subr.bf16.mxu0 0
  %461 = vmatpush1.bf16.msra.mxu0 %v334
  %462 = vmatprep.subr.bf16.mxu0 0
  %463 = vmatpush1.bf16.msra.mxu0 %v335
  %464 = vmatprep.subr.bf16.mxu0 0
  %465 = vmatpush1.bf16.msra.mxu0 %v336
  %466 = vmatprep.subr.bf16.mxu0 0
  %467 = vmatpush1.bf16.msra.mxu0 %v337
  %468 = vmatprep.subr.bf16.mxu0 0
  %469 = vmatpush1.bf16.msra.mxu0 %v338
  %470 = vmatprep.subr.bf16.mxu0 0
  %471 = vmatpush1.bf16.msra.mxu0 %v339
  %472 = vmatprep.subr.bf16.mxu0 0
  %473 = vmatpush1.bf16.msra.mxu0 %v340
  %474 = vmatprep.subr.bf16.mxu0 0
  %475 = vmatpush1.bf16.msra.mxu0 %v341
  %476 = vmatprep.subr.bf16.mxu0 0
  %477 = vmatpush1.bf16.msra.mxu0 %v342
  %478 = vmatprep.subr.bf16.mxu0 0
  %479 = vmatpush1.bf16.msra.mxu0 %v343
  %480 = vmatprep.mubr.bf16.mxu0 %v21
  %481 = vmatmul.mubr.bf16.gmra.mrb[0].mxu0 %v20
  %v482 = vpop.f32.mrb[0].mxu0
  %v483 = vadd.f32 %v443, %v482
  %v484 = vpop.f32.mrb[0].mxu0
  %v485 = vpop.f32.mrb[0].mxu0
  %v486 = vpop.f32.mrb[0].mxu0
  %487 = vdwg.mxu0
  %488 = vmatprep.subr.bf16.mxu0 0
  %489 = vmatpush1.bf16.msra.mxu0 %v344
  %490 = vmatprep.subr.bf16.mxu0 0
  %491 = vmatpush1.bf16.msra.mxu0 %v345
  %492 = vmatprep.subr.bf16.mxu0 0
  %493 = vmatpush1.bf16.msra.mxu0 %v346
  %494 = vmatprep.subr.bf16.mxu0 0
  %495 = vmatpush1.bf16.msra.mxu0 %v347
  %496 = vmatprep.subr.bf16.mxu0 0
  %497 = vmatpush1.bf16.msra.mxu0 %v348
  %498 = vmatprep.subr.bf16.mxu0 0
  %499 = vmatpush1.bf16.msra.mxu0 %v349
  %500 = vmatprep.subr.bf16.mxu0 0
  %501 = vmatpush1.bf16.msra.mxu0 %v350
  %502 = vmatprep.subr.bf16.mxu0 0
  %503 = vmatpush1.bf16.msra.mxu0 %v351
  %504 = vmatprep.subr.bf16.mxu0 0
  %505 = vmatpush1.bf16.msra.mxu0 %v352
  %506 = vmatprep.subr.bf16.mxu0 0
  %507 = vmatpush1.bf16.msra.mxu0 %v353
  %508 = vmatprep.subr.bf16.mxu0 0
  %509 = vmatpush1.bf16.msra.mxu0 %v354
  %510 = vmatprep.subr.bf16.mxu0 0
  %511 = vmatpush1.bf16.msra.mxu0 %v355
  %512 = vmatprep.subr.bf16.mxu0 0
  %513 = vmatpush1.bf16.msra.mxu0 %v356
  %514 = vmatprep.subr.bf16.mxu0 0
  %515 = vmatpush1.bf16.msra.mxu0 %v357
  %516 = vmatprep.subr.bf16.mxu0 0
  %517 = vmatpush1.bf16.msra.mxu0 %v358
  %518 = vmatprep.subr.bf16.mxu0 0
  %519 = vmatpush1.bf16.msra.mxu0 %v359
  %520 = vmatprep.mubr.bf16.mxu0 %v23
  %521 = vmatmul.mubr.bf16.gmra.mrb[0].mxu0 %v22
  %v522 = vpop.f32.mrb[0].mxu0
  %v523 = vadd.f32 %v483, %v522
  %v524 = vpop.f32.mrb[0].mxu0
  %v525 = vpop.f32.mrb[0].mxu0
  %v526 = vpop.f32.mrb[0].mxu0
  %527 = vdwg.mxu0
  %528 = vst [vmem:[%s2] sm:$0xff] %v523
  // Predicated region
  $region10: #{maskclip_backbone_forward.10} parent=0 // pred_check
    _
  $region11: #{maskclip_backbone_forward.10} parent=0 // pred_check_branch
    %530 = sbr.rel (0) target = $region13
  $region12: #{maskclip_backbone_forward.10} parent=0 // pred_region
    _
  $region13: #{maskclip_backbone_forward.10} parent=0 // pred_fallthru
    _
  // Predicated region
  $region14: #{maskclip_backbone_forward.10} parent=0 // pred_check
    _
  $region15: #{maskclip_backbone_forward.10} parent=0 // pred_check_branch
    %532 = sbr.rel (0) target = $region17
  $region16: #{maskclip_backbone_forward.10} parent=0 // pred_region
    _
  $region17: #{maskclip_backbone_forward.10} parent=0 // pred_fallthru
    _

// kernel: maskclip_backbone_forward.11
$region0: #{maskclip_backbone_forward.11}
  #allocation0 [shape = 'u32[]', space=smem, size = 0x4, offset = 0x4, fixed_abs, tag = 'smem constant byte address 0x4 - core index']
  #allocation1 [shape = 'u32[144,128]{1,0:T(1,128)}', space=vmem, size = 0x12000, scoped, tag = 'internal scratch']
  %s0 = inlined_call_operand.vmem [shape: f32[2,5,128], index: 0, kind: input, shape index: {}]
  %s1 = inlined_call_operand.vmem [shape: f32[5,128], index: 1, kind: input, shape index: {}]
  %s2 = inlined_call_operand.vmem [shape: f32[1,128], index: 2, kind: input, shape index: {}]
  %s3 = inlined_call_operand.vmem [shape: f32[1,128], index: 3, kind: input, shape index: {}]
  %s4 = inlined_call_operand.vmem [shape: f32[2,5,128], index: 4, kind: output, shape index: {}]
  %s5 = sld [smem:[#allocation0]]
  $region49: #{maskclip_backbone_forward.11} parent=0
    _
  %s7 = ssub.s32 1, %s5
  %s8 = scalar_select 0, %s7, %s5
  loop: start=0, step=1, limit=4
  $region2: #{maskclip_backbone_forward.11} parent=0 // loop_pre_header
    _
  $region3: #{maskclip_backbone_forward.11} parent=0 // loop_header
    %s10 = sphi 0, %s14
    %p11 = scmp.ge.s32.totalorder %s10, 4
    %s20 = sphi 0, %s22
    %s23 = sphi 0, %s20
    %s24 = sphi 0, %s23
    %s40 = sphi 0, %s24
    %s44 = sphi 0, %s44
    %s46 = sphi 0, %s44
    %s47 = sphi 0, %s46
    %s61 = sphi 0, %s47
    %s65 = sphi 0, %s65
    %s67 = sphi 0, %s65
    %s68 = sphi 0, %s67
    %s82 = sphi 0, %s68
    %s86 = sphi 0, %s86
    %s88 = sphi 0, %s86
    %s89 = sphi 0, %s88
    %s103 = sphi 0, %s89
    %s109 = sphi 0, %s111
    %s112 = sphi 0, %s109
    %s113 = sphi 0, %s112
    %s129 = sphi 0, %s113
  $region4: #{maskclip_backbone_forward.11} parent=0 // loop_header_branch
    %13 = sbr.rel (%p11) target = $region8
  $region5: #{maskclip_backbone_forward.11} parent=0 // loop_body
    %s15 = ssub.s32 %s10, 1
    %s16 = ssub.s32 %s10, 2
    %s17 = sadd.s32 %s10, 1
    %s18 = ssub.s32 %s10, %s17
    %p19 = scmp.eq.s32.totalorder %s18, 0
    %s21 = sadd.s32 %s20, 1
    %s22 = scalar_select %p19, %s20, %s21
    %p25 = pneg %p19
    %p26 = scmp.eq.s32.totalorder %s10, 1
    %p27 = por %p25, %p26
    %p28 = scmp.ne.s32.totalorder %s20, %s23
    %p29 = scmp.eq.s32.totalorder %s10, 0
    %p30 = por %p28, %p29
    %p31 = scmp.ne.s32.totalorder %s20, %s23
    %p32 = scmp.eq.s32.totalorder %s15, 1
    %p33 = por %p31, %p32
    %p34 = scmp.ne.s32.totalorder %s23, %s24
    %p35 = scmp.eq.s32.totalorder %s15, 0
    %p36 = por %p34, %p35
    %p37 = scmp.ne.s32.totalorder %s23, %s24
    %p38 = scmp.eq.s32.totalorder %s16, 1
    %p39 = por %p37, %p38
    %p41 = scmp.ne.s32.totalorder %s24, %s40
    %p42 = scmp.eq.s32.totalorder %s16, 0
    %p43 = por %p41, %p42
    %s45 = sadd.s32 %s44, 1
    %p48 = scmp.eq.s32.totalorder %s10, 1
    %p49 = scmp.ne.s32.totalorder %s44, %s46
    %p50 = scmp.eq.s32.totalorder %s10, 0
    %p51 = por %p49, %p50
    %p52 = scmp.ne.s32.totalorder %s44, %s46
    %p53 = scmp.eq.s32.totalorder %s15, 1
    %p54 = por %p52, %p53
    %p55 = scmp.ne.s32.totalorder %s46, %s47
    %p56 = scmp.eq.s32.totalorder %s15, 0
    %p57 = por %p55, %p56
    %p58 = scmp.ne.s32.totalorder %s46, %s47
    %p59 = scmp.eq.s32.totalorder %s16, 1
    %p60 = por %p58, %p59
    %p62 = scmp.ne.s32.totalorder %s47, %s61
    %p63 = scmp.eq.s32.totalorder %s16, 0
    %p64 = por %p62, %p63
    %s66 = sadd.s32 %s65, 1
    %p69 = scmp.eq.s32.totalorder %s10, 1
    %p70 = scmp.ne.s32.totalorder %s65, %s67
    %p71 = scmp.eq.s32.totalorder %s10, 0
    %p72 = por %p70, %p71
    %p73 = scmp.ne.s32.totalorder %s65, %s67
    %p74 = scmp.eq.s32.totalorder %s15, 1
    %p75 = por %p73, %p74
    %p76 = scmp.ne.s32.totalorder %s67, %s68
    %p77 = scmp.eq.s32.totalorder %s15, 0
    %p78 = por %p76, %p77
    %p79 = scmp.ne.s32.totalorder %s67, %s68
    %p80 = scmp.eq.s32.totalorder %s16, 1
    %p81 = por %p79, %p80
    %p83 = scmp.ne.s32.totalorder %s68, %s82
    %p84 = scmp.eq.s32.totalorder %s16, 0
    %p85 = por %p83, %p84
    %s87 = sadd.s32 %s86, 1
    %p90 = scmp.eq.s32.totalorder %s10, 1
    %p91 = scmp.ne.s32.totalorder %s86, %s88
    %p92 = scmp.eq.s32.totalorder %s10, 0
    %p93 = por %p91, %p92
    %p94 = scmp.ne.s32.totalorder %s86, %s88
    %p95 = scmp.eq.s32.totalorder %s15, 1
    %p96 = por %p94, %p95
    %p97 = scmp.ne.s32.totalorder %s88, %s89
    %p98 = scmp.eq.s32.totalorder %s15, 0
    %p99 = por %p97, %p98
    %p100 = scmp.ne.s32.totalorder %s88, %s89
    %p101 = scmp.eq.s32.totalorder %s16, 1
    %p102 = por %p100, %p101
    %p104 = scmp.ne.s32.totalorder %s89, %s103
    %p105 = scmp.eq.s32.totalorder %s16, 0
    %p106 = por %p104, %p105
    %s107 = ssub.s32 %s10, %s17
    %p108 = scmp.eq.s32.totalorder %s107, 0
    %s110 = sadd.s32 %s109, 1
    %s111 = scalar_select %p108, %s109, %s110
    %p114 = pneg %p108
    %p115 = scmp.eq.s32.totalorder %s10, 1
    %p116 = por %p114, %p115
    %p117 = scmp.ne.s32.totalorder %s109, %s112
    %p118 = scmp.eq.s32.totalorder %s10, 0
    %p119 = por %p117, %p118
    %p120 = scmp.ne.s32.totalorder %s109, %s112
    %p121 = scmp.eq.s32.totalorder %s15, 1
    %p122 = por %p120, %p121
    %p123 = scmp.ne.s32.totalorder %s112, %s113
    %p124 = scmp.eq.s32.totalorder %s15, 0
    %p125 = por %p123, %p124
    %p126 = scmp.ne.s32.totalorder %s112, %s113
    %p127 = scmp.eq.s32.totalorder %s16, 1
    %p128 = por %p126, %p127
    %p130 = scmp.ne.s32.totalorder %s113, %s129
    %p131 = scmp.eq.s32.totalorder %s16, 0
    %p132 = por %p130, %p131
    %p133 = scmp.le.s32.totalorder 1, %s10
    %p134 = scmp.lt.s32.totalorder %s10, 3
    %p135 = pnand %p133, %p134
    %p136 = pneg %p135
    // Predicated region
    $region9: #{maskclip_backbone_forward.11} parent=5 // pred_check
      _
    $region10: #{maskclip_backbone_forward.11} parent=5 // pred_check_branch
      %138 = sbr.rel (%p135) target = $region12
    $region11: #{maskclip_backbone_forward.11} parent=5 // pred_region
      %s139 = ssub.s32 %s10, 1
      // Predicated region
      $region13: #{maskclip_backbone_forward.11} parent=11 // pred_check
        %p140 = pneg %p57
      $region14: #{maskclip_backbone_forward.11} parent=11 // pred_check_branch
        %142 = sbr.rel (%p140) target = $region16
      $region15: #{maskclip_backbone_forward.11} parent=11 // pred_region
        _
      $region16: #{maskclip_backbone_forward.11} parent=11 // pred_fallthru
        _
      // Predicated region
      $region17: #{maskclip_backbone_forward.11} parent=11 // pred_check
        %p143 = pneg %p78
      $region18: #{maskclip_backbone_forward.11} parent=11 // pred_check_branch
        %145 = sbr.rel (%p143) target = $region20
      $region19: #{maskclip_backbone_forward.11} parent=11 // pred_region
        _
      $region20: #{maskclip_backbone_forward.11} parent=11 // pred_fallthru
        _
      // Predicated region
      $region21: #{maskclip_backbone_forward.11} parent=11 // pred_check
        %p146 = pneg %p99
      $region22: #{maskclip_backbone_forward.11} parent=11 // pred_check_branch
        %148 = sbr.rel (%p146) target = $region24
      $region23: #{maskclip_backbone_forward.11} parent=11 // pred_region
        _
      $region24: #{maskclip_backbone_forward.11} parent=11 // pred_fallthru
        _
    $region12: #{maskclip_backbone_forward.11} parent=5 // pred_fallthru
      _
    %p149 = scmp.lt.s32.totalorder %s10, 2
    // Predicated region
    $region25: #{maskclip_backbone_forward.11} parent=5 // pred_check
      %p150 = pneg %p149
    $region26: #{maskclip_backbone_forward.11} parent=5 // pred_check_branch
      %152 = sbr.rel (%p150) target = $region28
    $region27: #{maskclip_backbone_forward.11} parent=5 // pred_region
      // Predicated region
      $region29: #{maskclip_backbone_forward.11} parent=27 // pred_check
        %p153 = pneg %p30
      $region30: #{maskclip_backbone_forward.11} parent=27 // pred_check_branch
        %155 = sbr.rel (%p153) target = $region32
      $region31: #{maskclip_backbone_forward.11} parent=27 // pred_region
        %p156 = scmp.lt.s32.totalorder %s10, 1
        %s157 = scalar_select %p156, %s10, 1
        %s158 = smul.addr %s157, 8
        %s159 = scalar_lea.vmem %s0, %s158
      $region32: #{maskclip_backbone_forward.11} parent=27 // pred_fallthru
        _
    $region28: #{maskclip_backbone_forward.11} parent=5 // pred_fallthru
      _
    %p160 = scmp.le.s32.totalorder 1, %s10
    %p161 = scmp.lt.s32.totalorder %s10, 3
    %p162 = pnand %p160, %p161
    %p163 = pneg %p162
    // Predicated region
    $region33: #{maskclip_backbone_forward.11} parent=5 // pred_check
      _
    $region34: #{maskclip_backbone_forward.11} parent=5 // pred_check_branch
      %165 = sbr.rel (%p162) target = $region36
    $region35: #{maskclip_backbone_forward.11} parent=5 // pred_region
      %s166 = ssub.s32 %s10, 1
      %p167 = scmp.lt.s32.totalorder %s15, 1
      %s168 = scalar_select %p167, %s15, 1
      %s169 = smul.addr %s168, 8
      %s170 = scalar_lea.vmem %s0, %s169
      %p171 = pneg %p36
      %p172 = pneg %p33
      %p173 = pneg %p57
      %p174 = pneg %p54
      %p175 = pneg %p78
      %p176 = pneg %p75
      %p177 = pneg %p99
      %p178 = pneg %p96
      %p179 = pneg %p125
      %p180 = pneg %p122
      %p181 = scmp.lt.s32.totalorder %s15, 1
      %s182 = scalar_select %p181, %s15, 1
      %s183 = smul.addr %s182, 8
      %s184 = scalar_lea.vmem %s4, %s183
      %p185 = scmp.lt.s32.totalorder %s15, 1
      %s186 = scalar_select %p185, %s15, 1
      %s187 = smul.addr %s186, 8
      %s188 = scalar_lea.vmem %s0, %s187
      %p189 = scmp.lt.s32.totalorder %s15, 1
      %s190 = scalar_select %p189, %s15, 1
      %s191 = smul.addr %s190, 8
      %s192 = scalar_lea.vmem %s4, %s191
      %v193 = vld [vmem:[%s188] sm:$0x1f]
      %v194 = vld [vmem:[%s1] sm:$0x1f]
      %v195 = vadd.f32 %v193, %v194
      %vm196 = vcmask 1044480
      %v197 = vsel %vm196, %v195, 0.0
      %198 = vadd.xlane.f32.xlu0 %v197
      %v199 = vpop.xlane.xlu0 %198
      %v200 = vrcp.pop 128.0
      %v201 = vmul.f32 %v199, %v200
      %v202 = vsub.f32 %v195, %v201
      %v203 = vmul.f32 %v202, %v202
      %v204 = vsel %vm196, %v203, 0.0
      %205 = vadd.xlane.f32.xlu0 %v204
      %v206 = vpop.xlane.xlu0 %205
      %v207 = vmul.f32 %v206, %v200
      %v208 = vadd.f32 %v207, 1e-05
      %v209 = vrsqrt.pop %v208
      %v210 = vmul.f32 %v202, %v209
      %v211 = vld [vmem:[%s2] sm:$0x1]
      %v213 = vlaneseq
      %v214 = vshrl.u32 %v213, 7
      %v215 = vsub.s32 0, %v214
      %v216 = vrot.slane %v211, %v215
      %v218 = vmul.f32 %v210, %v216
      %v219 = vld [vmem:[%s3] sm:$0x1]
      %v221 = vlaneseq
      %v222 = vshrl.u32 %v221, 7
      %v223 = vsub.s32 0, %v222
      %v224 = vrot.slane %v219, %v223
      %v226 = vadd.f32 %v218, %v224
      %227 = vst [vmem:[%s192] sm:$0x1f] %v226
      %p228 = scmp.lt.s32.totalorder %s15, 1
      %s229 = scalar_select %p228, %s15, 1
      %s230 = smul.addr %s229, 8
      %s231 = scalar_lea.vmem %s4, %s230
      // Predicated region
      $region37: #{maskclip_backbone_forward.11} parent=35 // pred_check
        %p232 = pneg %p122
      $region38: #{maskclip_backbone_forward.11} parent=35 // pred_check_branch
        %234 = sbr.rel (%p232) target = $region40
      $region39: #{maskclip_backbone_forward.11} parent=35 // pred_region
        _
      $region40: #{maskclip_backbone_forward.11} parent=35 // pred_fallthru
        _
    $region36: #{maskclip_backbone_forward.11} parent=5 // pred_fallthru
      _
    %p235 = scmp.le.s32.totalorder 2, %s10
    // Predicated region
    $region41: #{maskclip_backbone_forward.11} parent=5 // pred_check
      %p236 = pneg %p235
    $region42: #{maskclip_backbone_forward.11} parent=5 // pred_check_branch
      %238 = sbr.rel (%p236) target = $region44
    $region43: #{maskclip_backbone_forward.11} parent=5 // pred_region
      %s239 = ssub.s32 %s10, 2
      // Predicated region
      $region45: #{maskclip_backbone_forward.11} parent=43 // pred_check
        %p240 = pneg %p128
      $region46: #{maskclip_backbone_forward.11} parent=43 // pred_check_branch
        %242 = sbr.rel (%p240) target = $region48
      $region47: #{maskclip_backbone_forward.11} parent=43 // pred_region
        %p243 = scmp.lt.s32.totalorder %s16, 1
        %s244 = scalar_select %p243, %s16, 1
        %s245 = smul.addr %s244, 8
        %s246 = scalar_lea.vmem %s4, %s245
      $region48: #{maskclip_backbone_forward.11} parent=43 // pred_fallthru
        _
    $region44: #{maskclip_backbone_forward.11} parent=5 // pred_fallthru
      _
  $region6: #{maskclip_backbone_forward.11} parent=0 // loop_footer
    %s14 = sadd.s32 1, %s10
  $region7: #{maskclip_backbone_forward.11} parent=0 // loop_footer_branch
    %9 = sbr.rel target = $region3
  $region8: #{maskclip_backbone_forward.11} parent=0 // loop_exit
    _

// kernel: maskclip_backbone_forward.13
$region0: #{maskclip_backbone_forward.13}
  #allocation0 [shape = 'u32[]', space=smem, size = 0x4, offset = 0x4, fixed_abs, tag = 'smem constant byte address 0x4 - core index']
  #allocation1 [shape = 'u32[144,128]{1,0:T(1,128)}', space=vmem, size = 0x12000, scoped, tag = 'internal scratch']
  %s0 = inlined_call_operand.vmem [shape: bf16[2,5,384], index: 0, kind: input, shape index: {}, may-alias: {0,1}]
  %s1 = inlined_call_operand.vmem [shape: bf16[2,5,384], index: 1, kind: input, shape index: {}, may-alias: {0,1}]
  %s2 = inlined_call_operand.vmem [shape: bf16[2,5,128], index: 2, kind: output, shape index: {}]
  %s3 = sld [smem:[#allocation0]]
  $region41: #{maskclip_backbone_forward.13} parent=0
    _
  %s5 = ssub.s32 1, %s3
  %s6 = scalar_select 0, %s5, %s3
  loop: start=0, step=1, limit=4
  $region2: #{maskclip_backbone_forward.13} parent=0 // loop_pre_header
    _
  $region3: #{maskclip_backbone_forward.13} parent=0 // loop_header
    %s8 = sphi 0, %s12
    %p9 = scmp.ge.s32.totalorder %s8, 4
    %s15 = sphi 0, %s34
    %s16 = sphi 0, %s30
    %s17 = sphi 0, %s26
    %s18 = sphi 0, %s15
    %s19 = sphi 0, %s16
    %s20 = sphi 0, %s17
    %s21 = sphi 0, %s18
    %s22 = sphi 0, %s19
    %s23 = sphi 0, %s20
    %s41 = sphi 0, %s43
    %s44 = sphi 0, %s41
    %s45 = sphi 0, %s44
    %s61 = sphi 0, %s45
    %s69 = sphi 0, %s71
    %s72 = sphi 0, %s69
    %s73 = sphi 0, %s72
    %s89 = sphi 0, %s73
    %s99 = sphi 0, %s101
    %s102 = sphi 0, %s99
    %s103 = sphi 0, %s102
    %s119 = sphi 0, %s103
  $region4: #{maskclip_backbone_forward.13} parent=0 // loop_header_branch
    %11 = sbr.rel (%p9) target = $region8
  $region5: #{maskclip_backbone_forward.13} parent=0 // loop_body
    %s13 = ssub.s32 %s8, 1
    %s14 = ssub.s32 %s8, 2
    %s24 = sadd.s32 1, %s17
    %p25 = scmp.ge.s32.totalorder %s24, 1
    %s26 = scalar_select %p25, 0, %s24
    %s27 = sadd.s32 1, %s16
    %s28 = scalar_select %p25, %s27, %s16
    %p29 = scmp.ge.s32.totalorder %s28, 1
    %s30 = scalar_select %p29, 0, %s28
    %s31 = sadd.s32 1, %s15
    %s32 = scalar_select %p29, %s31, %s15
    %p33 = scmp.ge.s32.totalorder %s32, 2
    %s34 = scalar_select %p33, 0, %s32
    %s35 = ssub.s32 %s15, %s34
    %s36 = ssub.s32 %s17, %s26
    %s37 = sor.u32 %s35, %s36
    %s38 = ssub.s32 %s16, %s30
    %s39 = sor.u32 %s37, %s38
    %p40 = scmp.eq.s32.totalorder %s39, 0
    %s42 = sadd.s32 %s41, 1
    %s43 = scalar_select %p40, %s41, %s42
    %p46 = pneg %p40
    %p47 = scmp.eq.s32.totalorder %s8, 1
    %p48 = por %p46, %p47
    %p49 = scmp.ne.s32.totalorder %s41, %s44
    %p50 = scmp.eq.s32.totalorder %s8, 0
    %p51 = por %p49, %p50
    %p52 = scmp.ne.s32.totalorder %s41, %s44
    %p53 = scmp.eq.s32.totalorder %s13, 1
    %p54 = por %p52, %p53
    %p55 = scmp.ne.s32.totalorder %s44, %s45
    %p56 = scmp.eq.s32.totalorder %s13, 0
    %p57 = por %p55, %p56
    %p58 = scmp.ne.s32.totalorder %s44, %s45
    %p59 = scmp.eq.s32.totalorder %s14, 1
    %p60 = por %p58, %p59
    %p62 = scmp.ne.s32.totalorder %s45, %s61
    %p63 = scmp.eq.s32.totalorder %s14, 0
    %p64 = por %p62, %p63
    %s65 = ssub.s32 %s15, %s34
    %s66 = ssub.s32 %s16, %s30
    %s67 = sor.u32 %s65, %s66
    %p68 = scmp.eq.s32.totalorder %s67, 0
    %s70 = sadd.s32 %s69, 1
    %s71 = scalar_select %p68, %s69, %s70
    %p74 = pneg %p68
    %p75 = scmp.eq.s32.totalorder %s8, 1
    %p76 = por %p74, %p75
    %p77 = scmp.ne.s32.totalorder %s69, %s72
    %p78 = scmp.eq.s32.totalorder %s8, 0
    %p79 = por %p77, %p78
    %p80 = scmp.ne.s32.totalorder %s69, %s72
    %p81 = scmp.eq.s32.totalorder %s13, 1
    %p82 = por %p80, %p81
    %p83 = scmp.ne.s32.totalorder %s72, %s73
    %p84 = scmp.eq.s32.totalorder %s13, 0
    %p85 = por %p83, %p84
    %p86 = scmp.ne.s32.totalorder %s72, %s73
    %p87 = scmp.eq.s32.totalorder %s14, 1
    %p88 = por %p86, %p87
    %p90 = scmp.ne.s32.totalorder %s73, %s89
    %p91 = scmp.eq.s32.totalorder %s14, 0
    %p92 = por %p90, %p91
    %s93 = ssub.s32 %s15, %s34
    %s94 = ssub.s32 %s17, %s26
    %s95 = sor.u32 %s93, %s94
    %s96 = ssub.s32 %s16, %s30
    %s97 = sor.u32 %s95, %s96
    %p98 = scmp.eq.s32.totalorder %s97, 0
    %s100 = sadd.s32 %s99, 1
    %s101 = scalar_select %p98, %s99, %s100
    %p104 = pneg %p98
    %p105 = scmp.eq.s32.totalorder %s8, 1
    %p106 = por %p104, %p105
    %p107 = scmp.ne.s32.totalorder %s99, %s102
    %p108 = scmp.eq.s32.totalorder %s8, 0
    %p109 = por %p107, %p108
    %p110 = scmp.ne.s32.totalorder %s99, %s102
    %p111 = scmp.eq.s32.totalorder %s13, 1
    %p112 = por %p110, %p111
    %p113 = scmp.ne.s32.totalorder %s102, %s103
    %p114 = scmp.eq.s32.totalorder %s13, 0
    %p115 = por %p113, %p114
    %p116 = scmp.ne.s32.totalorder %s102, %s103
    %p117 = scmp.eq.s32.totalorder %s14, 1
    %p118 = por %p116, %p117
    %p120 = scmp.ne.s32.totalorder %s103, %s119
    %p121 = scmp.eq.s32.totalorder %s14, 0
    %p122 = por %p120, %p121
    %p123 = scmp.le.s32.totalorder 1, %s8
    %p124 = scmp.lt.s32.totalorder %s8, 3
    %p125 = pnand %p123, %p124
    %p126 = pneg %p125
    // Predicated region
    $region9: #{maskclip_backbone_forward.13} parent=5 // pred_check
      _
    $region10: #{maskclip_backbone_forward.13} parent=5 // pred_check_branch
      %128 = sbr.rel (%p125) target = $region12
    $region11: #{maskclip_backbone_forward.13} parent=5 // pred_region
      %s129 = ssub.s32 %s8, 1
    $region12: #{maskclip_backbone_forward.13} parent=5 // pred_fallthru
      _
    %p130 = scmp.lt.s32.totalorder %s8, 2
    // Predicated region
    $region13: #{maskclip_backbone_forward.13} parent=5 // pred_check
      %p131 = pneg %p130
    $region14: #{maskclip_backbone_forward.13} parent=5 // pred_check_branch
      %133 = sbr.rel (%p131) target = $region16
    $region15: #{maskclip_backbone_forward.13} parent=5 // pred_region
      // Predicated region
      $region17: #{maskclip_backbone_forward.13} parent=15 // pred_check
        %p134 = pneg %p51
      $region18: #{maskclip_backbone_forward.13} parent=15 // pred_check_branch
        %136 = sbr.rel (%p134) target = $region20
      $region19: #{maskclip_backbone_forward.13} parent=15 // pred_region
        %s137 = smul.u32 3, %s16
        %p138 = scmp.lt.s32.totalorder %s15, 1
        %s139 = scalar_select %p138, %s15, 1
        %p140 = scmp.lt.s32.totalorder %s17, 0
        %s141 = scalar_select %p140, %s17, 0
        %p142 = scmp.lt.s32.totalorder %s137, 2
        %s143 = scalar_select %p142, %s137, 2
        %s144 = smul.addr %s141, 3
        %s145 = sadd.s32 %s143, %s144
        %s146 = smul.addr %s139, 3
        %s147 = sadd.s32 %s145, %s146
        %s148 = smul.addr %s147, 4
        %s149 = scalar_lea.vmem %s0, %s148
        %s150 = smul.u32 3, %s16
      $region20: #{maskclip_backbone_forward.13} parent=15 // pred_fallthru
        _
      // Predicated region
      $region21: #{maskclip_backbone_forward.13} parent=15 // pred_check
        %p151 = pneg %p79
      $region22: #{maskclip_backbone_forward.13} parent=15 // pred_check_branch
        %153 = sbr.rel (%p151) target = $region24
      $region23: #{maskclip_backbone_forward.13} parent=15 // pred_region
        %s154 = smul.u32 3, %s16
        %p155 = scmp.lt.s32.totalorder %s15, 1
        %s156 = scalar_select %p155, %s15, 1
        %p157 = scmp.lt.s32.totalorder %s154, 2
        %s158 = scalar_select %p157, %s154, 2
        %s159 = smul.addr %s156, 3
        %s160 = sadd.s32 %s158, %s159
        %s161 = smul.addr %s160, 4
        %s162 = scalar_lea.vmem %s1, %s161
        %s163 = smul.u32 3, %s16
      $region24: #{maskclip_backbone_forward.13} parent=15 // pred_fallthru
        _
    $region16: #{maskclip_backbone_forward.13} parent=5 // pred_fallthru
      _
    %p164 = scmp.le.s32.totalorder 1, %s8
    %p165 = scmp.lt.s32.totalorder %s8, 3
    %p166 = pnand %p164, %p165
    %p167 = pneg %p166
    // Predicated region
    $region25: #{maskclip_backbone_forward.13} parent=5 // pred_check
      _
    $region26: #{maskclip_backbone_forward.13} parent=5 // pred_check_branch
      %169 = sbr.rel (%p166) target = $region28
    $region27: #{maskclip_backbone_forward.13} parent=5 // pred_region
      %s170 = ssub.s32 %s8, 1
      %s171 = smul.u32 3, %s19
      %p172 = scmp.lt.s32.totalorder %s18, 1
      %s173 = scalar_select %p172, %s18, 1
      %p174 = scmp.lt.s32.totalorder %s20, 0
      %s175 = scalar_select %p174, %s20, 0
      %p176 = scmp.lt.s32.totalorder %s171, 2
      %s177 = scalar_select %p176, %s171, 2
      %s178 = smul.addr %s175, 3
      %s179 = sadd.s32 %s177, %s178
      %s180 = smul.addr %s173, 3
      %s181 = sadd.s32 %s179, %s180
      %s182 = smul.addr %s181, 4
      %s183 = scalar_lea.vmem %s0, %s182
      %p184 = pneg %p57
      %p185 = pneg %p54
      %s186 = smul.u32 3, %s19
      %p187 = scmp.lt.s32.totalorder %s18, 1
      %s188 = scalar_select %p187, %s18, 1
      %p189 = scmp.lt.s32.totalorder %s186, 2
      %s190 = scalar_select %p189, %s186, 2
      %s191 = smul.addr %s188, 3
      %s192 = sadd.s32 %s190, %s191
      %s193 = smul.addr %s192, 4
      %s194 = scalar_lea.vmem %s1, %s193
      %p195 = pneg %p85
      %p196 = pneg %p82
      %p197 = pneg %p115
      %p198 = pneg %p112
      %p199 = scmp.lt.s32.totalorder %s18, 1
      %s200 = scalar_select %p199, %s18, 1
      %p201 = scmp.lt.s32.totalorder %s20, 0
      %s202 = scalar_select %p201, %s20, 0
      %p203 = scmp.lt.s32.totalorder %s19, 0
      %s204 = scalar_select %p203, %s19, 0
      %s205 = sadd.s32 %s204, %s202
      %s206 = sadd.s32 %s205, %s200
      %s207 = smul.addr %s206, 4
      %s208 = scalar_lea.vmem %s2, %s207
      %s209 = smul.u32 3, %s19
      %p210 = scmp.lt.s32.totalorder %s18, 1
      %s211 = scalar_select %p210, %s18, 1
      %p212 = scmp.lt.s32.totalorder %s20, 0
      %s213 = scalar_select %p212, %s20, 0
      %p214 = scmp.lt.s32.totalorder %s209, 2
      %s215 = scalar_select %p214, %s209, 2
      %s216 = smul.addr %s213, 3
      %s217 = sadd.s32 %s215, %s216
      %s218 = smul.addr %s211, 3
      %s219 = sadd.s32 %s217, %s218
      %s220 = smul.addr %s219, 4
      %s221 = scalar_lea.vmem %s0, %s220
      %s222 = smul.u32 3, %s19
      %s223 = smul.u32 3, %s19
      %p224 = scmp.lt.s32.totalorder %s18, 1
      %s225 = scalar_select %p224, %s18, 1
      %p226 = scmp.lt.s32.totalorder %s223, 2
      %s227 = scalar_select %p226, %s223, 2
      %s228 = smul.addr %s225, 3
      %s229 = sadd.s32 %s227, %s228
      %s230 = smul.addr %s229, 4
      %s231 = scalar_lea.vmem %s1, %s230
      %s232 = smul.u32 3, %s19
      %p233 = scmp.lt.s32.totalorder %s18, 1
      %s234 = scalar_select %p233, %s18, 1
      %p235 = scmp.lt.s32.totalorder %s20, 0
      %s236 = scalar_select %p235, %s20, 0
      %p237 = scmp.lt.s32.totalorder %s19, 0
      %s238 = scalar_select %p237, %s19, 0
      %s239 = sadd.s32 %s238, %s236
      %s240 = sadd.s32 %s239, %s234
      %s241 = smul.addr %s240, 4
      %s242 = scalar_lea.vmem %s2, %s241
      %v244 = vld [vmem:[%s221] sm:$0x7]
      %v245 = vld [vmem:[%s231] sm:$0x7]
      %v246 = vld [vmem:[%s231 + $0x4] sm:$0x7]
      %v248 = vunpack.c.l.b16 %v245
      %v249 = vpack.c.b16 %v248, %v248
      %250 = vrot.lane.b32.xlu0 %v249, 64
      %v251 = vpop.permute.xlu0 %250
      %vm252 = vcmask 523264
      %v254 = vsel %vm252, %v244, 0
      %v257 = vsel %vm252, %v251, 0
      %259 = vmatprep.subr.bf16.mxu0 0
      %260 = vmatpush1.bf16.xpose.msra.mxu0 %v257
      %261 = vmatprep.subr.bf16.mxu0 0
      %262 = vmatpush1.bf16.xpose.msra.mxu0 0
      %263 = vmatprep.subr.bf16.mxu0 0
      %264 = vmatpush1.bf16.xpose.msra.mxu0 0
      %265 = vmatprep.subr.bf16.mxu0 0
      %266 = vmatpush1.bf16.xpose.msra.mxu0 0
      %267 = vmatprep.subr.bf16.mxu0 0
      %268 = vmatpush1.bf16.xpose.msra.mxu0 0
      %269 = vmatprep.subr.bf16.mxu0 0
      %270 = vmatpush1.bf16.xpose.msra.mxu0 0
      %271 = vmatprep.subr.bf16.mxu0 0
      %272 = vmatpush1.bf16.xpose.msra.mxu0 0
      %273 = vmatprep.subr.bf16.mxu0 0
      %274 = vmatpush1.bf16.xpose.msra.mxu0 0
      %275 = vmatprep.subr.bf16.mxu0 0
      %276 = vmatpush1.bf16.xpose.msra.mxu0 0
      %277 = vmatprep.subr.bf16.mxu0 0
      %278 = vmatpush1.bf16.xpose.msra.mxu0 0
      %279 = vmatprep.subr.bf16.mxu0 0
      %280 = vmatpush1.bf16.xpose.msra.mxu0 0
      %281 = vmatprep.subr.bf16.mxu0 0
      %282 = vmatpush1.bf16.xpose.msra.mxu0 0
      %283 = vmatprep.subr.bf16.mxu0 0
      %284 = vmatpush1.bf16.xpose.msra.mxu0 0
      %285 = vmatprep.subr.bf16.mxu0 0
      %286 = vmatpush1.bf16.xpose.msra.mxu0 0
      %287 = vmatprep.subr.bf16.mxu0 0
      %288 = vmatpush1.bf16.xpose.msra.mxu0 0
      %289 = vmatprep.subr.bf16.mxu0 0
      %290 = vmatpush1.bf16.xpose.msra.mxu0 0
      %291 = vmatprep.mubr.bf16.mxu0 0
      %292 = vmatmul.mubr.bf16.gmra.mrb[0].mxu0 %v254
      %v293 = vpop.f32.mrb[0].mxu0
      %v294 = vadd.f32 0.0, %v293
      %v295 = vpop.f32.mrb[0].mxu0
      %v296 = vpop.f32.mrb[0].mxu0
      %v297 = vpop.f32.mrb[0].mxu0
      %298 = vdwg.mxu0
      %v299 = vmul.f32 %v294, 0.125
      %vm300 = vcmask 36864
      %v301 = vsel %vm300, %v299, -inf
      %302 = vmax.xlane.f32.xlu0 %v301
      %v303 = vpop.xlane.xlu0 %302
      %v304 = vsub.f32 %v299, %v303
      %v305 = vmul.f32 %v304, 1.442695
      %v306 = vpow.pop %v305
      %v307 = vsel %vm300, %v306, 0.0
      %308 = vadd.xlane.f32.xlu0 %v307
      %v309 = vpop.xlane.xlu0 %308
      %v310 = vrcp.pop %v309
      %v311 = vmul.f32 %v306, %v310
      %v312 = vpack.c.bf16 %v311, %v311
      %vm313 = vcmask 39936
      %v315 = vsel %vm313, %v312, 0
      %vm317 = vcmask 1041408
      %vm318 = vcmask 1042432
      %v319 = vsel %vm317, 4294967295, 65535
      %v320 = vsel %vm318, %v319, 0
      %v322 = vand.u32 %v246, %v320
      %324 = vmatprep.subr.bf16.mxu0 0
      %325 = vmatpush1.bf16.msra.mxu0 %v322
      %326 = vmatprep.subr.bf16.mxu0 0
      %327 = vmatpush1.bf16.msra.mxu0 0
      %328 = vmatprep.subr.bf16.mxu0 0
      %329 = vmatpush1.bf16.msra.mxu0 0
      %330 = vmatprep.subr.bf16.mxu0 0
      %331 = vmatpush1.bf16.msra.mxu0 0
      %332 = vmatprep.subr.bf16.mxu0 0
      %333 = vmatpush1.bf16.msra.mxu0 0
      %334 = vmatprep.subr.bf16.mxu0 0
      %335 = vmatpush1.bf16.msra.mxu0 0
      %336 = vmatprep.subr.bf16.mxu0 0
      %337 = vmatpush1.bf16.msra.mxu0 0
      %338 = vmatprep.subr.bf16.mxu0 0
      %339 = vmatpush1.bf16.msra.mxu0 0
      %340 = vmatprep.subr.bf16.mxu0 0
      %341 = vmatpush1.bf16.msra.mxu0 0
      %342 = vmatprep.subr.bf16.mxu0 0
      %343 = vmatpush1.bf16.msra.mxu0 0
      %344 = vmatprep.subr.bf16.mxu0 0
      %345 = vmatpush1.bf16.msra.mxu0 0
      %346 = vmatprep.subr.bf16.mxu0 0
      %347 = vmatpush1.bf16.msra.mxu0 0
      %348 = vmatprep.subr.bf16.mxu0 0
      %349 = vmatpush1.bf16.msra.mxu0 0
      %350 = vmatprep.subr.bf16.mxu0 0
      %351 = vmatpush1.bf16.msra.mxu0 0
      %352 = vmatprep.subr.bf16.mxu0 0
      %353 = vmatpush1.bf16.msra.mxu0 0
      %354 = vmatprep.subr.bf16.mxu0 0
      %355 = vmatpush1.bf16.msra.mxu0 0
      %356 = vmatprep.mubr.bf16.mxu0 0
      %357 = vmatmul.mubr.bf16.gmra.mrb[0].mxu0 %v315
      %v358 = vpop.f32.mrb[0].mxu0
      %v359 = vadd.f32 0.0, %v358
      %v360 = vpop.f32.mrb[0].mxu0
      %v361 = vpop.f32.mrb[0].mxu0
      %v362 = vpop.f32.mrb[0].mxu0
      %363 = vdwg.mxu0
      %v364 = vpack.c.bf16 %v359, %v359
      %vm365 = vcmask 518144
      %vm366 = vsmask.f32 2304
      %vm367 = vmand %vm365, %vm366
      %v368 = vld [vmem:[%s242] sm:$0x7]
      %v369 = vsel %vm367, %v364, %v368
      %370 = vst [vmem:[%s242] sm:$0x7] %v369
      %v371 = vld [vmem:[%s221 + $0x4] sm:$0x7]
      %v372 = vld [vmem:[%s231 + $0x8] sm:$0x7]
      %v374 = vunpack.c.l.b16 %v371
      %v375 = vpack.c.b16 %v374, %v374
      %376 = vrot.lane.b32.xlu0 %v375, 64
      %v377 = vpop.permute.xlu0 %376
      %v379 = vsel %vm252, %v377, 0
      %v382 = vsel %vm252, %v372, 0
      %384 = vmatprep.subr.bf16.mxu0 0
      %385 = vmatpush1.bf16.xpose.msra.mxu0 %v382
      %386 = vmatprep.subr.bf16.mxu0 0
      %387 = vmatpush1.bf16.xpose.msra.mxu0 0
      %388 = vmatprep.subr.bf16.mxu0 0
      %389 = vmatpush1.bf16.xpose.msra.mxu0 0
      %390 = vmatprep.subr.bf16.mxu0 0
      %391 = vmatpush1.bf16.xpose.msra.mxu0 0
      %392 = vmatprep.subr.bf16.mxu0 0
      %393 = vmatpush1.bf16.xpose.msra.mxu0 0
      %394 = vmatprep.subr.bf16.mxu0 0
      %395 = vmatpush1.bf16.xpose.msra.mxu0 0
      %396 = vmatprep.subr.bf16.mxu0 0
      %397 = vmatpush1.bf16.xpose.msra.mxu0 0
      %398 = vmatprep.subr.bf16.mxu0 0
      %399 = vmatpush1.bf16.xpose.msra.mxu0 0
      %400 = vmatprep.subr.bf16.mxu0 0
      %401 = vmatpush1.bf16.xpose.msra.mxu0 0
      %402 = vmatprep.subr.bf16.mxu0 0
      %403 = vmatpush1.bf16.xpose.msra.mxu0 0
      %404 = vmatprep.subr.bf16.mxu0 0
      %405 = vmatpush1.bf16.xpose.msra.mxu0 0
      %406 = vmatprep.subr.bf16.mxu0 0
      %407 = vmatpush1.bf16.xpose.msra.mxu0 0
      %408 = vmatprep.subr.bf16.mxu0 0
      %409 = vmatpush1.bf16.xpose.msra.mxu0 0
      %410 = vmatprep.subr.bf16.mxu0 0
      %411 = vmatpush1.bf16.xpose.msra.mxu0 0
      %412 = vmatprep.subr.bf16.mxu0 0
      %413 = vmatpush1.bf16.xpose.msra.mxu0 0
      %414 = vmatprep.subr.bf16.mxu0 0
      %415 = vmatpush1.bf16.xpose.msra.mxu0 0
      %416 = vmatprep.mubr.bf16.mxu0 0
      %417 = vmatmul.mubr.bf16.gmra.mrb[0].mxu0 %v379
      %v418 = vpop.f32.mrb[0].mxu0
      %v419 = vadd.f32 0.0, %v418
      %v420 = vpop.f32.mrb[0].mxu0
      %v421 = vpop.f32.mrb[0].mxu0
      %v422 = vpop.f32.mrb[0].mxu0
      %423 = vdwg.mxu0
      %v424 = vmul.f32 %v419, 0.125
      %v425 = vsel %vm300, %v424, -inf
      %426 = vmax.xlane.f32.xlu0 %v425
      %v427 = vpop.xlane.xlu0 %426
      %v428 = vsub.f32 %v424, %v427
      %v429 = vmul.f32 %v428, 1.442695
      %v430 = vpow.pop %v429
      %v431 = vsel %vm300, %v430, 0.0
      %432 = vadd.xlane.f32.xlu0 %v431
      %v433 = vpop.xlane.xlu0 %432
      %v434 = vrcp.pop %v433
      %v435 = vmul.f32 %v430, %v434
      %v436 = vpack.c.bf16 %v435, %v435
      %v438 = vunpack.c.l.b16 %v372
      %v439 = vpack.c.b16 %v438, %v438
      %440 = vrot.lane.b32.xlu0 %v439, 64
      %v441 = vpop.permute.xlu0 %440
      %v443 = vsel %vm313, %v436, 0
      %v446 = vand.u32 %v441, %v320
      %448 = vmatprep.subr.bf16.mxu0 0
      %449 = vmatpush1.bf16.msra.mxu0 %v446
      %450 = vmatprep.subr.bf16.mxu0 0
      %451 = vmatpush1.bf16.msra.mxu0 0
      %452 = vmatprep.subr.bf16.mxu0 0
      %453 = vmatpush1.bf16.msra.mxu0 0
      %454 = vmatprep.subr.bf16.mxu0 0
      %455 = vmatpush1.bf16.msra.mxu0 0
      %456 = vmatprep.subr.bf16.mxu0 0
      %457 = vmatpush1.bf16.msra.mxu0 0
      %458 = vmatprep.subr.bf16.mxu0 0
      %459 = vmatpush1.bf16.msra.mxu0 0
      %460 = vmatprep.subr.bf16.mxu0 0
      %461 = vmatpush1.bf16.msra.mxu0 0
      %462 = vmatprep.subr.bf16.mxu0 0
      %463 = vmatpush1.bf16.msra.mxu0 0
      %464 = vmatprep.subr.bf16.mxu0 0
      %465 = vmatpush1.bf16.msra.mxu0 0
      %466 = vmatprep.subr.bf16.mxu0 0
      %467 = vmatpush1.bf16.msra.mxu0 0
      %468 = vmatprep.subr.bf16.mxu0 0
      %469 = vmatpush1.bf16.msra.mxu0 0
      %470 = vmatprep.subr.bf16.mxu0 0
      %471 = vmatpush1.bf16.msra.mxu0 0
      %472 = vmatprep.subr.bf16.mxu0 0
      %473 = vmatpush1.bf16.msra.mxu0 0
      %474 = vmatprep.subr.bf16.mxu0 0
      %475 = vmatpush1.bf16.msra.mxu0 0
      %476 = vmatprep.subr.bf16.mxu0 0
      %477 = vmatpush1.bf16.msra.mxu0 0
      %478 = vmatprep.subr.bf16.mxu0 0
      %479 = vmatpush1.bf16.msra.mxu0 0
      %480 = vmatprep.mubr.bf16.mxu0 0
      %481 = vmatmul.mubr.bf16.gmra.mrb[0].mxu0 %v443
      %v482 = vpop.f32.mrb[0].mxu0
      %v483 = vadd.f32 0.0, %v482
      %v484 = vpop.f32.mrb[0].mxu0
      %v485 = vpop.f32.mrb[0].mxu0
      %v486 = vpop.f32.mrb[0].mxu0
      %487 = vdwg.mxu0
      %v488 = vpack.c.bf16 %v483, %v483
      %v490 = vunpack.c.l.b16 %v488
      %v491 = vpack.c.b16 %v490, %v490
      %492 = vrot.lane.b32.xlu0 %v491, 64
      %v493 = vpop.permute.xlu0 %492
      %vm495 = vcmask 1042944
      %vm496 = vmand %vm495, %vm366
      %v497 = vld [vmem:[%s242] sm:$0x7]
      %v498 = vsel %vm496, %v493, %v497
      %499 = vst [vmem:[%s242] sm:$0x7] %v498
      %p500 = scmp.lt.s32.totalorder %s18, 1
      %s501 = scalar_select %p500, %s18, 1
      %p502 = scmp.lt.s32.totalorder %s20, 0
      %s503 = scalar_select %p502, %s20, 0
      %p504 = scmp.lt.s32.totalorder %s19, 0
      %s505 = scalar_select %p504, %s19, 0
      %s506 = sadd.s32 %s505, %s503
      %s507 = sadd.s32 %s506, %s501
      %s508 = smul.addr %s507, 4
      %s509 = scalar_lea.vmem %s2, %s508
      // Predicated region
      $region29: #{maskclip_backbone_forward.13} parent=27 // pred_check
        %p510 = pneg %p112
      $region30: #{maskclip_backbone_forward.13} parent=27 // pred_check_branch
        %512 = sbr.rel (%p510) target = $region32
      $region31: #{maskclip_backbone_forward.13} parent=27 // pred_region
        _
      $region32: #{maskclip_backbone_forward.13} parent=27 // pred_fallthru
        _
    $region28: #{maskclip_backbone_forward.13} parent=5 // pred_fallthru
      _
    %p513 = scmp.le.s32.totalorder 2, %s8
    // Predicated region
    $region33: #{maskclip_backbone_forward.13} parent=5 // pred_check
      %p514 = pneg %p513
    $region34: #{maskclip_backbone_forward.13} parent=5 // pred_check_branch
      %516 = sbr.rel (%p514) target = $region36
    $region35: #{maskclip_backbone_forward.13} parent=5 // pred_region
      %s517 = ssub.s32 %s8, 2
      // Predicated region
      $region37: #{maskclip_backbone_forward.13} parent=35 // pred_check
        %p518 = pneg %p118
      $region38: #{maskclip_backbone_forward.13} parent=35 // pred_check_branch
        %520 = sbr.rel (%p518) target = $region40
      $region39: #{maskclip_backbone_forward.13} parent=35 // pred_region
        %p521 = scmp.lt.s32.totalorder %s21, 1
        %s522 = scalar_select %p521, %s21, 1
        %p523 = scmp.lt.s32.totalorder %s23, 0
        %s524 = scalar_select %p523, %s23, 0
        %p525 = scmp.lt.s32.totalorder %s22, 0
        %s526 = scalar_select %p525, %s22, 0
        %s527 = sadd.s32 %s526, %s524
        %s528 = sadd.s32 %s527, %s522
        %s529 = smul.addr %s528, 4
        %s530 = scalar_lea.vmem %s2, %s529
      $region40: #{maskclip_backbone_forward.13} parent=35 // pred_fallthru
        _
    $region36: #{maskclip_backbone_forward.13} parent=5 // pred_fallthru
      _
  $region6: #{maskclip_backbone_forward.13} parent=0 // loop_footer
    %s12 = sadd.s32 1, %s8
  $region7: #{maskclip_backbone_forward.13} parent=0 // loop_footer_branch
    %7 = sbr.rel target = $region3
  $region8: #{maskclip_backbone_forward.13} parent=0 // loop_exit
    _

// kernel: maskclip_backbone_forward.12
$region0: #{maskclip_backbone_forward.12}
  #allocation0 [shape = 'u32[]', space=smem, size = 0x4, offset = 0x4, fixed_abs, tag = 'smem constant byte address 0x4 - core index']
  #allocation1 [shape = 'u32[144,128]{1,0:T(1,128)}', space=vmem, size = 0x12000, scoped, tag = 'internal scratch']
  %s0 = inlined_call_operand.vmem [shape: f32[10,128], index: 0, kind: input, shape index: {}]
  %s1 = inlined_call_operand.vmem [shape: f32[1,128], index: 1, kind: input, shape index: {}]
  %s2 = inlined_call_operand.vmem [shape: f32[1,128], index: 2, kind: input, shape index: {}]
  %s3 = inlined_call_operand.vmem [shape: bf16[128,384], index: 3, kind: input, shape index: {}]
  %s4 = inlined_call_operand.vmem [shape: f32[1,384], index: 4, kind: input, shape index: {}]
  %s5 = inlined_call_operand.vmem [shape: bf16[10,384], index: 5, kind: output, shape index: {}]
  %s6 = sld [smem:[#allocation0]]
  $region30: #{maskclip_backbone_forward.12} parent=0
    _
  %s8 = ssub.s32 1, %s6
  %s9 = scalar_select 0, %s8, %s6
  // Predicated region
  $region2: #{maskclip_backbone_forward.12} parent=0 // pred_check
    _
  $region3: #{maskclip_backbone_forward.12} parent=0 // pred_check_branch
    %11 = sbr.rel (0) target = $region5
  $region4: #{maskclip_backbone_forward.12} parent=0 // pred_region
    _
  $region5: #{maskclip_backbone_forward.12} parent=0 // pred_fallthru
    _
  // Predicated region
  $region6: #{maskclip_backbone_forward.12} parent=0 // pred_check
    _
  $region7: #{maskclip_backbone_forward.12} parent=0 // pred_check_branch
    %13 = sbr.rel (0) target = $region9
  $region8: #{maskclip_backbone_forward.12} parent=0 // pred_region
    _
  $region9: #{maskclip_backbone_forward.12} parent=0 // pred_fallthru
    _
  // Predicated region
  $region10: #{maskclip_backbone_forward.12} parent=0 // pred_check
    _
  $region11: #{maskclip_backbone_forward.12} parent=0 // pred_check_branch
    %15 = sbr.rel (0) target = $region13
  $region12: #{maskclip_backbone_forward.12} parent=0 // pred_region
    _
  $region13: #{maskclip_backbone_forward.12} parent=0 // pred_fallthru
    _
  // Predicated region
  $region14: #{maskclip_backbone_forward.12} parent=0 // pred_check
    _
  $region15: #{maskclip_backbone_forward.12} parent=0 // pred_check_branch
    %17 = sbr.rel (0) target = $region17
  $region16: #{maskclip_backbone_forward.12} parent=0 // pred_region
    _
  $region17: #{maskclip_backbone_forward.12} parent=0 // pred_fallthru
    _
  // Predicated region
  $region18: #{maskclip_backbone_forward.12} parent=0 // pred_check
    _
  $region19: #{maskclip_backbone_forward.12} parent=0 // pred_check_branch
    %19 = sbr.rel (0) target = $region21
  $region20: #{maskclip_backbone_forward.12} parent=0 // pred_region
    _
  $region21: #{maskclip_backbone_forward.12} parent=0 // pred_fallthru
    _
  %v21 = vld [vmem:[%s0] sm:$0xff]
  %v22 = vld [vmem:[%s0 + $0x8] sm:$0x3]
  %23 = vadd.xlane.f32.xlu0 %v21
  %v24 = vpop.xlane.xlu0 %23
  %vm25 = vcmask 1041408
  %v26 = vsel %vm25, %v22, 0.0
  %27 = vadd.xlane.f32.xlu0 %v26
  %v28 = vpop.xlane.xlu0 %27
  %v29 = vrcp.pop 128.0
  %v30 = vmul.f32 %v24, %v29
  %v31 = vmul.f32 %v28, %v29
  %v32 = vsub.f32 %v21, %v30
  %v33 = vsub.f32 %v22, %v31
  %v34 = vmul.f32 %v32, %v32
  %v35 = vmul.f32 %v33, %v33
  %36 = vadd.xlane.f32.xlu0 %v34
  %v37 = vpop.xlane.xlu0 %36
  %v38 = vsel %vm25, %v35, 0.0
  %39 = vadd.xlane.f32.xlu0 %v38
  %v40 = vpop.xlane.xlu0 %39
  %v41 = vmul.f32 %v37, %v29
  %v42 = vmul.f32 %v40, %v29
  %v43 = vadd.f32 %v41, 1e-05
  %v44 = vadd.f32 %v42, 1e-05
  %v45 = vrsqrt.pop %v43
  %v46 = vrsqrt.pop %v44
  %v47 = vmul.f32 %v32, %v45
  %v48 = vmul.f32 %v33, %v46
  %v49 = vld [vmem:[%s1] sm:$0x1]
  %v51 = vlaneseq
  %v52 = vshrl.u32 %v51, 7
  %v53 = vsub.s32 0, %v52
  %v54 = vrot.slane %v49, %v53
  %v56 = vmul.f32 %v47, %v54
  %v57 = vmul.f32 %v48, %v54
  %v58 = vld [vmem:[%s2] sm:$0x1]
  %v60 = vlaneseq
  %v61 = vshrl.u32 %v60, 7
  %v62 = vsub.s32 0, %v61
  %v63 = vrot.slane %v58, %v62
  %v65 = vadd.f32 %v56, %v63
  %v66 = vadd.f32 %v57, %v63
  %v67 = vpack.c.bf16 %v66, %v65
  %v68 = vld [vmem:[%s3] sm:$0xff]
  %v69 = vld [vmem:[%s3 + $0x8] sm:$0xf]
  %v70 = vld [vmem:[%s3 + $0xc] sm:$0xff]
  %v71 = vld [vmem:[%s3 + $0x14] sm:$0xf]
  %v72 = vld [vmem:[%s3 + $0x18] sm:$0xff]
  %v73 = vld [vmem:[%s3 + $0x20] sm:$0xf]
  %v74 = vld [vmem:[%s3 + $0x24] sm:$0xff]
  %v75 = vld [vmem:[%s3 + $0x2c] sm:$0xf]
  %v76 = vld [vmem:[%s3 + $0x30] sm:$0xff]
  %v77 = vld [vmem:[%s3 + $0x38] sm:$0xf]
  %v78 = vld [vmem:[%s3 + $0x3c] sm:$0xff]
  %v79 = vld [vmem:[%s3 + $0x44] sm:$0xf]
  %v80 = vld [vmem:[%s3 + $0x48] sm:$0xff]
  %v81 = vld [vmem:[%s3 + $0x50] sm:$0xf]
  %v82 = vld [vmem:[%s3 + $0x54] sm:$0xff]
  %v83 = vld [vmem:[%s3 + $0x5c] sm:$0xf]
  %v84 = vld [vmem:[%s3 + $0x60] sm:$0xff]
  %v85 = vld [vmem:[%s3 + $0x68] sm:$0xf]
  %v86 = vld [vmem:[%s3 + $0x6c] sm:$0xff]
  %v87 = vld [vmem:[%s3 + $0x74] sm:$0xf]
  %v88 = vld [vmem:[%s3 + $0x78] sm:$0xff]
  %v89 = vld [vmem:[%s3 + $0x80] sm:$0xf]
  %v90 = vld [vmem:[%s3 + $0x84] sm:$0xff]
  %v91 = vld [vmem:[%s3 + $0x8c] sm:$0xf]
  %v92 = vld [vmem:[%s3 + $0x90] sm:$0xff]
  %v93 = vld [vmem:[%s3 + $0x98] sm:$0xf]
  %v94 = vld [vmem:[%s3 + $0x9c] sm:$0xff]
  %v95 = vld [vmem:[%s3 + $0xa4] sm:$0xf]
  %v96 = vld [vmem:[%s3 + $0xa8] sm:$0xff]
  %v97 = vld [vmem:[%s3 + $0xb0] sm:$0xf]
  %v98 = vld [vmem:[%s3 + $0xb4] sm:$0xff]
  %v99 = vld [vmem:[%s3 + $0xbc] sm:$0xf]
  %v100 = vld [vmem:[%s4] sm:$0x7]
  %v102 = vlaneseq
  %v103 = vshrl.u32 %v102, 7
  %v104 = vsub.s32 0, %v103
  %v105 = vrot.slane %v100, %v104
  %v106 = vlaneseq
  %v107 = vshrl.u32 %v106, 7
  %v108 = vsub.s32 1, %v107
  %v109 = vrot.slane %v100, %v108
  %v110 = vlaneseq
  %v111 = vshrl.u32 %v110, 7
  %v112 = vsub.s32 2, %v111
  %v113 = vrot.slane %v100, %v112
  %v149 = vunpack.c.l.b16 %v68
  %v150 = vunpack.c.h.b16 %v68
  %v151 = vunpack.c.l.b16 %v69
  %v152 = vunpack.c.l.b16 %v70
  %v153 = vunpack.c.h.b16 %v70
  %v154 = vunpack.c.l.b16 %v71
  %v155 = vunpack.c.l.b16 %v72
  %v156 = vunpack.c.h.b16 %v72
  %v157 = vunpack.c.l.b16 %v73
  %v158 = vunpack.c.l.b16 %v74
  %v159 = vunpack.c.h.b16 %v74
  %v160 = vunpack.c.l.b16 %v75
  %v161 = vunpack.c.l.b16 %v76
  %v162 = vunpack.c.h.b16 %v76
  %v163 = vunpack.c.l.b16 %v77
  %v164 = vunpack.c.l.b16 %v78
  %v165 = vunpack.c.h.b16 %v78
  %v166 = vunpack.c.l.b16 %v79
  %v167 = vunpack.c.l.b16 %v80
  %v168 = vunpack.c.h.b16 %v80
  %v169 = vunpack.c.l.b16 %v81
  %v170 = vunpack.c.l.b16 %v82
  %v171 = vunpack.c.h.b16 %v82
  %v172 = vunpack.c.l.b16 %v83
  %v173 = vunpack.c.l.b16 %v84
  %v174 = vunpack.c.h.b16 %v84
  %v175 = vunpack.c.l.b16 %v85
  %v176 = vunpack.c.l.b16 %v86
  %v177 = vunpack.c.h.b16 %v86
  %v178 = vunpack.c.l.b16 %v87
  %v179 = vunpack.c.l.b16 %v88
  %v180 = vunpack.c.h.b16 %v88
  %v181 = vunpack.c.l.b16 %v89
  %v182 = vunpack.c.l.b16 %v90
  %v183 = vunpack.c.h.b16 %v90
  %v184 = vunpack.c.l.b16 %v91
  %v185 = vunpack.c.l.b16 %v92
  %v186 = vunpack.c.h.b16 %v92
  %v187 = vunpack.c.l.b16 %v93
  %v188 = vunpack.c.l.b16 %v94
  %v189 = vunpack.c.h.b16 %v94
  %v190 = vunpack.c.l.b16 %v95
  %v191 = vunpack.c.l.b16 %v96
  %v192 = vunpack.c.h.b16 %v96
  %v193 = vunpack.c.l.b16 %v97
  %v194 = vunpack.c.l.b16 %v98
  %v195 = vunpack.c.h.b16 %v98
  %v196 = vunpack.c.l.b16 %v99
  %v197 = vpack.c.b16 %v152, %v149
  %v198 = vpack.c.b16 %v153, %v150
  %v199 = vpack.c.b16 %v154, %v151
  %v200 = vpack.c.b16 %v158, %v155
  %v201 = vpack.c.b16 %v159, %v156
  %v202 = vpack.c.b16 %v160, %v157
  %v203 = vpack.c.b16 %v164, %v161
  %v204 = vpack.c.b16 %v165, %v162
  %v205 = vpack.c.b16 %v166, %v163
  %v206 = vpack.c.b16 %v170, %v167
  %v207 = vpack.c.b16 %v171, %v168
  %v208 = vpack.c.b16 %v172, %v169
  %v209 = vpack.c.b16 %v176, %v173
  %v210 = vpack.c.b16 %v177, %v174
  %v211 = vpack.c.b16 %v178, %v175
  %v212 = vpack.c.b16 %v182, %v179
  %v213 = vpack.c.b16 %v183, %v180
  %v214 = vpack.c.b16 %v184, %v181
  %v215 = vpack.c.b16 %v188, %v185
  %v216 = vpack.c.b16 %v189, %v186
  %v217 = vpack.c.b16 %v190, %v187
  %v218 = vpack.c.b16 %v194, %v191
  %v219 = vpack.c.b16 %v195, %v192
  %v220 = vpack.c.b16 %v196, %v193
  %245 = vmatprep.subr.bf16.mxu0 %v198
  %246 = vmatpush1.bf16.msra.mxu0 %v197
  %247 = vmatprep.subr.bf16.mxu0 %v201
  %248 = vmatpush1.bf16.msra.mxu0 %v200
  %249 = vmatprep.subr.bf16.mxu0 %v204
  %250 = vmatpush1.bf16.msra.mxu0 %v203
  %251 = vmatprep.subr.bf16.mxu0 %v207
  %252 = vmatpush1.bf16.msra.mxu0 %v206
  %253 = vmatprep.subr.bf16.mxu0 %v210
  %254 = vmatpush1.bf16.msra.mxu0 %v209
  %255 = vmatprep.subr.bf16.mxu0 %v213
  %256 = vmatpush1.bf16.msra.mxu0 %v212
  %257 = vmatprep.subr.bf16.mxu0 %v216
  %258 = vmatpush1.bf16.msra.mxu0 %v215
  %259 = vmatprep.subr.bf16.mxu0 %v219
  %260 = vmatpush1.bf16.msra.mxu0 %v218
  %261 = vmatprep.subr.bf16.mxu0 0
  %262 = vmatpush1.bf16.msra.mxu0 0
  %263 = vmatprep.subr.bf16.mxu0 0
  %264 = vmatpush1.bf16.msra.mxu0 0
  %265 = vmatprep.subr.bf16.mxu0 0
  %266 = vmatpush1.bf16.msra.mxu0 0
  %267 = vmatprep.subr.bf16.mxu0 0
  %268 = vmatpush1.bf16.msra.mxu0 0
  %269 = vmatprep.subr.bf16.mxu0 0
  %270 = vmatpush1.bf16.msra.mxu0 0
  %271 = vmatprep.subr.bf16.mxu0 0
  %272 = vmatpush1.bf16.msra.mxu0 0
  %273 = vmatprep.subr.bf16.mxu0 0
  %274 = vmatpush1.bf16.msra.mxu0 0
  %275 = vmatprep.subr.bf16.mxu0 0
  %276 = vmatpush1.bf16.msra.mxu0 0
  %277 = vmatprep.mubr.bf16.mxu0 0
  %278 = vmatmul.mubr.bf16.gmra.mrb[0].mxu0 %v67
  %v279 = vpop.f32.mrb[0].mxu0
  %v280 = vadd.f32 %v105, %v279
  %v281 = vpop.f32.mrb[0].mxu0
  %v282 = vadd.f32 %v109, %v281
  %v283 = vpop.f32.mrb[0].mxu0
  %v284 = vadd.f32 %v105, %v283
  %v285 = vpop.f32.mrb[0].mxu0
  %v286 = vadd.f32 %v109, %v285
  %287 = vdwg.mxu0
  %288 = vmatprep.subr.bf16.mxu0 0
  %289 = vmatpush1.bf16.msra.mxu0 %v199
  %290 = vmatprep.subr.bf16.mxu0 0
  %291 = vmatpush1.bf16.msra.mxu0 %v202
  %292 = vmatprep.subr.bf16.mxu0 0
  %293 = vmatpush1.bf16.msra.mxu0 %v205
  %294 = vmatprep.subr.bf16.mxu0 0
  %295 = vmatpush1.bf16.msra.mxu0 %v208
  %296 = vmatprep.subr.bf16.mxu0 0
  %297 = vmatpush1.bf16.msra.mxu0 %v211
  %298 = vmatprep.subr.bf16.mxu0 0
  %299 = vmatpush1.bf16.msra.mxu0 %v214
  %300 = vmatprep.subr.bf16.mxu0 0
  %301 = vmatpush1.bf16.msra.mxu0 %v217
  %302 = vmatprep.subr.bf16.mxu0 0
  %303 = vmatpush1.bf16.msra.mxu0 %v220
  %304 = vmatprep.subr.bf16.mxu0 0
  %305 = vmatpush1.bf16.msra.mxu0 0
  %306 = vmatprep.subr.bf16.mxu0 0
  %307 = vmatpush1.bf16.msra.mxu0 0
  %308 = vmatprep.subr.bf16.mxu0 0
  %309 = vmatpush1.bf16.msra.mxu0 0
  %310 = vmatprep.subr.bf16.mxu0 0
  %311 = vmatpush1.bf16.msra.mxu0 0
  %312 = vmatprep.subr.bf16.mxu0 0
  %313 = vmatpush1.bf16.msra.mxu0 0
  %314 = vmatprep.subr.bf16.mxu0 0
  %315 = vmatpush1.bf16.msra.mxu0 0
  %316 = vmatprep.subr.bf16.mxu0 0
  %317 = vmatpush1.bf16.msra.mxu0 0
  %318 = vmatprep.subr.bf16.mxu0 0
  %319 = vmatpush1.bf16.msra.mxu0 0
  %320 = vmatprep.mubr.bf16.mxu0 0
  %321 = vmatmul.mubr.bf16.gmra.mrb[0].mxu0 %v67
  %v322 = vpop.f32.mrb[0].mxu0
  %v323 = vadd.f32 %v113, %v322
  %v324 = vpop.f32.mrb[0].mxu0
  %v325 = vpop.f32.mrb[0].mxu0
  %v326 = vadd.f32 %v113, %v325
  %v327 = vpop.f32.mrb[0].mxu0
  %328 = vdwg.mxu0
  %v329 = vpack.c.bf16 %v284, %v280
  %v330 = vpack.c.bf16 %v286, %v282
  %v331 = vpack.c.bf16 %v326, %v323
  %v335 = vunpack.c.l.b16 %v329
  %v336 = vunpack.c.l.b16 %v330
  %v337 = vunpack.c.l.b16 %v331
  %v338 = vunpack.c.h.b16 %v329
  %v339 = vunpack.c.h.b16 %v330
  %v340 = vunpack.c.h.b16 %v331
  %v341 = vpack.c.b16 %v336, %v335
  %v342 = vpack.c.b16 %v337, %v337
  %v343 = vpack.c.b16 %v339, %v338
  %v344 = vpack.c.b16 %v340, %v340
  %349 = vst [vmem:[%s5] sm:$0xff] %v341
  %350 = vst [vmem:[%s5 + $0x8] sm:$0xf] %v342
  %351 = vst [vmem:[%s5 + $0xc] sm:$0x11] %v343
  %352 = vst [vmem:[%s5 + $0x14] sm:$0x1] %v344
  // Predicated region
  $region22: #{maskclip_backbone_forward.12} parent=0 // pred_check
    _
  $region23: #{maskclip_backbone_forward.12} parent=0 // pred_check_branch
    %354 = sbr.rel (0) target = $region25
  $region24: #{maskclip_backbone_forward.12} parent=0 // pred_region
    _
  $region25: #{maskclip_backbone_forward.12} parent=0 // pred_fallthru
    _
  // Predicated region
  $region26: #{maskclip_backbone_forward.12} parent=0 // pred_check
    _
  $region27: #{maskclip_backbone_forward.12} parent=0 // pred_check_branch
    %356 = sbr.rel (0) target = $region29
  $region28: #{maskclip_backbone_forward.12} parent=0 // pred_region
    _
  $region29: #{maskclip_backbone_forward.12} parent=0 // pred_fallthru
    _

// kernel: squeeze.3
$region0: #{squeeze.3}
  %s0 = inlined_call_operand.vmem [shape: f32[2,64], index: 0, kind: input, shape index: {}]
  %s1 = inlined_call_operand.vmem [shape: f32[1,128], index: 1, kind: output, shape index: {}]
  $region1: #{squeeze.3} parent=0
    #allocation0 [shape = 'u8[4096]{0}', space=vmem, size = 0x1000, scoped, tag = 'scoped mem for output reshape']
    #allocation1 [shape = 'u8[4096]{0}', space=vmem, size = 0x1000, scoped, tag = 'scoped mem for input reshape']
    %s3 = sshllo.u32 0, 2
    %v4 = vld [vmem:[%s0] sm:%s3]
    %5 = vst [vmem:[#allocation1] sm:%s3] %v4
    %v6 = vld [vmem:[#allocation1] sm:$0x1]
    %vm7 = vcmask 523264
    %8 = vst.msk [vmem:[#allocation0] sm:$0x1] %vm7, %v6
    %s9 = scalar_lea.vmem [#allocation1], 1
    %v10 = vld [vmem:[%s9] sm:$0x1]
    %11 = vrot.lane.b32.xlu0 %v10, 64
    %v12 = vpop.permute.xlu0 %11
    %vm13 = vcmask 1048064
    %14 = vst.msk [vmem:[#allocation0] sm:$0x1] %vm13, %v12
    %s16 = sshllo.u32 0, 1
    %v18 = vld [vmem:[#allocation0] sm:%s16]
    %s19 = sshllo.u32 0, 1
    %20 = vst [vmem:[%s1] sm:%s19] %v18

// kernel: maskclip_backbone_forward.14
$region0: #{maskclip_backbone_forward.14}
  #allocation0 [shape = 'u32[]', space=smem, size = 0x4, offset = 0x4, fixed_abs, tag = 'smem constant byte address 0x4 - core index']
  #allocation1 [shape = 'u32[144,128]{1,0:T(1,128)}', space=vmem, size = 0x12000, scoped, tag = 'internal scratch']
  %s0 = inlined_call_operand.vmem [shape: bf16[10,128], index: 0, kind: input, shape index: {}]
  %s1 = inlined_call_operand.vmem [shape: bf16[128,128], index: 1, kind: input, shape index: {}]
  %s2 = inlined_call_operand.vmem [shape: f32[1,128], index: 2, kind: input, shape index: {}]
  %s3 = inlined_call_operand.vmem [shape: f32[10,128], index: 3, kind: input, shape index: {}]
  %s4 = inlined_call_operand.vmem [shape: f32[10,128], index: 4, kind: output, shape index: {}]
  %s5 = sld [smem:[#allocation0]]
  $region26: #{maskclip_backbone_forward.14} parent=0
    _
  %s7 = ssub.s32 1, %s5
  %s8 = scalar_select 0, %s7, %s5
  // Predicated region
  $region2: #{maskclip_backbone_forward.14} parent=0 // pred_check
    _
  $region3: #{maskclip_backbone_forward.14} parent=0 // pred_check_branch
    %10 = sbr.rel (0) target = $region5
  $region4: #{maskclip_backbone_forward.14} parent=0 // pred_region
    _
  $region5: #{maskclip_backbone_forward.14} parent=0 // pred_fallthru
    _
  // Predicated region
  $region6: #{maskclip_backbone_forward.14} parent=0 // pred_check
    _
  $region7: #{maskclip_backbone_forward.14} parent=0 // pred_check_branch
    %12 = sbr.rel (0) target = $region9
  $region8: #{maskclip_backbone_forward.14} parent=0 // pred_region
    _
  $region9: #{maskclip_backbone_forward.14} parent=0 // pred_fallthru
    _
  // Predicated region
  $region10: #{maskclip_backbone_forward.14} parent=0 // pred_check
    _
  $region11: #{maskclip_backbone_forward.14} parent=0 // pred_check_branch
    %14 = sbr.rel (0) target = $region13
  $region12: #{maskclip_backbone_forward.14} parent=0 // pred_region
    _
  $region13: #{maskclip_backbone_forward.14} parent=0 // pred_fallthru
    _
  // Predicated region
  $region14: #{maskclip_backbone_forward.14} parent=0 // pred_check
    _
  $region15: #{maskclip_backbone_forward.14} parent=0 // pred_check_branch
    %16 = sbr.rel (0) target = $region17
  $region16: #{maskclip_backbone_forward.14} parent=0 // pred_region
    _
  $region17: #{maskclip_backbone_forward.14} parent=0 // pred_fallthru
    _
  %v18 = vld [vmem:[%s0] sm:$0xf]
  %v19 = vld [vmem:[%s0 + $0x4] sm:$0x1]
  %v20 = vld [vmem:[%s1] sm:$0xf]
  %v21 = vld [vmem:[%s1 + $0x4] sm:$0xf]
  %v22 = vld [vmem:[%s1 + $0x8] sm:$0xf]
  %v23 = vld [vmem:[%s1 + $0xc] sm:$0xf]
  %v24 = vld [vmem:[%s1 + $0x10] sm:$0xf]
  %v25 = vld [vmem:[%s1 + $0x14] sm:$0xf]
  %v26 = vld [vmem:[%s1 + $0x18] sm:$0xf]
  %v27 = vld [vmem:[%s1 + $0x1c] sm:$0xf]
  %v28 = vld [vmem:[%s1 + $0x20] sm:$0xf]
  %v29 = vld [vmem:[%s1 + $0x24] sm:$0xf]
  %v30 = vld [vmem:[%s1 + $0x28] sm:$0xf]
  %v31 = vld [vmem:[%s1 + $0x2c] sm:$0xf]
  %v32 = vld [vmem:[%s1 + $0x30] sm:$0xf]
  %v33 = vld [vmem:[%s1 + $0x34] sm:$0xf]
  %v34 = vld [vmem:[%s1 + $0x38] sm:$0xf]
  %v35 = vld [vmem:[%s1 + $0x3c] sm:$0xf]
  %v36 = vld [vmem:[%s2] sm:$0x1]
  %v38 = vlaneseq
  %v39 = vshrl.u32 %v38, 7
  %v40 = vsub.s32 0, %v39
  %v41 = vrot.slane %v36, %v40
  %v45 = vunpack.c.l.b16 %v18
  %v46 = vunpack.c.l.b16 %v19
  %v47 = vpack.c.b16 %v46, %v45
  %v65 = vunpack.c.l.b16 %v20
  %v66 = vunpack.c.l.b16 %v21
  %v67 = vunpack.c.l.b16 %v22
  %v68 = vunpack.c.l.b16 %v23
  %v69 = vunpack.c.l.b16 %v24
  %v70 = vunpack.c.l.b16 %v25
  %v71 = vunpack.c.l.b16 %v26
  %v72 = vunpack.c.l.b16 %v27
  %v73 = vunpack.c.l.b16 %v28
  %v74 = vunpack.c.l.b16 %v29
  %v75 = vunpack.c.l.b16 %v30
  %v76 = vunpack.c.l.b16 %v31
  %v77 = vunpack.c.l.b16 %v32
  %v78 = vunpack.c.l.b16 %v33
  %v79 = vunpack.c.l.b16 %v34
  %v80 = vunpack.c.l.b16 %v35
  %v81 = vpack.c.b16 %v66, %v65
  %v82 = vpack.c.b16 %v68, %v67
  %v83 = vpack.c.b16 %v70, %v69
  %v84 = vpack.c.b16 %v72, %v71
  %v85 = vpack.c.b16 %v74, %v73
  %v86 = vpack.c.b16 %v76, %v75
  %v87 = vpack.c.b16 %v78, %v77
  %v88 = vpack.c.b16 %v80, %v79
  %97 = vmatprep.subr.bf16.mxu0 0
  %98 = vmatpush1.bf16.msra.mxu0 %v81
  %99 = vmatprep.subr.bf16.mxu0 0
  %100 = vmatpush1.bf16.msra.mxu0 %v82
  %101 = vmatprep.subr.bf16.mxu0 0
  %102 = vmatpush1.bf16.msra.mxu0 %v83
  %103 = vmatprep.subr.bf16.mxu0 0
  %104 = vmatpush1.bf16.msra.mxu0 %v84
  %105 = vmatprep.subr.bf16.mxu0 0
  %106 = vmatpush1.bf16.msra.mxu0 %v85
  %107 = vmatprep.subr.bf16.mxu0 0
  %108 = vmatpush1.bf16.msra.mxu0 %v86
  %109 = vmatprep.subr.bf16.mxu0 0
  %110 = vmatpush1.bf16.msra.mxu0 %v87
  %111 = vmatprep.subr.bf16.mxu0 0
  %112 = vmatpush1.bf16.msra.mxu0 %v88
  %113 = vmatprep.subr.bf16.mxu0 0
  %114 = vmatpush1.bf16.msra.mxu0 0
  %115 = vmatprep.subr.bf16.mxu0 0
  %116 = vmatpush1.bf16.msra.mxu0 0
  %117 = vmatprep.subr.bf16.mxu0 0
  %118 = vmatpush1.bf16.msra.mxu0 0
  %119 = vmatprep.subr.bf16.mxu0 0
  %120 = vmatpush1.bf16.msra.mxu0 0
  %121 = vmatprep.subr.bf16.mxu0 0
  %122 = vmatpush1.bf16.msra.mxu0 0
  %123 = vmatprep.subr.bf16.mxu0 0
  %124 = vmatpush1.bf16.msra.mxu0 0
  %125 = vmatprep.subr.bf16.mxu0 0
  %126 = vmatpush1.bf16.msra.mxu0 0
  %127 = vmatprep.subr.bf16.mxu0 0
  %128 = vmatpush1.bf16.msra.mxu0 0
  %129 = vmatprep.mubr.bf16.mxu0 0
  %130 = vmatmul.mubr.bf16.gmra.mrb[0].mxu0 %v47
  %v131 = vpop.f32.mrb[0].mxu0
  %v132 = vadd.f32 %v41, %v131
  %v133 = vpop.f32.mrb[0].mxu0
  %v134 = vpop.f32.mrb[0].mxu0
  %v135 = vadd.f32 %v41, %v134
  %v136 = vpop.f32.mrb[0].mxu0
  %137 = vdwg.mxu0
  %v138 = vld [vmem:[%s3] sm:$0xff]
  %v139 = vld [vmem:[%s3 + $0x8] sm:$0x3]
  %v140 = vadd.f32 %v132, %v138
  %v141 = vadd.f32 %v135, %v139
  %142 = vst [vmem:[%s4] sm:$0xff] %v140
  %143 = vst [vmem:[%s4 + $0x8] sm:$0x3] %v141
  // Predicated region
  $region18: #{maskclip_backbone_forward.14} parent=0 // pred_check
    _
  $region19: #{maskclip_backbone_forward.14} parent=0 // pred_check_branch
    %145 = sbr.rel (0) target = $region21
  $region20: #{maskclip_backbone_forward.14} parent=0 // pred_region
    _
  $region21: #{maskclip_backbone_forward.14} parent=0 // pred_fallthru
    _
  // Predicated region
  $region22: #{maskclip_backbone_forward.14} parent=0 // pred_check
    _
  $region23: #{maskclip_backbone_forward.14} parent=0 // pred_check_branch
    %147 = sbr.rel (0) target = $region25
  $region24: #{maskclip_backbone_forward.14} parent=0 // pred_region
    _
  $region25: #{maskclip_backbone_forward.14} parent=0 // pred_fallthru
    _

// kernel: maskclip_backbone_forward.19
$region0: #{maskclip_backbone_forward.19}
  #allocation0 [shape = 'u32[]', space=smem, size = 0x4, offset = 0x4, fixed_abs, tag = 'smem constant byte address 0x4 - core index']
  #allocation1 [shape = 'u32[144,128]{1,0:T(1,128)}', space=vmem, size = 0x12000, scoped, tag = 'internal scratch']
  %s0 = inlined_call_operand.vmem [shape: f32[10,128], index: 0, kind: input, shape index: {}]
  %s1 = inlined_call_operand.vmem [shape: f32[1,128], index: 1, kind: input, shape index: {}]
  %s2 = inlined_call_operand.vmem [shape: f32[1,128], index: 2, kind: input, shape index: {}]
  %s3 = inlined_call_operand.vmem [shape: bf16[128,128], index: 3, kind: input, shape index: {}]
  %s4 = inlined_call_operand.vmem [shape: f32[10,128], index: 4, kind: output, shape index: {}]
  %s5 = sld [smem:[#allocation0]]
  $region26: #{maskclip_backbone_forward.19} parent=0
    _
  %s7 = ssub.s32 1, %s5
  %s8 = scalar_select 0, %s7, %s5
  // Predicated region
  $region2: #{maskclip_backbone_forward.19} parent=0 // pred_check
    _
  $region3: #{maskclip_backbone_forward.19} parent=0 // pred_check_branch
    %10 = sbr.rel (0) target = $region5
  $region4: #{maskclip_backbone_forward.19} parent=0 // pred_region
    _
  $region5: #{maskclip_backbone_forward.19} parent=0 // pred_fallthru
    _
  // Predicated region
  $region6: #{maskclip_backbone_forward.19} parent=0 // pred_check
    _
  $region7: #{maskclip_backbone_forward.19} parent=0 // pred_check_branch
    %12 = sbr.rel (0) target = $region9
  $region8: #{maskclip_backbone_forward.19} parent=0 // pred_region
    _
  $region9: #{maskclip_backbone_forward.19} parent=0 // pred_fallthru
    _
  // Predicated region
  $region10: #{maskclip_backbone_forward.19} parent=0 // pred_check
    _
  $region11: #{maskclip_backbone_forward.19} parent=0 // pred_check_branch
    %14 = sbr.rel (0) target = $region13
  $region12: #{maskclip_backbone_forward.19} parent=0 // pred_region
    _
  $region13: #{maskclip_backbone_forward.19} parent=0 // pred_fallthru
    _
  // Predicated region
  $region14: #{maskclip_backbone_forward.19} parent=0 // pred_check
    _
  $region15: #{maskclip_backbone_forward.19} parent=0 // pred_check_branch
    %16 = sbr.rel (0) target = $region17
  $region16: #{maskclip_backbone_forward.19} parent=0 // pred_region
    _
  $region17: #{maskclip_backbone_forward.19} parent=0 // pred_fallthru
    _
  %v18 = vld [vmem:[%s0] sm:$0xff]
  %v19 = vld [vmem:[%s0 + $0x8] sm:$0x3]
  %20 = vadd.xlane.f32.xlu0 %v18
  %v21 = vpop.xlane.xlu0 %20
  %vm22 = vcmask 1041408
  %v23 = vsel %vm22, %v19, 0.0
  %24 = vadd.xlane.f32.xlu0 %v23
  %v25 = vpop.xlane.xlu0 %24
  %v26 = vrcp.pop 128.0
  %v27 = vmul.f32 %v21, %v26
  %v28 = vmul.f32 %v25, %v26
  %v29 = vsub.f32 %v18, %v27
  %v30 = vsub.f32 %v19, %v28
  %v31 = vmul.f32 %v29, %v29
  %v32 = vmul.f32 %v30, %v30
  %33 = vadd.xlane.f32.xlu0 %v31
  %v34 = vpop.xlane.xlu0 %33
  %v35 = vsel %vm22, %v32, 0.0
  %36 = vadd.xlane.f32.xlu0 %v35
  %v37 = vpop.xlane.xlu0 %36
  %v38 = vmul.f32 %v34, %v26
  %v39 = vmul.f32 %v37, %v26
  %v40 = vadd.f32 %v38, 1e-05
  %v41 = vadd.f32 %v39, 1e-05
  %v42 = vrsqrt.pop %v40
  %v43 = vrsqrt.pop %v41
  %v44 = vmul.f32 %v29, %v42
  %v45 = vmul.f32 %v30, %v43
  %v46 = vld [vmem:[%s1] sm:$0x1]
  %v48 = vlaneseq
  %v49 = vshrl.u32 %v48, 7
  %v50 = vsub.s32 0, %v49
  %v51 = vrot.slane %v46, %v50
  %v53 = vmul.f32 %v44, %v51
  %v54 = vmul.f32 %v45, %v51
  %v55 = vld [vmem:[%s2] sm:$0x1]
  %v57 = vlaneseq
  %v58 = vshrl.u32 %v57, 7
  %v59 = vsub.s32 0, %v58
  %v60 = vrot.slane %v55, %v59
  %v62 = vadd.f32 %v53, %v60
  %v63 = vadd.f32 %v54, %v60
  %v64 = vpack.c.bf16 %v63, %v62
  %v65 = vld [vmem:[%s3] sm:$0xf]
  %v66 = vld [vmem:[%s3 + $0x4] sm:$0xf]
  %v67 = vld [vmem:[%s3 + $0x8] sm:$0xf]
  %v68 = vld [vmem:[%s3 + $0xc] sm:$0xf]
  %v69 = vld [vmem:[%s3 + $0x10] sm:$0xf]
  %v70 = vld [vmem:[%s3 + $0x14] sm:$0xf]
  %v71 = vld [vmem:[%s3 + $0x18] sm:$0xf]
  %v72 = vld [vmem:[%s3 + $0x1c] sm:$0xf]
  %v73 = vld [vmem:[%s3 + $0x20] sm:$0xf]
  %v74 = vld [vmem:[%s3 + $0x24] sm:$0xf]
  %v75 = vld [vmem:[%s3 + $0x28] sm:$0xf]
  %v76 = vld [vmem:[%s3 + $0x2c] sm:$0xf]
  %v77 = vld [vmem:[%s3 + $0x30] sm:$0xf]
  %v78 = vld [vmem:[%s3 + $0x34] sm:$0xf]
  %v79 = vld [vmem:[%s3 + $0x38] sm:$0xf]
  %v80 = vld [vmem:[%s3 + $0x3c] sm:$0xf]
  %v97 = vunpack.c.l.b16 %v65
  %v98 = vunpack.c.l.b16 %v66
  %v99 = vunpack.c.l.b16 %v67
  %v100 = vunpack.c.l.b16 %v68
  %v101 = vunpack.c.l.b16 %v69
  %v102 = vunpack.c.l.b16 %v70
  %v103 = vunpack.c.l.b16 %v71
  %v104 = vunpack.c.l.b16 %v72
  %v105 = vunpack.c.l.b16 %v73
  %v106 = vunpack.c.l.b16 %v74
  %v107 = vunpack.c.l.b16 %v75
  %v108 = vunpack.c.l.b16 %v76
  %v109 = vunpack.c.l.b16 %v77
  %v110 = vunpack.c.l.b16 %v78
  %v111 = vunpack.c.l.b16 %v79
  %v112 = vunpack.c.l.b16 %v80
  %v113 = vpack.c.b16 %v98, %v97
  %v114 = vpack.c.b16 %v100, %v99
  %v115 = vpack.c.b16 %v102, %v101
  %v116 = vpack.c.b16 %v104, %v103
  %v117 = vpack.c.b16 %v106, %v105
  %v118 = vpack.c.b16 %v108, %v107
  %v119 = vpack.c.b16 %v110, %v109
  %v120 = vpack.c.b16 %v112, %v111
  %129 = vmatprep.subr.bf16.mxu0 0
  %130 = vmatpush1.bf16.msra.mxu0 %v113
  %131 = vmatprep.subr.bf16.mxu0 0
  %132 = vmatpush1.bf16.msra.mxu0 %v114
  %133 = vmatprep.subr.bf16.mxu0 0
  %134 = vmatpush1.bf16.msra.mxu0 %v115
  %135 = vmatprep.subr.bf16.mxu0 0
  %136 = vmatpush1.bf16.msra.mxu0 %v116
  %137 = vmatprep.subr.bf16.mxu0 0
  %138 = vmatpush1.bf16.msra.mxu0 %v117
  %139 = vmatprep.subr.bf16.mxu0 0
  %140 = vmatpush1.bf16.msra.mxu0 %v118
  %141 = vmatprep.subr.bf16.mxu0 0
  %142 = vmatpush1.bf16.msra.mxu0 %v119
  %143 = vmatprep.subr.bf16.mxu0 0
  %144 = vmatpush1.bf16.msra.mxu0 %v120
  %145 = vmatprep.subr.bf16.mxu0 0
  %146 = vmatpush1.bf16.msra.mxu0 0
  %147 = vmatprep.subr.bf16.mxu0 0
  %148 = vmatpush1.bf16.msra.mxu0 0
  %149 = vmatprep.subr.bf16.mxu0 0
  %150 = vmatpush1.bf16.msra.mxu0 0
  %151 = vmatprep.subr.bf16.mxu0 0
  %152 = vmatpush1.bf16.msra.mxu0 0
  %153 = vmatprep.subr.bf16.mxu0 0
  %154 = vmatpush1.bf16.msra.mxu0 0
  %155 = vmatprep.subr.bf16.mxu0 0
  %156 = vmatpush1.bf16.msra.mxu0 0
  %157 = vmatprep.subr.bf16.mxu0 0
  %158 = vmatpush1.bf16.msra.mxu0 0
  %159 = vmatprep.subr.bf16.mxu0 0
  %160 = vmatpush1.bf16.msra.mxu0 0
  %161 = vmatprep.mubr.bf16.mxu0 0
  %162 = vmatmul.mubr.bf16.gmra.mrb[0].mxu0 %v64
  %v163 = vpop.f32.mrb[0].mxu0
  %v164 = vadd.f32 0.0, %v163
  %v165 = vpop.f32.mrb[0].mxu0
  %v166 = vpop.f32.mrb[0].mxu0
  %v167 = vadd.f32 0.0, %v166
  %v168 = vpop.f32.mrb[0].mxu0
  %169 = vdwg.mxu0
  %170 = vst [vmem:[%s4] sm:$0xff] %v164
  %171 = vst [vmem:[%s4 + $0x8] sm:$0x3] %v167
  // Predicated region
  $region18: #{maskclip_backbone_forward.19} parent=0 // pred_check
    _
  $region19: #{maskclip_backbone_forward.19} parent=0 // pred_check_branch
    %173 = sbr.rel (0) target = $region21
  $region20: #{maskclip_backbone_forward.19} parent=0 // pred_region
    _
  $region21: #{maskclip_backbone_forward.19} parent=0 // pred_fallthru
    _
  // Predicated region
  $region22: #{maskclip_backbone_forward.19} parent=0 // pred_check
    _
  $region23: #{maskclip_backbone_forward.19} parent=0 // pred_check_branch
    %175 = sbr.rel (0) target = $region25
  $region24: #{maskclip_backbone_forward.19} parent=0 // pred_region
    _
  $region25: #{maskclip_backbone_forward.19} parent=0 // pred_fallthru
    _

// kernel: maskclip_backbone_forward.16
$region0: #{maskclip_backbone_forward.16}
  #allocation0 [shape = 'u32[]', space=smem, size = 0x4, offset = 0x4, fixed_abs, tag = 'smem constant byte address 0x4 - core index']
  #allocation1 [shape = 'u32[144,128]{1,0:T(1,128)}', space=vmem, size = 0x12000, scoped, tag = 'internal scratch']
  %s0 = inlined_call_operand.vmem [shape: f32[10,128], index: 0, kind: input, shape index: {}]
  %s1 = inlined_call_operand.vmem [shape: f32[1,128], index: 1, kind: input, shape index: {}]
  %s2 = inlined_call_operand.vmem [shape: f32[1,128], index: 2, kind: input, shape index: {}]
  %s3 = inlined_call_operand.vmem [shape: bf16[128,128], index: 3, kind: input, shape index: {}]
  %s4 = inlined_call_operand.vmem [shape: f32[1,128], index: 4, kind: input, shape index: {}]
  %s5 = inlined_call_operand.vmem [shape: bf16[10,128], index: 5, kind: output, shape index: {}]
  %s6 = sld [smem:[#allocation0]]
  $region30: #{maskclip_backbone_forward.16} parent=0
    _
  %s8 = ssub.s32 1, %s6
  %s9 = scalar_select 0, %s8, %s6
  // Predicated region
  $region2: #{maskclip_backbone_forward.16} parent=0 // pred_check
    _
  $region3: #{maskclip_backbone_forward.16} parent=0 // pred_check_branch
    %11 = sbr.rel (0) target = $region5
  $region4: #{maskclip_backbone_forward.16} parent=0 // pred_region
    _
  $region5: #{maskclip_backbone_forward.16} parent=0 // pred_fallthru
    _
  // Predicated region
  $region6: #{maskclip_backbone_forward.16} parent=0 // pred_check
    _
  $region7: #{maskclip_backbone_forward.16} parent=0 // pred_check_branch
    %13 = sbr.rel (0) target = $region9
  $region8: #{maskclip_backbone_forward.16} parent=0 // pred_region
    _
  $region9: #{maskclip_backbone_forward.16} parent=0 // pred_fallthru
    _
  // Predicated region
  $region10: #{maskclip_backbone_forward.16} parent=0 // pred_check
    _
  $region11: #{maskclip_backbone_forward.16} parent=0 // pred_check_branch
    %15 = sbr.rel (0) target = $region13
  $region12: #{maskclip_backbone_forward.16} parent=0 // pred_region
    _
  $region13: #{maskclip_backbone_forward.16} parent=0 // pred_fallthru
    _
  // Predicated region
  $region14: #{maskclip_backbone_forward.16} parent=0 // pred_check
    _
  $region15: #{maskclip_backbone_forward.16} parent=0 // pred_check_branch
    %17 = sbr.rel (0) target = $region17
  $region16: #{maskclip_backbone_forward.16} parent=0 // pred_region
    _
  $region17: #{maskclip_backbone_forward.16} parent=0 // pred_fallthru
    _
  // Predicated region
  $region18: #{maskclip_backbone_forward.16} parent=0 // pred_check
    _
  $region19: #{maskclip_backbone_forward.16} parent=0 // pred_check_branch
    %19 = sbr.rel (0) target = $region21
  $region20: #{maskclip_backbone_forward.16} parent=0 // pred_region
    _
  $region21: #{maskclip_backbone_forward.16} parent=0 // pred_fallthru
    _
  %v21 = vld [vmem:[%s0] sm:$0xff]
  %v22 = vld [vmem:[%s0 + $0x8] sm:$0x3]
  %23 = vadd.xlane.f32.xlu0 %v21
  %v24 = vpop.xlane.xlu0 %23
  %vm25 = vcmask 1041408
  %v26 = vsel %vm25, %v22, 0.0
  %27 = vadd.xlane.f32.xlu0 %v26
  %v28 = vpop.xlane.xlu0 %27
  %v29 = vrcp.pop 128.0
  %v30 = vmul.f32 %v24, %v29
  %v31 = vmul.f32 %v28, %v29
  %v32 = vsub.f32 %v21, %v30
  %v33 = vsub.f32 %v22, %v31
  %v34 = vmul.f32 %v32, %v32
  %v35 = vmul.f32 %v33, %v33
  %36 = vadd.xlane.f32.xlu0 %v34
  %v37 = vpop.xlane.xlu0 %36
  %v38 = vsel %vm25, %v35, 0.0
  %39 = vadd.xlane.f32.xlu0 %v38
  %v40 = vpop.xlane.xlu0 %39
  %v41 = vmul.f32 %v37, %v29
  %v42 = vmul.f32 %v40, %v29
  %v43 = vadd.f32 %v41, 1e-05
  %v44 = vadd.f32 %v42, 1e-05
  %v45 = vrsqrt.pop %v43
  %v46 = vrsqrt.pop %v44
  %v47 = vmul.f32 %v32, %v45
  %v48 = vmul.f32 %v33, %v46
  %v49 = vld [vmem:[%s1] sm:$0x1]
  %v51 = vlaneseq
  %v52 = vshrl.u32 %v51, 7
  %v53 = vsub.s32 0, %v52
  %v54 = vrot.slane %v49, %v53
  %v56 = vmul.f32 %v47, %v54
  %v57 = vmul.f32 %v48, %v54
  %v58 = vld [vmem:[%s2] sm:$0x1]
  %v60 = vlaneseq
  %v61 = vshrl.u32 %v60, 7
  %v62 = vsub.s32 0, %v61
  %v63 = vrot.slane %v58, %v62
  %v65 = vadd.f32 %v56, %v63
  %v66 = vadd.f32 %v57, %v63
  %v67 = vpack.c.bf16 %v66, %v65
  %v68 = vld [vmem:[%s3] sm:$0xf]
  %v69 = vld [vmem:[%s3 + $0x4] sm:$0xf]
  %v70 = vld [vmem:[%s3 + $0x8] sm:$0xf]
  %v71 = vld [vmem:[%s3 + $0xc] sm:$0xf]
  %v72 = vld [vmem:[%s3 + $0x10] sm:$0xf]
  %v73 = vld [vmem:[%s3 + $0x14] sm:$0xf]
  %v74 = vld [vmem:[%s3 + $0x18] sm:$0xf]
  %v75 = vld [vmem:[%s3 + $0x1c] sm:$0xf]
  %v76 = vld [vmem:[%s3 + $0x20] sm:$0xf]
  %v77 = vld [vmem:[%s3 + $0x24] sm:$0xf]
  %v78 = vld [vmem:[%s3 + $0x28] sm:$0xf]
  %v79 = vld [vmem:[%s3 + $0x2c] sm:$0xf]
  %v80 = vld [vmem:[%s3 + $0x30] sm:$0xf]
  %v81 = vld [vmem:[%s3 + $0x34] sm:$0xf]
  %v82 = vld [vmem:[%s3 + $0x38] sm:$0xf]
  %v83 = vld [vmem:[%s3 + $0x3c] sm:$0xf]
  %v84 = vld [vmem:[%s4] sm:$0x1]
  %v86 = vlaneseq
  %v87 = vshrl.u32 %v86, 7
  %v88 = vsub.s32 0, %v87
  %v89 = vrot.slane %v84, %v88
  %v107 = vunpack.c.l.b16 %v68
  %v108 = vunpack.c.l.b16 %v69
  %v109 = vunpack.c.l.b16 %v70
  %v110 = vunpack.c.l.b16 %v71
  %v111 = vunpack.c.l.b16 %v72
  %v112 = vunpack.c.l.b16 %v73
  %v113 = vunpack.c.l.b16 %v74
  %v114 = vunpack.c.l.b16 %v75
  %v115 = vunpack.c.l.b16 %v76
  %v116 = vunpack.c.l.b16 %v77
  %v117 = vunpack.c.l.b16 %v78
  %v118 = vunpack.c.l.b16 %v79
  %v119 = vunpack.c.l.b16 %v80
  %v120 = vunpack.c.l.b16 %v81
  %v121 = vunpack.c.l.b16 %v82
  %v122 = vunpack.c.l.b16 %v83
  %v123 = vpack.c.b16 %v108, %v107
  %v124 = vpack.c.b16 %v110, %v109
  %v125 = vpack.c.b16 %v112, %v111
  %v126 = vpack.c.b16 %v114, %v113
  %v127 = vpack.c.b16 %v116, %v115
  %v128 = vpack.c.b16 %v118, %v117
  %v129 = vpack.c.b16 %v120, %v119
  %v130 = vpack.c.b16 %v122, %v121
  %139 = vmatprep.subr.bf16.mxu0 0
  %140 = vmatpush1.bf16.msra.mxu0 %v123
  %141 = vmatprep.subr.bf16.mxu0 0
  %142 = vmatpush1.bf16.msra.mxu0 %v124
  %143 = vmatprep.subr.bf16.mxu0 0
  %144 = vmatpush1.bf16.msra.mxu0 %v125
  %145 = vmatprep.subr.bf16.mxu0 0
  %146 = vmatpush1.bf16.msra.mxu0 %v126
  %147 = vmatprep.subr.bf16.mxu0 0
  %148 = vmatpush1.bf16.msra.mxu0 %v127
  %149 = vmatprep.subr.bf16.mxu0 0
  %150 = vmatpush1.bf16.msra.mxu0 %v128
  %151 = vmatprep.subr.bf16.mxu0 0
  %152 = vmatpush1.bf16.msra.mxu0 %v129
  %153 = vmatprep.subr.bf16.mxu0 0
  %154 = vmatpush1.bf16.msra.mxu0 %v130
  %155 = vmatprep.subr.bf16.mxu0 0
  %156 = vmatpush1.bf16.msra.mxu0 0
  %157 = vmatprep.subr.bf16.mxu0 0
  %158 = vmatpush1.bf16.msra.mxu0 0
  %159 = vmatprep.subr.bf16.mxu0 0
  %160 = vmatpush1.bf16.msra.mxu0 0
  %161 = vmatprep.subr.bf16.mxu0 0
  %162 = vmatpush1.bf16.msra.mxu0 0
  %163 = vmatprep.subr.bf16.mxu0 0
  %164 = vmatpush1.bf16.msra.mxu0 0
  %165 = vmatprep.subr.bf16.mxu0 0
  %166 = vmatpush1.bf16.msra.mxu0 0
  %167 = vmatprep.subr.bf16.mxu0 0
  %168 = vmatpush1.bf16.msra.mxu0 0
  %169 = vmatprep.subr.bf16.mxu0 0
  %170 = vmatpush1.bf16.msra.mxu0 0
  %171 = vmatprep.mubr.bf16.mxu0 0
  %172 = vmatmul.mubr.bf16.gmra.mrb[0].mxu0 %v67
  %v173 = vpop.f32.mrb[0].mxu0
  %v174 = vadd.f32 %v89, %v173
  %v175 = vpop.f32.mrb[0].mxu0
  %v176 = vpop.f32.mrb[0].mxu0
  %v177 = vadd.f32 %v89, %v176
  %v178 = vpop.f32.mrb[0].mxu0
  %179 = vdwg.mxu0
  %v180 = vpack.c.bf16 %v177, %v174
  %v182 = vunpack.c.l.b16 %v180
  %v183 = vunpack.c.h.b16 %v180
  %v184 = vpack.c.b16 %v182, %v182
  %v185 = vpack.c.b16 %v183, %v183
  %188 = vst [vmem:[%s5] sm:$0xf] %v184
  %189 = vst [vmem:[%s5 + $0x4] sm:$0x1] %v185
  // Predicated region
  $region22: #{maskclip_backbone_forward.16} parent=0 // pred_check
    _
  $region23: #{maskclip_backbone_forward.16} parent=0 // pred_check_branch
    %191 = sbr.rel (0) target = $region25
  $region24: #{maskclip_backbone_forward.16} parent=0 // pred_region
    _
  $region25: #{maskclip_backbone_forward.16} parent=0 // pred_fallthru
    _
  // Predicated region
  $region26: #{maskclip_backbone_forward.16} parent=0 // pred_check
    _
  $region27: #{maskclip_backbone_forward.16} parent=0 // pred_check_branch
    %193 = sbr.rel (0) target = $region29
  $region28: #{maskclip_backbone_forward.16} parent=0 // pred_region
    _
  $region29: #{maskclip_backbone_forward.16} parent=0 // pred_fallthru
    _

// kernel: maskclip_backbone_forward.15
$region0: #{maskclip_backbone_forward.15}
  #allocation0 [shape = 'u32[]', space=smem, size = 0x4, offset = 0x4, fixed_abs, tag = 'smem constant byte address 0x4 - core index']
  #allocation1 [shape = 'u32[144,128]{1,0:T(1,128)}', space=vmem, size = 0x12000, scoped, tag = 'internal scratch']
  #allocation2 [shape = 'bf16[10,128]{1,0:T(8,128)(2,1)}', space=vmem, size = 0x1000, scoped, tag = 'scratch operand']
  #allocation3 [shape = 'f32[10,128]{1,0:T(8,128)}', space=vmem, size = 0x2000, scoped, tag = 'scratch operand']
  %s0 = inlined_call_operand.vmem [shape: f32[10,128], index: 0, kind: input, shape index: {}]
  %s1 = inlined_call_operand.vmem [shape: f32[1,128], index: 1, kind: input, shape index: {}]
  %s2 = inlined_call_operand.vmem [shape: f32[1,128], index: 2, kind: input, shape index: {}]
  %s3 = inlined_call_operand.vmem [shape: bf16[128,512], index: 3, kind: input, shape index: {}]
  %s4 = inlined_call_operand.vmem [shape: f32[1,512], index: 4, kind: input, shape index: {}]
  %s5 = inlined_call_operand.vmem [shape: bf16[512,128], index: 5, kind: input, shape index: {}]
  %s6 = inlined_call_operand.vmem [shape: f32[1,128], index: 6, kind: input, shape index: {}]
  %s7 = inlined_call_operand.vmem [shape: f32[10,128], index: 7, kind: output, shape index: {}]
  %s8 = sld [smem:[#allocation0]]
  $region46: #{maskclip_backbone_forward.15} parent=0
    _
  %s10 = ssub.s32 1, %s8
  %s11 = scalar_select 0, %s10, %s8
  // Predicated region
  $region2: #{maskclip_backbone_forward.15} parent=0 // pred_check
    _
  $region3: #{maskclip_backbone_forward.15} parent=0 // pred_check_branch
    %13 = sbr.rel (0) target = $region5
  $region4: #{maskclip_backbone_forward.15} parent=0 // pred_region
    _
  $region5: #{maskclip_backbone_forward.15} parent=0 // pred_fallthru
    _
  // Predicated region
  $region6: #{maskclip_backbone_forward.15} parent=0 // pred_check
    _
  $region7: #{maskclip_backbone_forward.15} parent=0 // pred_check_branch
    %15 = sbr.rel (0) target = $region9
  $region8: #{maskclip_backbone_forward.15} parent=0 // pred_region
    _
  $region9: #{maskclip_backbone_forward.15} parent=0 // pred_fallthru
    _
  // Predicated region
  $region10: #{maskclip_backbone_forward.15} parent=0 // pred_check
    _
  $region11: #{maskclip_backbone_forward.15} parent=0 // pred_check_branch
    %17 = sbr.rel (0) target = $region13
  $region12: #{maskclip_backbone_forward.15} parent=0 // pred_region
    _
  $region13: #{maskclip_backbone_forward.15} parent=0 // pred_fallthru
    _
  // Predicated region
  $region14: #{maskclip_backbone_forward.15} parent=0 // pred_check
    _
  $region15: #{maskclip_backbone_forward.15} parent=0 // pred_check_branch
    %19 = sbr.rel (0) target = $region17
  $region16: #{maskclip_backbone_forward.15} parent=0 // pred_region
    _
  $region17: #{maskclip_backbone_forward.15} parent=0 // pred_fallthru
    _
  // Predicated region
  $region18: #{maskclip_backbone_forward.15} parent=0 // pred_check
    _
  $region19: #{maskclip_backbone_forward.15} parent=0 // pred_check_branch
    %21 = sbr.rel (0) target = $region21
  $region20: #{maskclip_backbone_forward.15} parent=0 // pred_region
    _
  $region21: #{maskclip_backbone_forward.15} parent=0 // pred_fallthru
    _
  // Predicated region
  $region22: #{maskclip_backbone_forward.15} parent=0 // pred_check
    _
  $region23: #{maskclip_backbone_forward.15} parent=0 // pred_check_branch
    %23 = sbr.rel (0) target = $region25
  $region24: #{maskclip_backbone_forward.15} parent=0 // pred_region
    _
  $region25: #{maskclip_backbone_forward.15} parent=0 // pred_fallthru
    _
  // Predicated region
  $region26: #{maskclip_backbone_forward.15} parent=0 // pred_check
    _
  $region27: #{maskclip_backbone_forward.15} parent=0 // pred_check_branch
    %25 = sbr.rel (0) target = $region29
  $region28: #{maskclip_backbone_forward.15} parent=0 // pred_region
    _
  $region29: #{maskclip_backbone_forward.15} parent=0 // pred_fallthru
    _
  %p27 = scmp.eq.s32.totalorder 0, 0
  // Predicated region
  $region30: #{maskclip_backbone_forward.15} parent=0 // pred_check
    %p28 = pneg %p27
  $region31: #{maskclip_backbone_forward.15} parent=0 // pred_check_branch
    %30 = sbr.rel (%p28) target = $region33
  $region32: #{maskclip_backbone_forward.15} parent=0 // pred_region
    %v31 = vld [vmem:[%s0] sm:$0xff]
    %v32 = vld [vmem:[%s0 + $0x8] sm:$0x3]
    %33 = vadd.xlane.f32.xlu0 %v31
    %v34 = vpop.xlane.xlu0 %33
    %vm35 = vcmask 1041408
    %v36 = vsel %vm35, %v32, 0.0
    %37 = vadd.xlane.f32.xlu0 %v36
    %v38 = vpop.xlane.xlu0 %37
    %v39 = vrcp.pop 128.0
    %v40 = vmul.f32 %v34, %v39
    %v41 = vmul.f32 %v38, %v39
    %v42 = vsub.f32 %v31, %v40
    %v43 = vsub.f32 %v32, %v41
    %v44 = vmul.f32 %v42, %v42
    %v45 = vmul.f32 %v43, %v43
    %46 = vadd.xlane.f32.xlu0 %v44
    %v47 = vpop.xlane.xlu0 %46
    %v48 = vsel %vm35, %v45, 0.0
    %49 = vadd.xlane.f32.xlu0 %v48
    %v50 = vpop.xlane.xlu0 %49
    %v51 = vmul.f32 %v47, %v39
    %v52 = vmul.f32 %v50, %v39
    %v53 = vadd.f32 %v51, 1e-05
    %v54 = vadd.f32 %v52, 1e-05
    %v55 = vrsqrt.pop %v53
    %v56 = vrsqrt.pop %v54
    %v57 = vmul.f32 %v42, %v55
    %v58 = vmul.f32 %v43, %v56
    %v59 = vld [vmem:[%s1] sm:$0x1]
    %v61 = vlaneseq
    %v62 = vshrl.u32 %v61, 7
    %v63 = vsub.s32 0, %v62
    %v64 = vrot.slane %v59, %v63
    %v66 = vmul.f32 %v57, %v64
    %v67 = vmul.f32 %v58, %v64
    %v68 = vld [vmem:[%s2] sm:$0x1]
    %v70 = vlaneseq
    %v71 = vshrl.u32 %v70, 7
    %v72 = vsub.s32 0, %v71
    %v73 = vrot.slane %v68, %v72
    %v75 = vadd.f32 %v66, %v73
    %v76 = vadd.f32 %v67, %v73
    %v77 = vpack.c.bf16 %v76, %v75
    %v79 = vunpack.c.l.b16 %v77
    %v80 = vunpack.c.h.b16 %v77
    %v81 = vpack.c.b16 %v79, %v79
    %v82 = vpack.c.b16 %v80, %v80
    %85 = vst [vmem:[#allocation2] sm:$0xf] %v81
    %86 = vst [vmem:[#allocation2 + $0x4] sm:$0x1] %v82
    %87 = vst [vmem:[#allocation3] sm:$0xff] 0.0
    %88 = vst [vmem:[#allocation3 + $0x8] sm:$0x3] 0.0
  $region33: #{maskclip_backbone_forward.15} parent=0 // pred_fallthru
    _
  %v89 = vld [vmem:[#allocation2] sm:$0xf]
  %v90 = vld [vmem:[#allocation2 + $0x4] sm:$0x1]
  %v91 = vld [vmem:[%s3] sm:$0xff]
  %v92 = vld [vmem:[%s3 + $0x8] sm:$0xff]
  %v93 = vld [vmem:[%s3 + $0x10] sm:$0xff]
  %v94 = vld [vmem:[%s3 + $0x18] sm:$0xff]
  %v95 = vld [vmem:[%s3 + $0x20] sm:$0xff]
  %v96 = vld [vmem:[%s3 + $0x28] sm:$0xff]
  %v97 = vld [vmem:[%s3 + $0x30] sm:$0xff]
  %v98 = vld [vmem:[%s3 + $0x38] sm:$0xff]
  %v99 = vld [vmem:[%s3 + $0x40] sm:$0xff]
  %v100 = vld [vmem:[%s3 + $0x48] sm:$0xff]
  %v101 = vld [vmem:[%s3 + $0x50] sm:$0xff]
  %v102 = vld [vmem:[%s3 + $0x58] sm:$0xff]
  %v103 = vld [vmem:[%s3 + $0x60] sm:$0xff]
  %v104 = vld [vmem:[%s3 + $0x68] sm:$0xff]
  %v105 = vld [vmem:[%s3 + $0x70] sm:$0xff]
  %v106 = vld [vmem:[%s3 + $0x78] sm:$0xff]
  %v107 = vld [vmem:[%s3 + $0x80] sm:$0xff]
  %v108 = vld [vmem:[%s3 + $0x88] sm:$0xff]
  %v109 = vld [vmem:[%s3 + $0x90] sm:$0xff]
  %v110 = vld [vmem:[%s3 + $0x98] sm:$0xff]
  %v111 = vld [vmem:[%s3 + $0xa0] sm:$0xff]
  %v112 = vld [vmem:[%s3 + $0xa8] sm:$0xff]
  %v113 = vld [vmem:[%s3 + $0xb0] sm:$0xff]
  %v114 = vld [vmem:[%s3 + $0xb8] sm:$0xff]
  %v115 = vld [vmem:[%s3 + $0xc0] sm:$0xff]
  %v116 = vld [vmem:[%s3 + $0xc8] sm:$0xff]
  %v117 = vld [vmem:[%s3 + $0xd0] sm:$0xff]
  %v118 = vld [vmem:[%s3 + $0xd8] sm:$0xff]
  %v119 = vld [vmem:[%s3 + $0xe0] sm:$0xff]
  %v120 = vld [vmem:[%s3 + $0xe8] sm:$0xff]
  %v121 = vld [vmem:[%s3 + $0xf0] sm:$0xff]
  %v122 = vld [vmem:[%s3 + $0xf8] sm:$0xff]
  %v123 = vld [vmem:[%s4] sm:$0xf]
  %v125 = vlaneseq
  %v126 = vshrl.u32 %v125, 7
  %v127 = vsub.s32 0, %v126
  %v128 = vrot.slane %v123, %v127
  %v129 = vlaneseq
  %v130 = vshrl.u32 %v129, 7
  %v131 = vsub.s32 1, %v130
  %v132 = vrot.slane %v123, %v131
  %v133 = vlaneseq
  %v134 = vshrl.u32 %v133, 7
  %v135 = vsub.s32 2, %v134
  %v136 = vrot.slane %v123, %v135
  %v137 = vlaneseq
  %v138 = vshrl.u32 %v137, 7
  %v139 = vsub.s32 3, %v138
  %v140 = vrot.slane %v123, %v139
  %v147 = vunpack.c.l.b16 %v89
  %v148 = vunpack.c.l.b16 %v90
  %v149 = vpack.c.b16 %v148, %v147
  %v183 = vunpack.c.l.b16 %v91
  %v184 = vunpack.c.h.b16 %v91
  %v185 = vunpack.c.l.b16 %v92
  %v186 = vunpack.c.h.b16 %v92
  %v187 = vunpack.c.l.b16 %v93
  %v188 = vunpack.c.h.b16 %v93
  %v189 = vunpack.c.l.b16 %v94
  %v190 = vunpack.c.h.b16 %v94
  %v191 = vunpack.c.l.b16 %v95
  %v192 = vunpack.c.h.b16 %v95
  %v193 = vunpack.c.l.b16 %v96
  %v194 = vunpack.c.h.b16 %v96
  %v195 = vunpack.c.l.b16 %v97
  %v196 = vunpack.c.h.b16 %v97
  %v197 = vunpack.c.l.b16 %v98
  %v198 = vunpack.c.h.b16 %v98
  %v199 = vunpack.c.l.b16 %v99
  %v200 = vunpack.c.h.b16 %v99
  %v201 = vunpack.c.l.b16 %v100
  %v202 = vunpack.c.h.b16 %v100
  %v203 = vunpack.c.l.b16 %v101
  %v204 = vunpack.c.h.b16 %v101
  %v205 = vunpack.c.l.b16 %v102
  %v206 = vunpack.c.h.b16 %v102
  %v207 = vunpack.c.l.b16 %v103
  %v208 = vunpack.c.h.b16 %v103
  %v209 = vunpack.c.l.b16 %v104
  %v210 = vunpack.c.h.b16 %v104
  %v211 = vunpack.c.l.b16 %v105
  %v212 = vunpack.c.h.b16 %v105
  %v213 = vunpack.c.l.b16 %v106
  %v214 = vunpack.c.h.b16 %v106
  %v215 = vunpack.c.l.b16 %v107
  %v216 = vunpack.c.h.b16 %v107
  %v217 = vunpack.c.l.b16 %v108
  %v218 = vunpack.c.h.b16 %v108
  %v219 = vunpack.c.l.b16 %v109
  %v220 = vunpack.c.h.b16 %v109
  %v221 = vunpack.c.l.b16 %v110
  %v222 = vunpack.c.h.b16 %v110
  %v223 = vunpack.c.l.b16 %v111
  %v224 = vunpack.c.h.b16 %v111
  %v225 = vunpack.c.l.b16 %v112
  %v226 = vunpack.c.h.b16 %v112
  %v227 = vunpack.c.l.b16 %v113
  %v228 = vunpack.c.h.b16 %v113
  %v229 = vunpack.c.l.b16 %v114
  %v230 = vunpack.c.h.b16 %v114
  %v231 = vunpack.c.l.b16 %v115
  %v232 = vunpack.c.h.b16 %v115
  %v233 = vunpack.c.l.b16 %v116
  %v234 = vunpack.c.h.b16 %v116
  %v235 = vunpack.c.l.b16 %v117
  %v236 = vunpack.c.h.b16 %v117
  %v237 = vunpack.c.l.b16 %v118
  %v238 = vunpack.c.h.b16 %v118
  %v239 = vunpack.c.l.b16 %v119
  %v240 = vunpack.c.h.b16 %v119
  %v241 = vunpack.c.l.b16 %v120
  %v242 = vunpack.c.h.b16 %v120
  %v243 = vunpack.c.l.b16 %v121
  %v244 = vunpack.c.h.b16 %v121
  %v245 = vunpack.c.l.b16 %v122
  %v246 = vunpack.c.h.b16 %v122
  %v247 = vpack.c.b16 %v187, %v183
  %v248 = vpack.c.b16 %v188, %v184
  %v249 = vpack.c.b16 %v189, %v185
  %v250 = vpack.c.b16 %v190, %v186
  %v251 = vpack.c.b16 %v195, %v191
  %v252 = vpack.c.b16 %v196, %v192
  %v253 = vpack.c.b16 %v197, %v193
  %v254 = vpack.c.b16 %v198, %v194
  %v255 = vpack.c.b16 %v203, %v199
  %v256 = vpack.c.b16 %v204, %v200
  %v257 = vpack.c.b16 %v205, %v201
  %v258 = vpack.c.b16 %v206, %v202
  %v259 = vpack.c.b16 %v211, %v207
  %v260 = vpack.c.b16 %v212, %v208
  %v261 = vpack.c.b16 %v213, %v209
  %v262 = vpack.c.b16 %v214, %v210
  %v263 = vpack.c.b16 %v219, %v215
  %v264 = vpack.c.b16 %v220, %v216
  %v265 = vpack.c.b16 %v221, %v217
  %v266 = vpack.c.b16 %v222, %v218
  %v267 = vpack.c.b16 %v227, %v223
  %v268 = vpack.c.b16 %v228, %v224
  %v269 = vpack.c.b16 %v229, %v225
  %v270 = vpack.c.b16 %v230, %v226
  %v271 = vpack.c.b16 %v235, %v231
  %v272 = vpack.c.b16 %v236, %v232
  %v273 = vpack.c.b16 %v237, %v233
  %v274 = vpack.c.b16 %v238, %v234
  %v275 = vpack.c.b16 %v243, %v239
  %v276 = vpack.c.b16 %v244, %v240
  %v277 = vpack.c.b16 %v245, %v241
  %v278 = vpack.c.b16 %v246, %v242
  %311 = vmatprep.subr.bf16.mxu0 %v248
  %312 = vmatpush1.bf16.msra.mxu0 %v247
  %313 = vmatprep.subr.bf16.mxu0 %v252
  %314 = vmatpush1.bf16.msra.mxu0 %v251
  %315 = vmatprep.subr.bf16.mxu0 %v256
  %316 = vmatpush1.bf16.msra.mxu0 %v255
  %317 = vmatprep.subr.bf16.mxu0 %v260
  %318 = vmatpush1.bf16.msra.mxu0 %v259
  %319 = vmatprep.subr.bf16.mxu0 %v264
  %320 = vmatpush1.bf16.msra.mxu0 %v263
  %321 = vmatprep.subr.bf16.mxu0 %v268
  %322 = vmatpush1.bf16.msra.mxu0 %v267
  %323 = vmatprep.subr.bf16.mxu0 %v272
  %324 = vmatpush1.bf16.msra.mxu0 %v271
  %325 = vmatprep.subr.bf16.mxu0 %v276
  %326 = vmatpush1.bf16.msra.mxu0 %v275
  %327 = vmatprep.subr.bf16.mxu0 0
  %328 = vmatpush1.bf16.msra.mxu0 0
  %329 = vmatprep.subr.bf16.mxu0 0
  %330 = vmatpush1.bf16.msra.mxu0 0
  %331 = vmatprep.subr.bf16.mxu0 0
  %332 = vmatpush1.bf16.msra.mxu0 0
  %333 = vmatprep.subr.bf16.mxu0 0
  %334 = vmatpush1.bf16.msra.mxu0 0
  %335 = vmatprep.subr.bf16.mxu0 0
  %336 = vmatpush1.bf16.msra.mxu0 0
  %337 = vmatprep.subr.bf16.mxu0 0
  %338 = vmatpush1.bf16.msra.mxu0 0
  %339 = vmatprep.subr.bf16.mxu0 0
  %340 = vmatpush1.bf16.msra.mxu0 0
  %341 = vmatprep.subr.bf16.mxu0 0
  %342 = vmatpush1.bf16.msra.mxu0 0
  %343 = vmatprep.mubr.bf16.mxu0 0
  %344 = vmatmul.mubr.bf16.gmra.mrb[0].mxu0 %v149
  %v345 = vpop.f32.mrb[0].mxu0
  %v346 = vadd.f32 %v128, %v345
  %v347 = vpop.f32.mrb[0].mxu0
  %v348 = vadd.f32 %v132, %v347
  %v349 = vpop.f32.mrb[0].mxu0
  %v350 = vadd.f32 %v128, %v349
  %v351 = vpop.f32.mrb[0].mxu0
  %v352 = vadd.f32 %v132, %v351
  %353 = vdwg.mxu0
  %354 = vmatprep.subr.bf16.mxu0 %v250
  %355 = vmatpush1.bf16.msra.mxu0 %v249
  %356 = vmatprep.subr.bf16.mxu0 %v254
  %357 = vmatpush1.bf16.msra.mxu0 %v253
  %358 = vmatprep.subr.bf16.mxu0 %v258
  %359 = vmatpush1.bf16.msra.mxu0 %v257
  %360 = vmatprep.subr.bf16.mxu0 %v262
  %361 = vmatpush1.bf16.msra.mxu0 %v261
  %362 = vmatprep.subr.bf16.mxu0 %v266
  %363 = vmatpush1.bf16.msra.mxu0 %v265
  %364 = vmatprep.subr.bf16.mxu0 %v270
  %365 = vmatpush1.bf16.msra.mxu0 %v269
  %366 = vmatprep.subr.bf16.mxu0 %v274
  %367 = vmatpush1.bf16.msra.mxu0 %v273
  %368 = vmatprep.subr.bf16.mxu0 %v278
  %369 = vmatpush1.bf16.msra.mxu0 %v277
  %370 = vmatprep.subr.bf16.mxu0 0
  %371 = vmatpush1.bf16.msra.mxu0 0
  %372 = vmatprep.subr.bf16.mxu0 0
  %373 = vmatpush1.bf16.msra.mxu0 0
  %374 = vmatprep.subr.bf16.mxu0 0
  %375 = vmatpush1.bf16.msra.mxu0 0
  %376 = vmatprep.subr.bf16.mxu0 0
  %377 = vmatpush1.bf16.msra.mxu0 0
  %378 = vmatprep.subr.bf16.mxu0 0
  %379 = vmatpush1.bf16.msra.mxu0 0
  %380 = vmatprep.subr.bf16.mxu0 0
  %381 = vmatpush1.bf16.msra.mxu0 0
  %382 = vmatprep.subr.bf16.mxu0 0
  %383 = vmatpush1.bf16.msra.mxu0 0
  %384 = vmatprep.subr.bf16.mxu0 0
  %385 = vmatpush1.bf16.msra.mxu0 0
  %386 = vmatprep.mubr.bf16.mxu0 0
  %387 = vmatmul.mubr.bf16.gmra.mrb[0].mxu0 %v149
  %v388 = vpop.f32.mrb[0].mxu0
  %v389 = vadd.f32 %v136, %v388
  %v390 = vpop.f32.mrb[0].mxu0
  %v391 = vadd.f32 %v140, %v390
  %v392 = vpop.f32.mrb[0].mxu0
  %v393 = vadd.f32 %v136, %v392
  %v394 = vpop.f32.mrb[0].mxu0
  %v395 = vadd.f32 %v140, %v394
  %396 = vdwg.mxu0
  %v397 = vmul.f32 %v346, 1.702
  %v398 = vmul.f32 %v348, 1.702
  %v399 = vmul.f32 %v389, 1.702
  %v400 = vmul.f32 %v391, 1.702
  %v401 = vmul.f32 %v350, 1.702
  %v402 = vmul.f32 %v352, 1.702
  %v403 = vmul.f32 %v393, 1.702
  %v404 = vmul.f32 %v395, 1.702
  %v405 = vxor.u32 %v397, 2147483648
  %v406 = vxor.u32 %v398, 2147483648
  %v407 = vxor.u32 %v399, 2147483648
  %v408 = vxor.u32 %v400, 2147483648
  %v409 = vxor.u32 %v401, 2147483648
  %v410 = vxor.u32 %v402, 2147483648
  %v411 = vxor.u32 %v403, 2147483648
  %v412 = vxor.u32 %v404, 2147483648
  %v413 = vmul.f32 %v405, 1.442695
  %v414 = vpow.pop %v413
  %v415 = vmul.f32 %v406, 1.442695
  %v416 = vpow.pop %v415
  %v417 = vmul.f32 %v407, 1.442695
  %v418 = vpow.pop %v417
  %v419 = vmul.f32 %v408, 1.442695
  %v420 = vpow.pop %v419
  %v421 = vmul.f32 %v409, 1.442695
  %v422 = vpow.pop %v421
  %v423 = vmul.f32 %v410, 1.442695
  %v424 = vpow.pop %v423
  %v425 = vmul.f32 %v411, 1.442695
  %v426 = vpow.pop %v425
  %v427 = vmul.f32 %v412, 1.442695
  %v428 = vpow.pop %v427
  %v429 = vadd.f32 %v414, 1.0
  %v430 = vadd.f32 %v416, 1.0
  %v431 = vadd.f32 %v418, 1.0
  %v432 = vadd.f32 %v420, 1.0
  %v433 = vadd.f32 %v422, 1.0
  %v434 = vadd.f32 %v424, 1.0
  %v435 = vadd.f32 %v426, 1.0
  %v436 = vadd.f32 %v428, 1.0
  %v437 = vrcp.pop %v429
  %v438 = vmul.f32 1.0, %v437
  %v439 = vrcp.pop %v430
  %v440 = vmul.f32 1.0, %v439
  %v441 = vrcp.pop %v431
  %v442 = vmul.f32 1.0, %v441
  %v443 = vrcp.pop %v432
  %v444 = vmul.f32 1.0, %v443
  %v445 = vrcp.pop %v433
  %v446 = vmul.f32 1.0, %v445
  %v447 = vrcp.pop %v434
  %v448 = vmul.f32 1.0, %v447
  %v449 = vrcp.pop %v435
  %v450 = vmul.f32 1.0, %v449
  %v451 = vrcp.pop %v436
  %v452 = vmul.f32 1.0, %v451
  %v453 = vmul.f32 %v346, %v438
  %v454 = vmul.f32 %v348, %v440
  %v455 = vmul.f32 %v389, %v442
  %v456 = vmul.f32 %v391, %v444
  %v457 = vmul.f32 %v350, %v446
  %v458 = vmul.f32 %v352, %v448
  %v459 = vmul.f32 %v393, %v450
  %v460 = vmul.f32 %v395, %v452
  %v461 = vld [vmem:[#allocation3] sm:$0xff]
  %v462 = vld [vmem:[#allocation3 + $0x8] sm:$0x3]
  %v463 = vpack.c.bf16 %v457, %v453
  %v464 = vpack.c.bf16 %v458, %v454
  %v465 = vpack.c.bf16 %v459, %v455
  %v466 = vpack.c.bf16 %v460, %v456
  %v467 = vld [vmem:[%s5] sm:$0xf]
  %v468 = vld [vmem:[%s5 + $0x4] sm:$0xf]
  %v469 = vld [vmem:[%s5 + $0x8] sm:$0xf]
  %v470 = vld [vmem:[%s5 + $0xc] sm:$0xf]
  %v471 = vld [vmem:[%s5 + $0x10] sm:$0xf]
  %v472 = vld [vmem:[%s5 + $0x14] sm:$0xf]
  %v473 = vld [vmem:[%s5 + $0x18] sm:$0xf]
  %v474 = vld [vmem:[%s5 + $0x1c] sm:$0xf]
  %v475 = vld [vmem:[%s5 + $0x20] sm:$0xf]
  %v476 = vld [vmem:[%s5 + $0x24] sm:$0xf]
  %v477 = vld [vmem:[%s5 + $0x28] sm:$0xf]
  %v478 = vld [vmem:[%s5 + $0x2c] sm:$0xf]
  %v479 = vld [vmem:[%s5 + $0x30] sm:$0xf]
  %v480 = vld [vmem:[%s5 + $0x34] sm:$0xf]
  %v481 = vld [vmem:[%s5 + $0x38] sm:$0xf]
  %v482 = vld [vmem:[%s5 + $0x3c] sm:$0xf]
  %v483 = vld [vmem:[%s5 + $0x40] sm:$0xf]
  %v484 = vld [vmem:[%s5 + $0x44] sm:$0xf]
  %v485 = vld [vmem:[%s5 + $0x48] sm:$0xf]
  %v486 = vld [vmem:[%s5 + $0x4c] sm:$0xf]
  %v487 = vld [vmem:[%s5 + $0x50] sm:$0xf]
  %v488 = vld [vmem:[%s5 + $0x54] sm:$0xf]
  %v489 = vld [vmem:[%s5 + $0x58] sm:$0xf]
  %v490 = vld [vmem:[%s5 + $0x5c] sm:$0xf]
  %v491 = vld [vmem:[%s5 + $0x60] sm:$0xf]
  %v492 = vld [vmem:[%s5 + $0x64] sm:$0xf]
  %v493 = vld [vmem:[%s5 + $0x68] sm:$0xf]
  %v494 = vld [vmem:[%s5 + $0x6c] sm:$0xf]
  %v495 = vld [vmem:[%s5 + $0x70] sm:$0xf]
  %v496 = vld [vmem:[%s5 + $0x74] sm:$0xf]
  %v497 = vld [vmem:[%s5 + $0x78] sm:$0xf]
  %v498 = vld [vmem:[%s5 + $0x7c] sm:$0xf]
  %v499 = vld [vmem:[%s5 + $0x80] sm:$0xf]
  %v500 = vld [vmem:[%s5 + $0x84] sm:$0xf]
  %v501 = vld [vmem:[%s5 + $0x88] sm:$0xf]
  %v502 = vld [vmem:[%s5 + $0x8c] sm:$0xf]
  %v503 = vld [vmem:[%s5 + $0x90] sm:$0xf]
  %v504 = vld [vmem:[%s5 + $0x94] sm:$0xf]
  %v505 = vld [vmem:[%s5 + $0x98] sm:$0xf]
  %v506 = vld [vmem:[%s5 + $0x9c] sm:$0xf]
  %v507 = vld [vmem:[%s5 + $0xa0] sm:$0xf]
  %v508 = vld [vmem:[%s5 + $0xa4] sm:$0xf]
  %v509 = vld [vmem:[%s5 + $0xa8] sm:$0xf]
  %v510 = vld [vmem:[%s5 + $0xac] sm:$0xf]
  %v511 = vld [vmem:[%s5 + $0xb0] sm:$0xf]
  %v512 = vld [vmem:[%s5 + $0xb4] sm:$0xf]
  %v513 = vld [vmem:[%s5 + $0xb8] sm:$0xf]
  %v514 = vld [vmem:[%s5 + $0xbc] sm:$0xf]
  %v515 = vld [vmem:[%s5 + $0xc0] sm:$0xf]
  %v516 = vld [vmem:[%s5 + $0xc4] sm:$0xf]
  %v517 = vld [vmem:[%s5 + $0xc8] sm:$0xf]
  %v518 = vld [vmem:[%s5 + $0xcc] sm:$0xf]
  %v519 = vld [vmem:[%s5 + $0xd0] sm:$0xf]
  %v520 = vld [vmem:[%s5 + $0xd4] sm:$0xf]
  %v521 = vld [vmem:[%s5 + $0xd8] sm:$0xf]
  %v522 = vld [vmem:[%s5 + $0xdc] sm:$0xf]
  %v523 = vld [vmem:[%s5 + $0xe0] sm:$0xf]
  %v524 = vld [vmem:[%s5 + $0xe4] sm:$0xf]
  %v525 = vld [vmem:[%s5 + $0xe8] sm:$0xf]
  %v526 = vld [vmem:[%s5 + $0xec] sm:$0xf]
  %v527 = vld [vmem:[%s5 + $0xf0] sm:$0xf]
  %v528 = vld [vmem:[%s5 + $0xf4] sm:$0xf]
  %v529 = vld [vmem:[%s5 + $0xf8] sm:$0xf]
  %v530 = vld [vmem:[%s5 + $0xfc] sm:$0xf]
  %v595 = vunpack.c.l.b16 %v467
  %v596 = vunpack.c.l.b16 %v468
  %v597 = vunpack.c.l.b16 %v469
  %v598 = vunpack.c.l.b16 %v470
  %v599 = vunpack.c.l.b16 %v471
  %v600 = vunpack.c.l.b16 %v472
  %v601 = vunpack.c.l.b16 %v473
  %v602 = vunpack.c.l.b16 %v474
  %v603 = vunpack.c.l.b16 %v475
  %v604 = vunpack.c.l.b16 %v476
  %v605 = vunpack.c.l.b16 %v477
  %v606 = vunpack.c.l.b16 %v478
  %v607 = vunpack.c.l.b16 %v479
  %v608 = vunpack.c.l.b16 %v480
  %v609 = vunpack.c.l.b16 %v481
  %v610 = vunpack.c.l.b16 %v482
  %v611 = vunpack.c.l.b16 %v483
  %v612 = vunpack.c.l.b16 %v484
  %v613 = vunpack.c.l.b16 %v485
  %v614 = vunpack.c.l.b16 %v486
  %v615 = vunpack.c.l.b16 %v487
  %v616 = vunpack.c.l.b16 %v488
  %v617 = vunpack.c.l.b16 %v489
  %v618 = vunpack.c.l.b16 %v490
  %v619 = vunpack.c.l.b16 %v491
  %v620 = vunpack.c.l.b16 %v492
  %v621 = vunpack.c.l.b16 %v493
  %v622 = vunpack.c.l.b16 %v494
  %v623 = vunpack.c.l.b16 %v495
  %v624 = vunpack.c.l.b16 %v496
  %v625 = vunpack.c.l.b16 %v497
  %v626 = vunpack.c.l.b16 %v498
  %v627 = vunpack.c.l.b16 %v499
  %v628 = vunpack.c.l.b16 %v500
  %v629 = vunpack.c.l.b16 %v501
  %v630 = vunpack.c.l.b16 %v502
  %v631 = vunpack.c.l.b16 %v503
  %v632 = vunpack.c.l.b16 %v504
  %v633 = vunpack.c.l.b16 %v505
  %v634 = vunpack.c.l.b16 %v506
  %v635 = vunpack.c.l.b16 %v507
  %v636 = vunpack.c.l.b16 %v508
  %v637 = vunpack.c.l.b16 %v509
  %v638 = vunpack.c.l.b16 %v510
  %v639 = vunpack.c.l.b16 %v511
  %v640 = vunpack.c.l.b16 %v512
  %v641 = vunpack.c.l.b16 %v513
  %v642 = vunpack.c.l.b16 %v514
  %v643 = vunpack.c.l.b16 %v515
  %v644 = vunpack.c.l.b16 %v516
  %v645 = vunpack.c.l.b16 %v517
  %v646 = vunpack.c.l.b16 %v518
  %v647 = vunpack.c.l.b16 %v519
  %v648 = vunpack.c.l.b16 %v520
  %v649 = vunpack.c.l.b16 %v521
  %v650 = vunpack.c.l.b16 %v522
  %v651 = vunpack.c.l.b16 %v523
  %v652 = vunpack.c.l.b16 %v524
  %v653 = vunpack.c.l.b16 %v525
  %v654 = vunpack.c.l.b16 %v526
  %v655 = vunpack.c.l.b16 %v527
  %v656 = vunpack.c.l.b16 %v528
  %v657 = vunpack.c.l.b16 %v529
  %v658 = vunpack.c.l.b16 %v530
  %v659 = vpack.c.b16 %v596, %v595
  %v660 = vpack.c.b16 %v598, %v597
  %v661 = vpack.c.b16 %v600, %v599
  %v662 = vpack.c.b16 %v602, %v601
  %v663 = vpack.c.b16 %v604, %v603
  %v664 = vpack.c.b16 %v606, %v605
  %v665 = vpack.c.b16 %v608, %v607
  %v666 = vpack.c.b16 %v610, %v609
  %v667 = vpack.c.b16 %v612, %v611
  %v668 = vpack.c.b16 %v614, %v613
  %v669 = vpack.c.b16 %v616, %v615
  %v670 = vpack.c.b16 %v618, %v617
  %v671 = vpack.c.b16 %v620, %v619
  %v672 = vpack.c.b16 %v622, %v621
  %v673 = vpack.c.b16 %v624, %v623
  %v674 = vpack.c.b16 %v626, %v625
  %v675 = vpack.c.b16 %v628, %v627
  %v676 = vpack.c.b16 %v630, %v629
  %v677 = vpack.c.b16 %v632, %v631
  %v678 = vpack.c.b16 %v634, %v633
  %v679 = vpack.c.b16 %v636, %v635
  %v680 = vpack.c.b16 %v638, %v637
  %v681 = vpack.c.b16 %v640, %v639
  %v682 = vpack.c.b16 %v642, %v641
  %v683 = vpack.c.b16 %v644, %v643
  %v684 = vpack.c.b16 %v646, %v645
  %v685 = vpack.c.b16 %v648, %v647
  %v686 = vpack.c.b16 %v650, %v649
  %v687 = vpack.c.b16 %v652, %v651
  %v688 = vpack.c.b16 %v654, %v653
  %v689 = vpack.c.b16 %v656, %v655
  %v690 = vpack.c.b16 %v658, %v657
  %723 = vmatprep.subr.bf16.mxu0 0
  %724 = vmatpush1.bf16.msra.mxu0 %v659
  %725 = vmatprep.subr.bf16.mxu0 0
  %726 = vmatpush1.bf16.msra.mxu0 %v660
  %727 = vmatprep.subr.bf16.mxu0 0
  %728 = vmatpush1.bf16.msra.mxu0 %v661
  %729 = vmatprep.subr.bf16.mxu0 0
  %730 = vmatpush1.bf16.msra.mxu0 %v662
  %731 = vmatprep.subr.bf16.mxu0 0
  %732 = vmatpush1.bf16.msra.mxu0 %v663
  %733 = vmatprep.subr.bf16.mxu0 0
  %734 = vmatpush1.bf16.msra.mxu0 %v664
  %735 = vmatprep.subr.bf16.mxu0 0
  %736 = vmatpush1.bf16.msra.mxu0 %v665
  %737 = vmatprep.subr.bf16.mxu0 0
  %738 = vmatpush1.bf16.msra.mxu0 %v666
  %739 = vmatprep.subr.bf16.mxu0 0
  %740 = vmatpush1.bf16.msra.mxu0 %v667
  %741 = vmatprep.subr.bf16.mxu0 0
  %742 = vmatpush1.bf16.msra.mxu0 %v668
  %743 = vmatprep.subr.bf16.mxu0 0
  %744 = vmatpush1.bf16.msra.mxu0 %v669
  %745 = vmatprep.subr.bf16.mxu0 0
  %746 = vmatpush1.bf16.msra.mxu0 %v670
  %747 = vmatprep.subr.bf16.mxu0 0
  %748 = vmatpush1.bf16.msra.mxu0 %v671
  %749 = vmatprep.subr.bf16.mxu0 0
  %750 = vmatpush1.bf16.msra.mxu0 %v672
  %751 = vmatprep.subr.bf16.mxu0 0
  %752 = vmatpush1.bf16.msra.mxu0 %v673
  %753 = vmatprep.subr.bf16.mxu0 0
  %754 = vmatpush1.bf16.msra.mxu0 %v674
  %755 = vmatprep.mubr.bf16.mxu0 %v464
  %756 = vmatmul.mubr.bf16.gmra.mrb[0].mxu0 %v463
  %v757 = vpop.f32.mrb[0].mxu0
  %v758 = vadd.f32 0.0, %v757
  %v759 = vpop.f32.mrb[0].mxu0
  %v760 = vpop.f32.mrb[0].mxu0
  %v761 = vadd.f32 0.0, %v760
  %v762 = vpop.f32.mrb[0].mxu0
  %763 = vdwg.mxu0
  %764 = vmatprep.subr.bf16.mxu0 0
  %765 = vmatpush1.bf16.msra.mxu0 %v675
  %766 = vmatprep.subr.bf16.mxu0 0
  %767 = vmatpush1.bf16.msra.mxu0 %v676
  %768 = vmatprep.subr.bf16.mxu0 0
  %769 = vmatpush1.bf16.msra.mxu0 %v677
  %770 = vmatprep.subr.bf16.mxu0 0
  %771 = vmatpush1.bf16.msra.mxu0 %v678
  %772 = vmatprep.subr.bf16.mxu0 0
  %773 = vmatpush1.bf16.msra.mxu0 %v679
  %774 = vmatprep.subr.bf16.mxu0 0
  %775 = vmatpush1.bf16.msra.mxu0 %v680
  %776 = vmatprep.subr.bf16.mxu0 0
  %777 = vmatpush1.bf16.msra.mxu0 %v681
  %778 = vmatprep.subr.bf16.mxu0 0
  %779 = vmatpush1.bf16.msra.mxu0 %v682
  %780 = vmatprep.subr.bf16.mxu0 0
  %781 = vmatpush1.bf16.msra.mxu0 %v683
  %782 = vmatprep.subr.bf16.mxu0 0
  %783 = vmatpush1.bf16.msra.mxu0 %v684
  %784 = vmatprep.subr.bf16.mxu0 0
  %785 = vmatpush1.bf16.msra.mxu0 %v685
  %786 = vmatprep.subr.bf16.mxu0 0
  %787 = vmatpush1.bf16.msra.mxu0 %v686
  %788 = vmatprep.subr.bf16.mxu0 0
  %789 = vmatpush1.bf16.msra.mxu0 %v687
  %790 = vmatprep.subr.bf16.mxu0 0
  %791 = vmatpush1.bf16.msra.mxu0 %v688
  %792 = vmatprep.subr.bf16.mxu0 0
  %793 = vmatpush1.bf16.msra.mxu0 %v689
  %794 = vmatprep.subr.bf16.mxu0 0
  %795 = vmatpush1.bf16.msra.mxu0 %v690
  %796 = vmatprep.mubr.bf16.mxu0 %v466
  %797 = vmatmul.mubr.bf16.gmra.mrb[0].mxu0 %v465
  %v798 = vpop.f32.mrb[0].mxu0
  %v799 = vadd.f32 %v758, %v798
  %v800 = vpop.f32.mrb[0].mxu0
  %v801 = vpop.f32.mrb[0].mxu0
  %v802 = vadd.f32 %v761, %v801
  %v803 = vpop.f32.mrb[0].mxu0
  %804 = vdwg.mxu0
  %v805 = vadd.f32 %v461, %v799
  %v806 = vadd.f32 %v462, %v802
  %807 = vst [vmem:[#allocation3] sm:$0xff] %v805
  %808 = vst [vmem:[#allocation3 + $0x8] sm:$0x3] %v806
  // Predicated region
  $region34: #{maskclip_backbone_forward.15} parent=0 // pred_check
    %p809 = pneg %p27
  $region35: #{maskclip_backbone_forward.15} parent=0 // pred_check_branch
    %811 = sbr.rel (%p809) target = $region37
  $region36: #{maskclip_backbone_forward.15} parent=0 // pred_region
    %v812 = vld [vmem:[%s0] sm:$0xff]
    %v813 = vld [vmem:[%s0 + $0x8] sm:$0x3]
    %v814 = vld [vmem:[#allocation3] sm:$0xff]
    %v815 = vld [vmem:[#allocation3 + $0x8] sm:$0x3]
    %v816 = vadd.f32 %v812, %v814
    %v817 = vadd.f32 %v813, %v815
    %v818 = vld [vmem:[%s6] sm:$0x1]
    %v820 = vlaneseq
    %v821 = vshrl.u32 %v820, 7
    %v822 = vsub.s32 0, %v821
    %v823 = vrot.slane %v818, %v822
    %v825 = vadd.f32 %v816, %v823
    %v826 = vadd.f32 %v817, %v823
    %827 = vst [vmem:[%s7] sm:$0xff] %v825
    %828 = vst [vmem:[%s7 + $0x8] sm:$0x3] %v826
  $region37: #{maskclip_backbone_forward.15} parent=0 // pred_fallthru
    _
  // Predicated region
  $region38: #{maskclip_backbone_forward.15} parent=0 // pred_check
    _
  $region39: #{maskclip_backbone_forward.15} parent=0 // pred_check_branch
    %830 = sbr.rel (0) target = $region41
  $region40: #{maskclip_backbone_forward.15} parent=0 // pred_region
    _
  $region41: #{maskclip_backbone_forward.15} parent=0 // pred_fallthru
    _
  // Predicated region
  $region42: #{maskclip_backbone_forward.15} parent=0 // pred_check
    _
  $region43: #{maskclip_backbone_forward.15} parent=0 // pred_check_branch
    %832 = sbr.rel (0) target = $region45
  $region44: #{maskclip_backbone_forward.15} parent=0 // pred_region
    _
  $region45: #{maskclip_backbone_forward.15} parent=0 // pred_fallthru
    _

</llo_original>
